<compile_context>
chip_gen: v7x
topology: tpu7x:2x2x1
jax: 0.10.0
libtpu: 0.0.40
codegen_flags: <defaults>
</compile_context>

<pallas_src>
import functools
from math import log, pi as PI

import jax
import jax.numpy as jnp
from jax import lax
from jax.experimental import pallas as pl
from jax.experimental.pallas import tpu as pltpu

_LOG2 = log(2.0)


# ----------------------------- in-kernel helpers -----------------------------

def _softplus(x):
    # numerically stable softplus with only exp/log/abs/max (VPU + EUP friendly)
    return jnp.maximum(x, 0.0) + jnp.log(1.0 + jnp.exp(-jnp.abs(x)))


def _sigmoid(x):
    return 1.0 / (1.0 + jnp.exp(-x))


def _batchnorm_rows(x, gamma, beta):
    # training-mode BatchNorm1d over the node axis (biased variance, as torch).
    # NOTE: running-stats tracking (eval mode) is not modeled.
    mean = jnp.mean(x, axis=0, keepdims=True)
    var = jnp.mean((x - mean) ** 2, axis=0, keepdims=True)
    return (x - mean) * lax.rsqrt(var + 1e-5) * gamma + beta


# ------------------------- fused CFConv mega-kernel ---------------------------

def _cfconv_kernel(h_ref, el_ref, ea_ref, src_ref, dst_ref,
                   lin1_w, lin1_b, bn1_g, bn1_b,
                   mlp_w1, mlp_b1, mlp_beta, mlp_w2, mlp_b2,
                   dw_w1, dw_b1, dw_w2t, dw_b2,
                   lin2_w, lin2_b, bn2_g, bn2_b,
                   out_ref, x_scr, acc_scr,
                   *, cutoff, smooth, num_edges):
    ei = pl.program_id(0)
    TE = el_ref.shape[0]
    N = h_ref.shape[0]

    # ---- node prologue (first edge tile): x = LeakyReLU(0.2)(BN1(lin1(h))) ----
    @pl.when(ei == 0)
    def _prologue():
        x = jnp.dot(h_ref[...], lin1_w[...],
                    preferred_element_type=jnp.float32) + lin1_b[...]
        x = _batchnorm_rows(x, bn1_g[...], bn1_b[...])
        x_scr[...] = jnp.where(x >= 0.0, x, 0.2 * x)
        acc_scr[...] = jnp.zeros_like(acc_scr)

    # ---- edge path: filters W for this edge tile (never leaves VMEM) ----
    el = el_ref[...]                                               # [TE, 1]
    # DistanceWeightingNetwork: Linear(1,DW) -> ReLU -> Linear(DW,1) -> sigmoid.
    # Degenerate K=1 / N=1 matmuls done on VPU (broadcast) + XLU (lane reduce).
    hdw = jnp.maximum(el * dw_w1[...] + dw_b1[...], 0.0)           # [TE, DW]
    lw = _sigmoid(jnp.sum(hdw * dw_w2t[...], axis=-1, keepdims=True)
                  + dw_b2[...])                                    # [TE, 1]
    # cutoff envelope (EUP-only; recomputing in-kernel is cheaper than an HBM pass)
    if smooth:
        C = 0.5 * (jnp.cos(el * (PI / cutoff)) + 1.0)
        C = C * (el <= cutoff).astype(jnp.float32)
    else:
        C = jnp.exp(-(el - cutoff) ** 2 / (2.0 * cutoff * cutoff))
    C = (C * (el <= cutoff).astype(jnp.float32)
           * (el >= 0.0).astype(jnp.float32))
    combined = lw * C                                              # [TE, 1]
    # edge MLP: Linear -> ShiftedSoftplus -> Linear
    w = jnp.dot(ea_ref[...], mlp_w1[...],
                preferred_element_type=jnp.float32) + mlp_b1[...]
    w = _softplus(mlp_beta[...] * w) - _LOG2
    w = jnp.dot(w, mlp_w2[...], preferred_element_type=jnp.float32) + mlp_b2[...]
    w = w * combined                                               # [TE, F]
    # mask edges that belong to tile padding (E rounded up to a multiple of TE)
    edge_ids = ei * TE + lax.broadcasted_iota(jnp.int32, (TE, 1), 0)
    w = jnp.where(edge_ids < num_edges, w, 0.0)

    # ---- message passing: exact one-hot gather / scatter-add over this edge tile ----
    node_ids = lax.broadcasted_iota(jnp.int32, (TE, N), 1)
    src_oh = (src_ref[...] == node_ids).astype(jnp.float32)        # [TE, N]
    dst_oh = (dst_ref[...] == node_ids).astype(jnp.float32)        # [TE, N]
    x_j = jnp.dot(src_oh, x_scr[...], preferred_element_type=jnp.float32)   # x[src]
    msg = x_j * w                                                  # message(x_j, W)
    acc_scr[...] += lax.dot_general(dst_oh, msg, (((0,), (0,)), ((), ())),
                                    preferred_element_type=jnp.float32)      # scatter-add

    # ---- node epilogue (last edge tile): out = BN2(lin2(aggregated)) ----
    @pl.when(ei == pl.num_programs(0) - 1)
    def _epilogue():
        y = jnp.dot(acc_scr[...], lin2_w[...],
                    preferred_element_type=jnp.float32) + lin2_b[...]
        out_ref[...] = _batchnorm_rows(y, bn2_g[...], bn2_b[...])


def pallas_cfconv(p, h, src, dst, edge_length, edge_attr, *,
                  num_edges, cutoff, smooth, edge_tile):
    """Fused CFConv forward: returns [N, out_channels] float32."""
    N, H = h.shape
    Ep = edge_length.shape[0]
    G = edge_attr.shape[1]
    F = p['lin1_w'].shape[1]
    OC = p['lin2_w'].shape[1]
    DW = p['dw_w1'].shape[1]
    TE = edge_tile
    assert Ep % TE == 0
    n_tiles = Ep // TE

    def full(shape):
        return pl.BlockSpec(shape, lambda ei: (0, 0))

    def etile(c):
        return pl.BlockSpec((TE, c), lambda ei: (ei, 0))

    kern = functools.partial(_cfconv_kernel, cutoff=float(cutoff),
                             smooth=bool(smooth), num_edges=int(num_edges))

    return pl.pallas_call(
        kern,
        out_shape=jax.ShapeDtypeStruct((N, OC), jnp.float32),
        grid=(n_tiles,),
        in_specs=[
            full((N, H)), etile(1), etile(G), etile(1), etile(1),
            full((H, F)), full((1, F)), full((1, F)), full((1, F)),
            full((G, F)), full((1, F)), full((1, 1)), full((F, F)), full((1, F)),
            full((1, DW)), full((1, DW)), full((1, DW)), full((1, 1)),
            full((F, OC)), full((1, OC)), full((1, OC)), full((1, OC)),
        ],
        out_specs=pl.BlockSpec((N, OC), lambda ei: (0, 0)),
        scratch_shapes=[pltpu.VMEM((N, F), jnp.float32),   # post lin1/BN1/LeakyReLU
                        pltpu.VMEM((N, F), jnp.float32)],  # scatter-add accumulator
        compiler_params=pltpu.CompilerParams(dimension_semantics=("arbitrary",)),
    )(h, edge_length, edge_attr, src, dst,
      p['lin1_w'], p['lin1_b'], p['bn1_g'], p['bn1_b'],
      p['mlp_w1'], p['mlp_b1'], p['mlp_beta'], p['mlp_w2'], p['mlp_b2'],
      p['dw_w1'], p['dw_b1'], p['dw_w2t'], p['dw_b2'],
      p['lin2_w'], p['lin2_b'], p['bn2_g'], p['bn2_b'])


# --------------- fused InteractionBlock tail + scaling + residual -------------

def _tail_kernel(h_ref, p1_ref, p2_ref,
                 beta_ref, lin_w_ref, lin_b_ref,
                 att_w1_ref, att_b1_ref, att_w2t_ref, att_b2_ref,
                 sc_w1_ref, sc_w2_ref, out_ref):
    H = p1_ref.shape[1]
    # concat + ShiftedSoftplus + Linear(2H, H), done as two half-matmuls (no concat op)
    a1 = _softplus(beta_ref[...] * p1_ref[...]) - _LOG2
    a2 = _softplus(beta_ref[...] * p2_ref[...]) - _LOG2
    xc = (jnp.dot(a1, lin_w_ref[0:H, :], preferred_element_type=jnp.float32)
          + jnp.dot(a2, lin_w_ref[H:2 * H, :], preferred_element_type=jnp.float32)
          + lin_b_ref[...])
    # attention MLP: Linear -> ReLU -> Linear(.,1) -> Sigmoid (last layer as lane reduce)
    att_h = jnp.maximum(
        jnp.dot(xc, att_w1_ref[...], preferred_element_type=jnp.float32)
        + att_b1_ref[...], 0.0)
    att = _sigmoid(jnp.sum(att_h * att_w2t_ref[...], axis=-1, keepdims=True)
                   + att_b2_ref[...])                               # [TN, 1]
    x = xc * att                                                    # attended output
    # AdaptiveScalingModule (avg-pool over the length-1 dim is the identity)
    y = jnp.maximum(jnp.dot(x, sc_w1_ref[...],
                            preferred_element_type=jnp.float32), 0.0)
    y = _sigmoid(jnp.dot(y, sc_w2_ref[...], preferred_element_type=jnp.float32))
    # residual update fused in-kernel
    out_ref[...] = h_ref[...] + x * y


def pallas_interaction_tail(pint, pscale, h, p1, p2, *, node_tile=256):
    N, H = h.shape
    TN = N if N <= node_tile else node_tile
    n_tiles = pl.cdiv(N, TN)

    def full(shape):
        return pl.BlockSpec(shape, lambda i: (0, 0))

    def ntile(c):
        return pl.BlockSpec((TN, c), lambda i: (i, 0))

    return pl.pallas_call(
        _tail_kernel,
        out_shape=jax.ShapeDtypeStruct((N, H), jnp.float32),
        grid=(n_tiles,),
        in_specs=[
            ntile(H), ntile(H), ntile(H),
            full((1, 1)), full((2 * H, H)), full((1, H)),
            full((H, H // 2)), full((1, H // 2)), full((1, H // 2)), full((1, 1)),
            full(pscale['w1'].shape), full(pscale['w2'].shape),
        ],
        out_specs=pl.BlockSpec((TN, H), lambda i: (i, 0)),
        compiler_params=pltpu.CompilerParams(dimension_semantics=("parallel",)),
    )(h, p1, p2,
      pint['act_beta'], pint['lin_w'], pint['lin_b'],
      pint['att_w1'], pint['att_b1'], pint['att_w2t'], pint['att_b2'],
      pscale['w1'], pscale['w2'])


# --------------------------------- parameters ---------------------------------

def _init(key, shape, scale=0.1):
    return scale * jax.random.normal(key, shape, jnp.float32)


def make_cfconv_params(key, in_ch, out_ch, num_filters, num_gaussians, dw_hidden=32):
    ks = jax.random.split(key, 8)
    return dict(
        # edge-attr MLP (the `nn` passed to CFConv)
        mlp_w1=_init(ks[0], (num_gaussians, num_filters)),
        mlp_b1=jnp.zeros((1, num_filters), jnp.float32),
        mlp_beta=jnp.ones((1, 1), jnp.float32),
        mlp_w2=_init(ks[1], (num_filters, num_filters)),
        mlp_b2=jnp.zeros((1, num_filters), jnp.float32),
        # lin1 / norm1, lin2 / norm2 (biases start at 0 as in reset_parameters)
        lin1_w=_init(ks[2], (in_ch, num_filters)),
        lin1_b=jnp.zeros((1, num_filters), jnp.float32),
        bn1_g=jnp.ones((1, num_filters), jnp.float32),
        bn1_b=jnp.zeros((1, num_filters), jnp.float32),
        lin2_w=_init(ks[3], (num_filters, out_ch)),
        lin2_b=jnp.zeros((1, out_ch), jnp.float32),
        bn2_g=jnp.ones((1, out_ch), jnp.float32),
        bn2_b=jnp.zeros((1, out_ch), jnp.float32),
        # DistanceWeightingNetwork (Linear(DW,1) stored transposed for lane-reduce)
        dw_w1=_init(ks[4], (1, dw_hidden)),
        dw_b1=_init(ks[5], (1, dw_hidden)),
        dw_w2t=_init(ks[6], (1, dw_hidden)),
        dw_b2=_init(ks[7], (1, 1)),
        # TODO(synk): CFConv.attention (AttentionModule) is constructed in the
        # reference but never called in forward(); intentionally not implemented.
    )


def make_interaction_params(key, H, G, F):
    ks = jax.random.split(key, 8)
    return dict(
        conv1=make_cfconv_params(ks[0], H, H, F, G),
        conv2=make_cfconv_params(ks[1], H, H, F // 2, G),
        act_beta=jnp.ones((1, 1), jnp.float32),
        # torch hardcodes Linear(256, H); with H=128 this is exactly 2H -> 256.
        lin_w=_init(ks[2], (2 * H, H)),
        lin_b=_init(ks[3], (1, H)),
        att_w1=_init(ks[4], (H, H // 2)),
        att_b1=_init(ks[5], (1, H // 2)),
        att_w2t=_init(ks[6], (1, H // 2)),
        att_b2=_init(ks[7], (1, 1)),
    )


# ---------------------------------- forward -----------------------------------

def schnet_forward(params, z, edge_index, edge_length, edge_attr, *,
                   cutoff, smooth, embed_node=True, edge_tile=128):
    if embed_node:
        # Embedding lookup + max_norm=10.0 renorm applied to the looked-up rows.
        # TODO(synk): torch Embedding(max_norm=...) renormalizes the weight table
        # in place; forward values match, the stateful weight update is not modeled.
        h = params['embedding'][z]
        nrm = jnp.linalg.norm(h, axis=-1, keepdims=True)
        h = h * jnp.minimum(1.0, 10.0 / jnp.maximum(nrm, 1e-12))
    else:
        h = z
    h = h.astype(jnp.float32)

    src = edge_index[0].reshape(-1, 1).astype(jnp.int32)   # flow='source_to_target'
    dst = edge_index[1].reshape(-1, 1).astype(jnp.int32)
    el = edge_length.reshape(-1, 1).astype(jnp.float32)
    ea = edge_attr.astype(jnp.float32)

    # Pad the edge arrays once per forward to a multiple of the edge tile; padded
    # edges are masked inside the CFConv kernel (hoisted out of the per-conv calls).
    E = el.shape[0]
    TE = max(8, (min(edge_tile, ((E + 7) // 8) * 8) // 8) * 8)
    n_tiles = pl.cdiv(E, TE)
    pad = n_tiles * TE - E
    if pad:
        src = jnp.pad(src, ((0, pad), (0, 0)))
        dst = jnp.pad(dst, ((0, pad), (0, 0)))
        el = jnp.pad(el, ((0, pad), (0, 0)))
        ea = jnp.pad(ea, ((0, pad), (0, 0)))

    for pint, pscale in zip(params['interactions'], params['scalings']):
        p1 = pallas_cfconv(pint['conv1'], h, src, dst, el, ea,
                           num_edges=E, cutoff=cutoff, smooth=smooth, edge_tile=TE)
        p2 = pallas_cfconv(pint['conv2'], h, src, dst, el, ea,
                           num_edges=E, cutoff=cutoff, smooth=smooth, edge_tile=TE)
        h = pallas_interaction_tail(pint, pscale, h, p1, p2)
    return h


# ------------------------------------ main -------------------------------------

if __name__ == "__main__":
    # Small but lane-dense configuration: H = F = G = 128 keeps every Pallas output a
    # dense [*, 128] f32 slab and makes torch's hardcoded Linear(256, H) == Linear(2H, H).
    H, F, G = 128, 128, 128       # hidden_channels, num_filters, edge_channels
    num_interactions = 2
    cutoff, smooth = 10.0, False
    N, E = 16, 40                 # nodes, edges
    EDGE_TILE = 16                # -> 3 edge tiles: exercises accumulator grid + masking

    key = jax.random.PRNGKey(0)
    k_par, k_z, k_ei, k_el, k_ea = jax.random.split(key, 5)

    pkeys = jax.random.split(k_par, 2 * num_interactions + 1)
    params = dict(
        embedding=_init(pkeys[0], (100, H), scale=1.0),
        interactions=[make_interaction_params(pkeys[1 + i], H, G, F)
                      for i in range(num_interactions)],
        scalings=[dict(w1=_init(pkeys[1 + num_interactions + i], (H, H // 16)),
                       w2=_init(jax.random.fold_in(pkeys[1 + num_interactions + i], 1),
                                (H // 16, H)))
                  for i in range(num_interactions)],
    )

    z = jax.random.randint(k_z, (N,), 0, 100, dtype=jnp.int32)
    edge_index = jax.random.randint(k_ei, (2, E), 0, N, dtype=jnp.int32)
    edge_length = jax.random.uniform(k_el, (E, 1), jnp.float32, 0.5, 12.0)
    edge_attr = _init(k_ea, (E, G), scale=1.0)

    fwd = jax.jit(functools.partial(schnet_forward, cutoff=cutoff, smooth=smooth,
                                    edge_tile=EDGE_TILE))
    h = fwd(params, z, edge_index, edge_length, edge_attr)
    jax.block_until_ready(h)
    assert h.shape == (N, H) and h.dtype == jnp.float32
    assert bool(jnp.all(jnp.isfinite(h)))
    print("KERNEL_OK")
</pallas_src>

<mosaic_0001>
module attributes {stable_mosaic.version = 11 : i64} {
  func.func @_cfconv_kernel(%arg0: i32, %arg1: memref<16x128xf32, #tpu.memory_space<vmem>>, %arg2: memref<16x1xf32, #tpu.memory_space<vmem>>, %arg3: memref<16x128xf32, #tpu.memory_space<vmem>>, %arg4: memref<16x1xi32, #tpu.memory_space<vmem>>, %arg5: memref<16x1xi32, #tpu.memory_space<vmem>>, %arg6: memref<128x64xf32, #tpu.memory_space<vmem>>, %arg7: memref<1x64xf32, #tpu.memory_space<vmem>>, %arg8: memref<1x64xf32, #tpu.memory_space<vmem>>, %arg9: memref<1x64xf32, #tpu.memory_space<vmem>>, %arg10: memref<128x64xf32, #tpu.memory_space<vmem>>, %arg11: memref<1x64xf32, #tpu.memory_space<vmem>>, %arg12: memref<1x1xf32, #tpu.memory_space<vmem>>, %arg13: memref<64x64xf32, #tpu.memory_space<vmem>>, %arg14: memref<1x64xf32, #tpu.memory_space<vmem>>, %arg15: memref<1x32xf32, #tpu.memory_space<vmem>>, %arg16: memref<1x32xf32, #tpu.memory_space<vmem>>, %arg17: memref<1x32xf32, #tpu.memory_space<vmem>>, %arg18: memref<1x1xf32, #tpu.memory_space<vmem>>, %arg19: memref<64x128xf32, #tpu.memory_space<vmem>>, %arg20: memref<1x128xf32, #tpu.memory_space<vmem>>, %arg21: memref<1x128xf32, #tpu.memory_space<vmem>>, %arg22: memref<1x128xf32, #tpu.memory_space<vmem>>, %arg23: memref<16x128xf32, #tpu.memory_space<vmem>>, %arg24: memref<16x64xf32, #tpu.memory_space<vmem>>, %arg25: memref<16x64xf32, #tpu.memory_space<vmem>>) attributes {dimension_semantics = [#tpu.dimension_semantics<arbitrary>], iteration_bounds = array<i64: 3>, scalar_prefetch = 0 : i64, scratch_operands = 2 : i64, tpu.core_type = #tpu.core_type<tc>, window_params = [{pipeline_mode = #tpu.pipeline_mode<synchronous>, transform_indices = @transform_0, window_bounds = array<i64: 16, 128>}, {transform_indices = @transform_1, window_bounds = array<i64: 16, 1>}, {transform_indices = @transform_2, window_bounds = array<i64: 16, 128>}, {transform_indices = @transform_3, window_bounds = array<i64: 16, 1>}, {transform_indices = @transform_4, window_bounds = array<i64: 16, 1>}, {pipeline_mode = #tpu.pipeline_mode<synchronous>, transform_indices = @transform_5, window_bounds = array<i64: 128, 64>}, {pipeline_mode = #tpu.pipeline_mode<synchronous>, transform_indices = @transform_6, window_bounds = array<i64: 1, 64>}, {pipeline_mode = #tpu.pipeline_mode<synchronous>, transform_indices = @transform_7, window_bounds = array<i64: 1, 64>}, {pipeline_mode = #tpu.pipeline_mode<synchronous>, transform_indices = @transform_8, window_bounds = array<i64: 1, 64>}, {pipeline_mode = #tpu.pipeline_mode<synchronous>, transform_indices = @transform_9, window_bounds = array<i64: 128, 64>}, {pipeline_mode = #tpu.pipeline_mode<synchronous>, transform_indices = @transform_10, window_bounds = array<i64: 1, 64>}, {pipeline_mode = #tpu.pipeline_mode<synchronous>, transform_indices = @transform_11, window_bounds = array<i64: 1, 1>}, {pipeline_mode = #tpu.pipeline_mode<synchronous>, transform_indices = @transform_12, window_bounds = array<i64: 64, 64>}, {pipeline_mode = #tpu.pipeline_mode<synchronous>, transform_indices = @transform_13, window_bounds = array<i64: 1, 64>}, {pipeline_mode = #tpu.pipeline_mode<synchronous>, transform_indices = @transform_14, window_bounds = array<i64: 1, 32>}, {pipeline_mode = #tpu.pipeline_mode<synchronous>, transform_indices = @transform_15, window_bounds = array<i64: 1, 32>}, {pipeline_mode = #tpu.pipeline_mode<synchronous>, transform_indices = @transform_16, window_bounds = array<i64: 1, 32>}, {pipeline_mode = #tpu.pipeline_mode<synchronous>, transform_indices = @transform_17, window_bounds = array<i64: 1, 1>}, {pipeline_mode = #tpu.pipeline_mode<synchronous>, transform_indices = @transform_18, window_bounds = array<i64: 64, 128>}, {pipeline_mode = #tpu.pipeline_mode<synchronous>, transform_indices = @transform_19, window_bounds = array<i64: 1, 128>}, {pipeline_mode = #tpu.pipeline_mode<synchronous>, transform_indices = @transform_20, window_bounds = array<i64: 1, 128>}, {pipeline_mode = #tpu.pipeline_mode<synchronous>, transform_indices = @transform_21, window_bounds = array<i64: 1, 128>}, {pipeline_mode = #tpu.pipeline_mode<synchronous>, transform_indices = @transform_22, window_bounds = array<i64: 16, 128>}]} {
    %c0_i32 = arith.constant 0 : i32
    %0 = arith.cmpi eq, %arg0, %c0_i32 : i32
    %1 = arith.extui %0 : i1 to i32
    %c0_i32_0 = arith.constant 0 : i32
    %2 = arith.cmpi ne, %1, %c0_i32_0 : i32
    scf.if %2 {
      %c0_51 = arith.constant 0 : index
      %c0_52 = arith.constant 0 : index
      %106 = vector.load %arg1[%c0_51, %c0_52] : memref<16x128xf32, #tpu.memory_space<vmem>>, vector<16x128xf32>
      %c0_53 = arith.constant 0 : index
      %c0_54 = arith.constant 0 : index
      %107 = vector.load %arg6[%c0_53, %c0_54] : memref<128x64xf32, #tpu.memory_space<vmem>>, vector<128x64xf32>
      %cst_55 = arith.constant dense<0.000000e+00> : vector<16x64xf32>
      %108 = tpu.matmul %106, %107, %cst_55 {dimension_numbers = #tpu.dot_dimension_numbers<[1], [0], [0], [1], [0, 0, 1, 1], [], []>} : vector<16x128xf32>, vector<128x64xf32>, vector<16x64xf32> -> vector<16x64xf32>
      %c0_56 = arith.constant 0 : index
      %c0_57 = arith.constant 0 : index
      %109 = vector.load %arg7[%c0_56, %c0_57] : memref<1x64xf32, #tpu.memory_space<vmem>>, vector<1x64xf32>
      %110 = vector.broadcast %109 : vector<1x64xf32> to vector<16x64xf32>
      %111 = arith.addf %108, %110 : vector<16x64xf32>
      %c0_58 = arith.constant 0 : index
      %c0_59 = arith.constant 0 : index
      %112 = vector.load %arg8[%c0_58, %c0_59] : memref<1x64xf32, #tpu.memory_space<vmem>>, vector<1x64xf32>
      %c0_60 = arith.constant 0 : index
      %c0_61 = arith.constant 0 : index
      %113 = vector.load %arg9[%c0_60, %c0_61] : memref<1x64xf32, #tpu.memory_space<vmem>>, vector<1x64xf32>
      %cst_62 = arith.constant dense<0.000000e+00> : vector<64xf32>
      %114 = vector.multi_reduction <add>, %111, %cst_62 [0] : vector<16x64xf32> to vector<64xf32>
      %115 = vector.shape_cast %114 : vector<64xf32> to vector<1x64xf32>
      %cst_63 = arith.constant 1.600000e+01 : f32
      %116 = vector.broadcast %cst_63 : f32 to vector<1x64xf32>
      %117 = arith.divf %115, %116 : vector<1x64xf32>
      %118 = vector.broadcast %117 : vector<1x64xf32> to vector<16x64xf32>
      %119 = arith.subf %111, %118 : vector<16x64xf32>
      %120 = arith.mulf %119, %119 : vector<16x64xf32>
      %cst_64 = arith.constant dense<0.000000e+00> : vector<64xf32>
      %121 = vector.multi_reduction <add>, %120, %cst_64 [0] : vector<16x64xf32> to vector<64xf32>
      %122 = vector.shape_cast %121 : vector<64xf32> to vector<1x64xf32>
      %cst_65 = arith.constant 1.600000e+01 : f32
      %123 = vector.broadcast %cst_65 : f32 to vector<1x64xf32>
      %124 = arith.divf %122, %123 : vector<1x64xf32>
      %125 = vector.broadcast %117 : vector<1x64xf32> to vector<16x64xf32>
      %126 = arith.subf %111, %125 : vector<16x64xf32>
      %cst_66 = arith.constant 9.99999974E-6 : f32
      %127 = vector.broadcast %cst_66 : f32 to vector<1x64xf32>
      %128 = arith.addf %124, %127 : vector<1x64xf32>
      %129 = math.rsqrt %128 : vector<1x64xf32>
      %130 = vector.broadcast %129 : vector<1x64xf32> to vector<16x64xf32>
      %131 = arith.mulf %126, %130 : vector<16x64xf32>
      %132 = vector.broadcast %112 : vector<1x64xf32> to vector<16x64xf32>
      %133 = arith.mulf %131, %132 : vector<16x64xf32>
      %134 = vector.broadcast %113 : vector<1x64xf32> to vector<16x64xf32>
      %135 = arith.addf %133, %134 : vector<16x64xf32>
      %cst_67 = arith.constant 0.000000e+00 : f32
      %136 = vector.broadcast %cst_67 : f32 to vector<16x64xf32>
      %137 = arith.cmpf oge, %135, %136 : vector<16x64xf32>
      %cst_68 = arith.constant 2.000000e-01 : f32
      %138 = vector.broadcast %cst_68 : f32 to vector<16x64xf32>
      %139 = arith.mulf %138, %135 : vector<16x64xf32>
      %140 = arith.select %137, %135, %139 : vector<16x64xi1>, vector<16x64xf32>
      %c0_69 = arith.constant 0 : index
      %c0_70 = arith.constant 0 : index
      %141 = vector.load %arg24[%c0_69, %c0_70] : memref<16x64xf32, #tpu.memory_space<vmem>>, vector<16x64xf32>
      tpu.vector_store %arg24[%c0_69, %c0_70], %140 {strides = array<i32>} : memref<16x64xf32, #tpu.memory_space<vmem>>, vector<16x64xf32>,
      %cst_71 = arith.constant 0.000000e+00 : f32
      %142 = vector.broadcast %cst_71 : f32 to vector<16x64xf32>
      %c0_72 = arith.constant 0 : index
      %c0_73 = arith.constant 0 : index
      %143 = vector.load %arg25[%c0_72, %c0_73] : memref<16x64xf32, #tpu.memory_space<vmem>>, vector<16x64xf32>
      tpu.vector_store %arg25[%c0_72, %c0_73], %142 {strides = array<i32>} : memref<16x64xf32, #tpu.memory_space<vmem>>, vector<16x64xf32>,
    } else {
    }
    %c0 = arith.constant 0 : index
    %c0_1 = arith.constant 0 : index
    %3 = vector.load %arg2[%c0, %c0_1] : memref<16x1xf32, #tpu.memory_space<vmem>>, vector<16x1xf32>
    %c0_2 = arith.constant 0 : index
    %c0_3 = arith.constant 0 : index
    %4 = vector.load %arg15[%c0_2, %c0_3] : memref<1x32xf32, #tpu.memory_space<vmem>>, vector<1x32xf32>
    %5 = vector.broadcast %3 : vector<16x1xf32> to vector<16x32xf32>
    %6 = vector.broadcast %4 : vector<1x32xf32> to vector<16x32xf32>
    %7 = arith.mulf %5, %6 : vector<16x32xf32>
    %c0_4 = arith.constant 0 : index
    %c0_5 = arith.constant 0 : index
    %8 = vector.load %arg16[%c0_4, %c0_5] : memref<1x32xf32, #tpu.memory_space<vmem>>, vector<1x32xf32>
    %9 = vector.broadcast %8 : vector<1x32xf32> to vector<16x32xf32>
    %10 = arith.addf %7, %9 : vector<16x32xf32>
    %cst = arith.constant 0.000000e+00 : f32
    %11 = vector.broadcast %cst : f32 to vector<16x32xf32>
    %12 = arith.maximumf %10, %11 : vector<16x32xf32>
    %c0_6 = arith.constant 0 : index
    %c0_7 = arith.constant 0 : index
    %13 = vector.load %arg17[%c0_6, %c0_7] : memref<1x32xf32, #tpu.memory_space<vmem>>, vector<1x32xf32>
    %14 = vector.broadcast %13 : vector<1x32xf32> to vector<16x32xf32>
    %15 = arith.mulf %12, %14 : vector<16x32xf32>
    %cst_8 = arith.constant dense<0.000000e+00> : vector<16xf32>
    %16 = vector.multi_reduction <add>, %15, %cst_8 [1] : vector<16x32xf32> to vector<16xf32>
    %17 = vector.shape_cast %16 : vector<16xf32> to vector<16x1xf32>
    %c0_9 = arith.constant 0 : index
    %c0_10 = arith.constant 0 : index
    %18 = vector.load %arg18[%c0_9, %c0_10] : memref<1x1xf32, #tpu.memory_space<vmem>>, vector<1x1xf32>
    %19 = vector.broadcast %18 : vector<1x1xf32> to vector<16x1xf32>
    %20 = arith.addf %17, %19 : vector<16x1xf32>
    %cst_11 = arith.constant 0.000000e+00 : f32
    %21 = vector.broadcast %cst_11 : f32 to vector<16x1xf32>
    %22 = arith.subf %21, %20 : vector<16x1xf32>
    %23 = math.exp %22 : vector<16x1xf32>
    %cst_12 = arith.constant 1.000000e+00 : f32
    %24 = vector.broadcast %cst_12 : f32 to vector<16x1xf32>
    %25 = arith.addf %24, %23 : vector<16x1xf32>
    %cst_13 = arith.constant 1.000000e+00 : f32
    %26 = vector.broadcast %cst_13 : f32 to vector<16x1xf32>
    %27 = arith.divf %26, %25 : vector<16x1xf32>
    %cst_14 = arith.constant 1.000000e+01 : f32
    %28 = vector.broadcast %cst_14 : f32 to vector<16x1xf32>
    %29 = arith.subf %3, %28 : vector<16x1xf32>
    %30 = arith.mulf %29, %29 : vector<16x1xf32>
    %cst_15 = arith.constant 0.000000e+00 : f32
    %31 = vector.broadcast %cst_15 : f32 to vector<16x1xf32>
    %32 = arith.subf %31, %30 : vector<16x1xf32>
    %cst_16 = arith.constant 2.000000e+02 : f32
    %33 = vector.broadcast %cst_16 : f32 to vector<16x1xf32>
    %34 = arith.divf %32, %33 : vector<16x1xf32>
    %35 = math.exp %34 : vector<16x1xf32>
    %cst_17 = arith.constant 1.000000e+01 : f32
    %36 = vector.broadcast %cst_17 : f32 to vector<16x1xf32>
    %37 = arith.cmpf ole, %3, %36 : vector<16x1xf32>
    %38 = arith.extui %37 : vector<16x1xi1> to vector<16x1xi32>
    %39 = arith.sitofp %38 : vector<16x1xi32> to vector<16x1xf32>
    %40 = arith.mulf %35, %39 : vector<16x1xf32>
    %cst_18 = arith.constant 0.000000e+00 : f32
    %41 = vector.broadcast %cst_18 : f32 to vector<16x1xf32>
    %42 = arith.cmpf oge, %3, %41 : vector<16x1xf32>
    %43 = arith.extui %42 : vector<16x1xi1> to vector<16x1xi32>
    %44 = arith.sitofp %43 : vector<16x1xi32> to vector<16x1xf32>
    %45 = arith.mulf %40, %44 : vector<16x1xf32>
    %46 = arith.mulf %27, %45 : vector<16x1xf32>
    %c0_19 = arith.constant 0 : index
    %c0_20 = arith.constant 0 : index
    %47 = vector.load %arg3[%c0_19, %c0_20] : memref<16x128xf32, #tpu.memory_space<vmem>>, vector<16x128xf32>
    %c0_21 = arith.constant 0 : index
    %c0_22 = arith.constant 0 : index
    %48 = vector.load %arg10[%c0_21, %c0_22] : memref<128x64xf32, #tpu.memory_space<vmem>>, vector<128x64xf32>
    %cst_23 = arith.constant dense<0.000000e+00> : vector<16x64xf32>
    %49 = tpu.matmul %47, %48, %cst_23 {dimension_numbers = #tpu.dot_dimension_numbers<[1], [0], [0], [1], [0, 0, 1, 1], [], []>} : vector<16x128xf32>, vector<128x64xf32>, vector<16x64xf32> -> vector<16x64xf32>
    %c0_24 = arith.constant 0 : index
    %c0_25 = arith.constant 0 : index
    %50 = vector.load %arg11[%c0_24, %c0_25] : memref<1x64xf32, #tpu.memory_space<vmem>>, vector<1x64xf32>
    %51 = vector.broadcast %50 : vector<1x64xf32> to vector<16x64xf32>
    %52 = arith.addf %49, %51 : vector<16x64xf32>
    %c0_26 = arith.constant 0 : index
    %c0_27 = arith.constant 0 : index
    %53 = vector.load %arg12[%c0_26, %c0_27] : memref<1x1xf32, #tpu.memory_space<vmem>>, vector<1x1xf32>
    %54 = vector.broadcast %53 : vector<1x1xf32> to vector<16x64xf32>
    %55 = arith.mulf %54, %52 : vector<16x64xf32>
    %cst_28 = arith.constant 0.000000e+00 : f32
    %56 = vector.broadcast %cst_28 : f32 to vector<16x64xf32>
    %57 = arith.maximumf %55, %56 : vector<16x64xf32>
    %58 = math.absf %55 : vector<16x64xf32>
    %cst_29 = arith.constant 0.000000e+00 : f32
    %59 = vector.broadcast %cst_29 : f32 to vector<16x64xf32>
    %60 = arith.subf %59, %58 : vector<16x64xf32>
    %61 = math.exp %60 : vector<16x64xf32>
    %cst_30 = arith.constant 1.000000e+00 : f32
    %62 = vector.broadcast %cst_30 : f32 to vector<16x64xf32>
    %63 = arith.addf %62, %61 : vector<16x64xf32>
    %64 = math.log %63 : vector<16x64xf32>
    %65 = arith.addf %57, %64 : vector<16x64xf32>
    %cst_31 = arith.constant 0.693147182 : f32
    %66 = vector.broadcast %cst_31 : f32 to vector<16x64xf32>
    %67 = arith.subf %65, %66 : vector<16x64xf32>
    %c0_32 = arith.constant 0 : index
    %c0_33 = arith.constant 0 : index
    %68 = vector.load %arg13[%c0_32, %c0_33] : memref<64x64xf32, #tpu.memory_space<vmem>>, vector<64x64xf32>
    %cst_34 = arith.constant dense<0.000000e+00> : vector<16x64xf32>
    %69 = tpu.matmul %67, %68, %cst_34 {dimension_numbers = #tpu.dot_dimension_numbers<[1], [0], [0], [1], [0, 0, 1, 1], [], []>} : vector<16x64xf32>, vector<64x64xf32>, vector<16x64xf32> -> vector<16x64xf32>
    %c0_35 = arith.constant 0 : index
    %c0_36 = arith.constant 0 : index
    %70 = vector.load %arg14[%c0_35, %c0_36] : memref<1x64xf32, #tpu.memory_space<vmem>>, vector<1x64xf32>
    %71 = vector.broadcast %70 : vector<1x64xf32> to vector<16x64xf32>
    %72 = arith.addf %69, %71 : vector<16x64xf32>
    %73 = vector.broadcast %46 : vector<16x1xf32> to vector<16x64xf32>
    %74 = arith.mulf %72, %73 : vector<16x64xf32>
    %c16_i32 = arith.constant 16 : i32
    %75 = arith.muli %arg0, %c16_i32 : i32
    %76 = tpu.iota {dimensions = array<i32: 0>} : vector<16x1xi32>
    %77 = vector.broadcast %75 : i32 to vector<16x1xi32>
    %78 = arith.addi %77, %76 : vector<16x1xi32>
    %c40_i32 = arith.constant 40 : i32
    %79 = vector.broadcast %c40_i32 : i32 to vector<16x1xi32>
    %80 = arith.cmpi slt, %78, %79 : vector<16x1xi32>
    %cst_37 = arith.constant 0.000000e+00 : f32
    %81 = vector.shape_cast %80 : vector<16x1xi1> to vector<16x1xi1>
    %82 = vector.broadcast %81 : vector<16x1xi1> to vector<16x64xi1>
    %83 = vector.broadcast %cst_37 : f32 to vector<16x64xf32>
    %84 = arith.select %82, %74, %83 : vector<16x64xi1>, vector<16x64xf32>
    %85 = tpu.iota {dimensions = array<i32: 1>} : vector<16x16xi32>
    %c0_38 = arith.constant 0 : index
    %c0_39 = arith.constant 0 : index
    %86 = vector.load %arg4[%c0_38, %c0_39] : memref<16x1xi32, #tpu.memory_space<vmem>>, vector<16x1xi32>
    %87 = vector.broadcast %86 : vector<16x1xi32> to vector<16x16xi32>
    %88 = arith.cmpi eq, %87, %85 : vector<16x16xi32>
    %89 = arith.extui %88 : vector<16x16xi1> to vector<16x16xi32>
    %90 = arith.sitofp %89 : vector<16x16xi32> to vector<16x16xf32>
    %c0_40 = arith.constant 0 : index
    %c0_41 = arith.constant 0 : index
    %91 = vector.load %arg5[%c0_40, %c0_41] : memref<16x1xi32, #tpu.memory_space<vmem>>, vector<16x1xi32>
    %92 = vector.broadcast %91 : vector<16x1xi32> to vector<16x16xi32>
    %93 = arith.cmpi eq, %92, %85 : vector<16x16xi32>
    %94 = arith.extui %93 : vector<16x16xi1> to vector<16x16xi32>
    %95 = arith.sitofp %94 : vector<16x16xi32> to vector<16x16xf32>
    %c0_42 = arith.constant 0 : index
    %c0_43 = arith.constant 0 : index
    %96 = vector.load %arg24[%c0_42, %c0_43] : memref<16x64xf32, #tpu.memory_space<vmem>>, vector<16x64xf32>
    %cst_44 = arith.constant dense<0.000000e+00> : vector<16x64xf32>
    %97 = tpu.matmul %90, %96, %cst_44 {dimension_numbers = #tpu.dot_dimension_numbers<[1], [0], [0], [1], [0, 0, 1, 1], [], []>} : vector<16x16xf32>, vector<16x64xf32>, vector<16x64xf32> -> vector<16x64xf32>
    %98 = arith.mulf %97, %84 : vector<16x64xf32>
    %c0_45 = arith.constant 0 : index
    %c0_46 = arith.constant 0 : index
    %99 = vector.load %arg25[%c0_45, %c0_46] : memref<16x64xf32, #tpu.memory_space<vmem>>, vector<16x64xf32>
    %cst_47 = arith.constant dense<0.000000e+00> : vector<16x64xf32>
    %100 = tpu.matmul %95, %98, %cst_47 {dimension_numbers = #tpu.dot_dimension_numbers<[0], [0], [1], [1], [0, 1, 1, 1], [], []>} : vector<16x16xf32>, vector<16x64xf32>, vector<16x64xf32> -> vector<16x64xf32>
    %101 = arith.addf %99, %100 : vector<16x64xf32>
    %c0_48 = arith.constant 0 : index
    %c0_49 = arith.constant 0 : index
    %102 = vector.load %arg25[%c0_48, %c0_49] : memref<16x64xf32, #tpu.memory_space<vmem>>, vector<16x64xf32>
    tpu.vector_store %arg25[%c0_48, %c0_49], %101 {strides = array<i32>} : memref<16x64xf32, #tpu.memory_space<vmem>>, vector<16x64xf32>,
    %c2_i32 = arith.constant 2 : i32
    %103 = arith.cmpi eq, %arg0, %c2_i32 : i32
    %104 = arith.extui %103 : i1 to i32
    %c0_i32_50 = arith.constant 0 : i32
    %105 = arith.cmpi ne, %104, %c0_i32_50 : i32
    scf.if %105 {
      %c0_51 = arith.constant 0 : index
      %c0_52 = arith.constant 0 : index
      %106 = vector.load %arg25[%c0_51, %c0_52] : memref<16x64xf32, #tpu.memory_space<vmem>>, vector<16x64xf32>
      %c0_53 = arith.constant 0 : index
      %c0_54 = arith.constant 0 : index
      %107 = vector.load %arg19[%c0_53, %c0_54] : memref<64x128xf32, #tpu.memory_space<vmem>>, vector<64x128xf32>
      %cst_55 = arith.constant dense<0.000000e+00> : vector<16x128xf32>
      %108 = tpu.matmul %106, %107, %cst_55 {dimension_numbers = #tpu.dot_dimension_numbers<[1], [0], [0], [1], [0, 0, 1, 1], [], []>} : vector<16x64xf32>, vector<64x128xf32>, vector<16x128xf32> -> vector<16x128xf32>
      %c0_56 = arith.constant 0 : index
      %c0_57 = arith.constant 0 : index
      %109 = vector.load %arg20[%c0_56, %c0_57] : memref<1x128xf32, #tpu.memory_space<vmem>>, vector<1x128xf32>
      %110 = vector.broadcast %109 : vector<1x128xf32> to vector<16x128xf32>
      %111 = arith.addf %108, %110 : vector<16x128xf32>
      %c0_58 = arith.constant 0 : index
      %c0_59 = arith.constant 0 : index
      %112 = vector.load %arg21[%c0_58, %c0_59] : memref<1x128xf32, #tpu.memory_space<vmem>>, vector<1x128xf32>
      %c0_60 = arith.constant 0 : index
      %c0_61 = arith.constant 0 : index
      %113 = vector.load %arg22[%c0_60, %c0_61] : memref<1x128xf32, #tpu.memory_space<vmem>>, vector<1x128xf32>
      %cst_62 = arith.constant dense<0.000000e+00> : vector<128xf32>
      %114 = vector.multi_reduction <add>, %111, %cst_62 [0] : vector<16x128xf32> to vector<128xf32>
      %115 = vector.shape_cast %114 : vector<128xf32> to vector<1x128xf32>
      %cst_63 = arith.constant 1.600000e+01 : f32
      %116 = vector.broadcast %cst_63 : f32 to vector<1x128xf32>
      %117 = arith.divf %115, %116 : vector<1x128xf32>
      %118 = vector.broadcast %117 : vector<1x128xf32> to vector<16x128xf32>
      %119 = arith.subf %111, %118 : vector<16x128xf32>
      %120 = arith.mulf %119, %119 : vector<16x128xf32>
      %cst_64 = arith.constant dense<0.000000e+00> : vector<128xf32>
      %121 = vector.multi_reduction <add>, %120, %cst_64 [0] : vector<16x128xf32> to vector<128xf32>
      %122 = vector.shape_cast %121 : vector<128xf32> to vector<1x128xf32>
      %cst_65 = arith.constant 1.600000e+01 : f32
      %123 = vector.broadcast %cst_65 : f32 to vector<1x128xf32>
      %124 = arith.divf %122, %123 : vector<1x128xf32>
      %125 = vector.broadcast %117 : vector<1x128xf32> to vector<16x128xf32>
      %126 = arith.subf %111, %125 : vector<16x128xf32>
      %cst_66 = arith.constant 9.99999974E-6 : f32
      %127 = vector.broadcast %cst_66 : f32 to vector<1x128xf32>
      %128 = arith.addf %124, %127 : vector<1x128xf32>
      %129 = math.rsqrt %128 : vector<1x128xf32>
      %130 = vector.broadcast %129 : vector<1x128xf32> to vector<16x128xf32>
      %131 = arith.mulf %126, %130 : vector<16x128xf32>
      %132 = vector.broadcast %112 : vector<1x128xf32> to vector<16x128xf32>
      %133 = arith.mulf %131, %132 : vector<16x128xf32>
      %134 = vector.broadcast %113 : vector<1x128xf32> to vector<16x128xf32>
      %135 = arith.addf %133, %134 : vector<16x128xf32>
      %c0_67 = arith.constant 0 : index
      %c0_68 = arith.constant 0 : index
      %136 = vector.load %arg23[%c0_67, %c0_68] : memref<16x128xf32, #tpu.memory_space<vmem>>, vector<16x128xf32>
      tpu.vector_store %arg23[%c0_67, %c0_68], %135 {strides = array<i32>} : memref<16x128xf32, #tpu.memory_space<vmem>>, vector<16x128xf32>,
    } else {
    }
    return
  }
  func.func @transform_0(%arg0: i32) -> (i32, i32) {
    %c0_i32 = arith.constant 0 : i32
    %c0_i32_0 = arith.constant 0 : i32
    %c0_i32_1 = arith.constant 0 : i32
    return %c0_i32, %c0_i32_0 : i32, i32
  }
  func.func @transform_1(%arg0: i32) -> (i32, i32) {
    %c0_i32 = arith.constant 0 : i32
    %c0_i32_0 = arith.constant 0 : i32
    return %arg0, %c0_i32 : i32, i32
  }
  func.func @transform_2(%arg0: i32) -> (i32, i32) {
    %c0_i32 = arith.constant 0 : i32
    %c0_i32_0 = arith.constant 0 : i32
    return %arg0, %c0_i32 : i32, i32
  }
  func.func @transform_3(%arg0: i32) -> (i32, i32) {
    %c0_i32 = arith.constant 0 : i32
    %c0_i32_0 = arith.constant 0 : i32
    return %arg0, %c0_i32 : i32, i32
  }
  func.func @transform_4(%arg0: i32) -> (i32, i32) {
    %c0_i32 = arith.constant 0 : i32
    %c0_i32_0 = arith.constant 0 : i32
    return %arg0, %c0_i32 : i32, i32
  }
  func.func @transform_5(%arg0: i32) -> (i32, i32) {
    %c0_i32 = arith.constant 0 : i32
    %c0_i32_0 = arith.constant 0 : i32
    %c0_i32_1 = arith.constant 0 : i32
    return %c0_i32, %c0_i32_0 : i32, i32
  }
  func.func @transform_6(%arg0: i32) -> (i32, i32) {
    %c0_i32 = arith.constant 0 : i32
    %c0_i32_0 = arith.constant 0 : i32
    %c0_i32_1 = arith.constant 0 : i32
    return %c0_i32, %c0_i32_0 : i32, i32
  }
  func.func @transform_7(%arg0: i32) -> (i32, i32) {
    %c0_i32 = arith.constant 0 : i32
    %c0_i32_0 = arith.constant 0 : i32
    %c0_i32_1 = arith.constant 0 : i32
    return %c0_i32, %c0_i32_0 : i32, i32
  }
  func.func @transform_8(%arg0: i32) -> (i32, i32) {
    %c0_i32 = arith.constant 0 : i32
    %c0_i32_0 = arith.constant 0 : i32
    %c0_i32_1 = arith.constant 0 : i32
    return %c0_i32, %c0_i32_0 : i32, i32
  }
  func.func @transform_9(%arg0: i32) -> (i32, i32) {
    %c0_i32 = arith.constant 0 : i32
    %c0_i32_0 = arith.constant 0 : i32
    %c0_i32_1 = arith.constant 0 : i32
    return %c0_i32, %c0_i32_0 : i32, i32
  }
  func.func @transform_10(%arg0: i32) -> (i32, i32) {
    %c0_i32 = arith.constant 0 : i32
    %c0_i32_0 = arith.constant 0 : i32
    %c0_i32_1 = arith.constant 0 : i32
    return %c0_i32, %c0_i32_0 : i32, i32
  }
  func.func @transform_11(%arg0: i32) -> (i32, i32) {
    %c0_i32 = arith.constant 0 : i32
    %c0_i32_0 = arith.constant 0 : i32
    %c0_i32_1 = arith.constant 0 : i32
    return %c0_i32, %c0_i32_0 : i32, i32
  }
  func.func @transform_12(%arg0: i32) -> (i32, i32) {
    %c0_i32 = arith.constant 0 : i32
    %c0_i32_0 = arith.constant 0 : i32
    %c0_i32_1 = arith.constant 0 : i32
    return %c0_i32, %c0_i32_0 : i32, i32
  }
  func.func @transform_13(%arg0: i32) -> (i32, i32) {
    %c0_i32 = arith.constant 0 : i32
    %c0_i32_0 = arith.constant 0 : i32
    %c0_i32_1 = arith.constant 0 : i32
    return %c0_i32, %c0_i32_0 : i32, i32
  }
  func.func @transform_14(%arg0: i32) -> (i32, i32) {
    %c0_i32 = arith.constant 0 : i32
    %c0_i32_0 = arith.constant 0 : i32
    %c0_i32_1 = arith.constant 0 : i32
    return %c0_i32, %c0_i32_0 : i32, i32
  }
  func.func @transform_15(%arg0: i32) -> (i32, i32) {
    %c0_i32 = arith.constant 0 : i32
    %c0_i32_0 = arith.constant 0 : i32
    %c0_i32_1 = arith.constant 0 : i32
    return %c0_i32, %c0_i32_0 : i32, i32
  }
  func.func @transform_16(%arg0: i32) -> (i32, i32) {
    %c0_i32 = arith.constant 0 : i32
    %c0_i32_0 = arith.constant 0 : i32
    %c0_i32_1 = arith.constant 0 : i32
    return %c0_i32, %c0_i32_0 : i32, i32
  }
  func.func @transform_17(%arg0: i32) -> (i32, i32) {
    %c0_i32 = arith.constant 0 : i32
    %c0_i32_0 = arith.constant 0 : i32
    %c0_i32_1 = arith.constant 0 : i32
    return %c0_i32, %c0_i32_0 : i32, i32
  }
  func.func @transform_18(%arg0: i32) -> (i32, i32) {
    %c0_i32 = arith.constant 0 : i32
    %c0_i32_0 = arith.constant 0 : i32
    %c0_i32_1 = arith.constant 0 : i32
    return %c0_i32, %c0_i32_0 : i32, i32
  }
  func.func @transform_19(%arg0: i32) -> (i32, i32) {
    %c0_i32 = arith.constant 0 : i32
    %c0_i32_0 = arith.constant 0 : i32
    %c0_i32_1 = arith.constant 0 : i32
    return %c0_i32, %c0_i32_0 : i32, i32
  }
  func.func @transform_20(%arg0: i32) -> (i32, i32) {
    %c0_i32 = arith.constant 0 : i32
    %c0_i32_0 = arith.constant 0 : i32
    %c0_i32_1 = arith.constant 0 : i32
    return %c0_i32, %c0_i32_0 : i32, i32
  }
  func.func @transform_21(%arg0: i32) -> (i32, i32) {
    %c0_i32 = arith.constant 0 : i32
    %c0_i32_0 = arith.constant 0 : i32
    %c0_i32_1 = arith.constant 0 : i32
    return %c0_i32, %c0_i32_0 : i32, i32
  }
  func.func @transform_22(%arg0: i32) -> (i32, i32) {
    %c0_i32 = arith.constant 0 : i32
    %c0_i32_0 = arith.constant 0 : i32
    %c0_i32_1 = arith.constant 0 : i32
    return %c0_i32, %c0_i32_0 : i32, i32
  }
}

module attributes {stable_mosaic.version = 11 : i64} {
  func.func @_cfconv_kernel(%arg0: i32, %arg1: memref<16x128xf32, #tpu.memory_space<vmem>>, %arg2: memref<16x1xf32, #tpu.memory_space<vmem>>, %arg3: memref<16x128xf32, #tpu.memory_space<vmem>>, %arg4: memref<16x1xi32, #tpu.memory_space<vmem>>, %arg5: memref<16x1xi32, #tpu.memory_space<vmem>>, %arg6: memref<128x128xf32, #tpu.memory_space<vmem>>, %arg7: memref<1x128xf32, #tpu.memory_space<vmem>>, %arg8: memref<1x128xf32, #tpu.memory_space<vmem>>, %arg9: memref<1x128xf32, #tpu.memory_space<vmem>>, %arg10: memref<128x128xf32, #tpu.memory_space<vmem>>, %arg11: memref<1x128xf32, #tpu.memory_space<vmem>>, %arg12: memref<1x1xf32, #tpu.memory_space<vmem>>, %arg13: memref<128x128xf32, #tpu.memory_space<vmem>>, %arg14: memref<1x128xf32, #tpu.memory_space<vmem>>, %arg15: memref<1x32xf32, #tpu.memory_space<vmem>>, %arg16: memref<1x32xf32, #tpu.memory_space<vmem>>, %arg17: memref<1x32xf32, #tpu.memory_space<vmem>>, %arg18: memref<1x1xf32, #tpu.memory_space<vmem>>, %arg19: memref<128x128xf32, #tpu.memory_space<vmem>>, %arg20: memref<1x128xf32, #tpu.memory_space<vmem>>, %arg21: memref<1x128xf32, #tpu.memory_space<vmem>>, %arg22: memref<1x128xf32, #tpu.memory_space<vmem>>, %arg23: memref<16x128xf32, #tpu.memory_space<vmem>>, %arg24: memref<16x128xf32, #tpu.memory_space<vmem>>, %arg25: memref<16x128xf32, #tpu.memory_space<vmem>>) attributes {dimension_semantics = [#tpu.dimension_semantics<arbitrary>], iteration_bounds = array<i64: 3>, scalar_prefetch = 0 : i64, scratch_operands = 2 : i64, tpu.core_type = #tpu.core_type<tc>, window_params = [{pipeline_mode = #tpu.pipeline_mode<synchronous>, transform_indices = @transform_0, window_bounds = array<i64: 16, 128>}, {transform_indices = @transform_1, window_bounds = array<i64: 16, 1>}, {transform_indices = @transform_2, window_bounds = array<i64: 16, 128>}, {transform_indices = @transform_3, window_bounds = array<i64: 16, 1>}, {transform_indices = @transform_4, window_bounds = array<i64: 16, 1>}, {pipeline_mode = #tpu.pipeline_mode<synchronous>, transform_indices = @transform_5, window_bounds = array<i64: 128, 128>}, {pipeline_mode = #tpu.pipeline_mode<synchronous>, transform_indices = @transform_6, window_bounds = array<i64: 1, 128>}, {pipeline_mode = #tpu.pipeline_mode<synchronous>, transform_indices = @transform_7, window_bounds = array<i64: 1, 128>}, {pipeline_mode = #tpu.pipeline_mode<synchronous>, transform_indices = @transform_8, window_bounds = array<i64: 1, 128>}, {pipeline_mode = #tpu.pipeline_mode<synchronous>, transform_indices = @transform_9, window_bounds = array<i64: 128, 128>}, {pipeline_mode = #tpu.pipeline_mode<synchronous>, transform_indices = @transform_10, window_bounds = array<i64: 1, 128>}, {pipeline_mode = #tpu.pipeline_mode<synchronous>, transform_indices = @transform_11, window_bounds = array<i64: 1, 1>}, {pipeline_mode = #tpu.pipeline_mode<synchronous>, transform_indices = @transform_12, window_bounds = array<i64: 128, 128>}, {pipeline_mode = #tpu.pipeline_mode<synchronous>, transform_indices = @transform_13, window_bounds = array<i64: 1, 128>}, {pipeline_mode = #tpu.pipeline_mode<synchronous>, transform_indices = @transform_14, window_bounds = array<i64: 1, 32>}, {pipeline_mode = #tpu.pipeline_mode<synchronous>, transform_indices = @transform_15, window_bounds = array<i64: 1, 32>}, {pipeline_mode = #tpu.pipeline_mode<synchronous>, transform_indices = @transform_16, window_bounds = array<i64: 1, 32>}, {pipeline_mode = #tpu.pipeline_mode<synchronous>, transform_indices = @transform_17, window_bounds = array<i64: 1, 1>}, {pipeline_mode = #tpu.pipeline_mode<synchronous>, transform_indices = @transform_18, window_bounds = array<i64: 128, 128>}, {pipeline_mode = #tpu.pipeline_mode<synchronous>, transform_indices = @transform_19, window_bounds = array<i64: 1, 128>}, {pipeline_mode = #tpu.pipeline_mode<synchronous>, transform_indices = @transform_20, window_bounds = array<i64: 1, 128>}, {pipeline_mode = #tpu.pipeline_mode<synchronous>, transform_indices = @transform_21, window_bounds = array<i64: 1, 128>}, {pipeline_mode = #tpu.pipeline_mode<synchronous>, transform_indices = @transform_22, window_bounds = array<i64: 16, 128>}]} {
    %c0_i32 = arith.constant 0 : i32
    %0 = arith.cmpi eq, %arg0, %c0_i32 : i32
    %1 = arith.extui %0 : i1 to i32
    %c0_i32_0 = arith.constant 0 : i32
    %2 = arith.cmpi ne, %1, %c0_i32_0 : i32
    scf.if %2 {
      %c0_51 = arith.constant 0 : index
      %c0_52 = arith.constant 0 : index
      %106 = vector.load %arg1[%c0_51, %c0_52] : memref<16x128xf32, #tpu.memory_space<vmem>>, vector<16x128xf32>
      %c0_53 = arith.constant 0 : index
      %c0_54 = arith.constant 0 : index
      %107 = vector.load %arg6[%c0_53, %c0_54] : memref<128x128xf32, #tpu.memory_space<vmem>>, vector<128x128xf32>
      %cst_55 = arith.constant dense<0.000000e+00> : vector<16x128xf32>
      %108 = tpu.matmul %106, %107, %cst_55 {dimension_numbers = #tpu.dot_dimension_numbers<[1], [0], [0], [1], [0, 0, 1, 1], [], []>} : vector<16x128xf32>, vector<128x128xf32>, vector<16x128xf32> -> vector<16x128xf32>
      %c0_56 = arith.constant 0 : index
      %c0_57 = arith.constant 0 : index
      %109 = vector.load %arg7[%c0_56, %c0_57] : memref<1x128xf32, #tpu.memory_space<vmem>>, vector<1x128xf32>
      %110 = vector.broadcast %109 : vector<1x128xf32> to vector<16x128xf32>
      %111 = arith.addf %108, %110 : vector<16x128xf32>
      %c0_58 = arith.constant 0 : index
      %c0_59 = arith.constant 0 : index
      %112 = vector.load %arg8[%c0_58, %c0_59] : memref<1x128xf32, #tpu.memory_space<vmem>>, vector<1x128xf32>
      %c0_60 = arith.constant 0 : index
      %c0_61 = arith.constant 0 : index
      %113 = vector.load %arg9[%c0_60, %c0_61] : memref<1x128xf32, #tpu.memory_space<vmem>>, vector<1x128xf32>
      %cst_62 = arith.constant dense<0.000000e+00> : vector<128xf32>
      %114 = vector.multi_reduction <add>, %111, %cst_62 [0] : vector<16x128xf32> to vector<128xf32>
      %115 = vector.shape_cast %114 : vector<128xf32> to vector<1x128xf32>
      %cst_63 = arith.constant 1.600000e+01 : f32
      %116 = vector.broadcast %cst_63 : f32 to vector<1x128xf32>
      %117 = arith.divf %115, %116 : vector<1x128xf32>
      %118 = vector.broadcast %117 : vector<1x128xf32> to vector<16x128xf32>
      %119 = arith.subf %111, %118 : vector<16x128xf32>
      %120 = arith.mulf %119, %119 : vector<16x128xf32>
      %cst_64 = arith.constant dense<0.000000e+00> : vector<128xf32>
      %121 = vector.multi_reduction <add>, %120, %cst_64 [0] : vector<16x128xf32> to vector<128xf32>
      %122 = vector.shape_cast %121 : vector<128xf32> to vector<1x128xf32>
      %cst_65 = arith.constant 1.600000e+01 : f32
      %123 = vector.broadcast %cst_65 : f32 to vector<1x128xf32>
      %124 = arith.divf %122, %123 : vector<1x128xf32>
      %125 = vector.broadcast %117 : vector<1x128xf32> to vector<16x128xf32>
      %126 = arith.subf %111, %125 : vector<16x128xf32>
      %cst_66 = arith.constant 9.99999974E-6 : f32
      %127 = vector.broadcast %cst_66 : f32 to vector<1x128xf32>
      %128 = arith.addf %124, %127 : vector<1x128xf32>
      %129 = math.rsqrt %128 : vector<1x128xf32>
      %130 = vector.broadcast %129 : vector<1x128xf32> to vector<16x128xf32>
      %131 = arith.mulf %126, %130 : vector<16x128xf32>
      %132 = vector.broadcast %112 : vector<1x128xf32> to vector<16x128xf32>
      %133 = arith.mulf %131, %132 : vector<16x128xf32>
      %134 = vector.broadcast %113 : vector<1x128xf32> to vector<16x128xf32>
      %135 = arith.addf %133, %134 : vector<16x128xf32>
      %cst_67 = arith.constant 0.000000e+00 : f32
      %136 = vector.broadcast %cst_67 : f32 to vector<16x128xf32>
      %137 = arith.cmpf oge, %135, %136 : vector<16x128xf32>
      %cst_68 = arith.constant 2.000000e-01 : f32
      %138 = vector.broadcast %cst_68 : f32 to vector<16x128xf32>
      %139 = arith.mulf %138, %135 : vector<16x128xf32>
      %140 = arith.select %137, %135, %139 : vector<16x128xi1>, vector<16x128xf32>
      %c0_69 = arith.constant 0 : index
      %c0_70 = arith.constant 0 : index
      %141 = vector.load %arg24[%c0_69, %c0_70] : memref<16x128xf32, #tpu.memory_space<vmem>>, vector<16x128xf32>
      tpu.vector_store %arg24[%c0_69, %c0_70], %140 {strides = array<i32>} : memref<16x128xf32, #tpu.memory_space<vmem>>, vector<16x128xf32>,
      %cst_71 = arith.constant 0.000000e+00 : f32
      %142 = vector.broadcast %cst_71 : f32 to vector<16x128xf32>
      %c0_72 = arith.constant 0 : index
      %c0_73 = arith.constant 0 : index
      %143 = vector.load %arg25[%c0_72, %c0_73] : memref<16x128xf32, #tpu.memory_space<vmem>>, vector<16x128xf32>
      tpu.vector_store %arg25[%c0_72, %c0_73], %142 {strides = array<i32>} : memref<16x128xf32, #tpu.memory_space<vmem>>, vector<16x128xf32>,
    } else {
    }
    %c0 = arith.constant 0 : index
    %c0_1 = arith.constant 0 : index
    %3 = vector.load %arg2[%c0, %c0_1] : memref<16x1xf32, #tpu.memory_space<vmem>>, vector<16x1xf32>
    %c0_2 = arith.constant 0 : index
    %c0_3 = arith.constant 0 : index
    %4 = vector.load %arg15[%c0_2, %c0_3] : memref<1x32xf32, #tpu.memory_space<vmem>>, vector<1x32xf32>
    %5 = vector.broadcast %3 : vector<16x1xf32> to vector<16x32xf32>
    %6 = vector.broadcast %4 : vector<1x32xf32> to vector<16x32xf32>
    %7 = arith.mulf %5, %6 : vector<16x32xf32>
    %c0_4 = arith.constant 0 : index
    %c0_5 = arith.constant 0 : index
    %8 = vector.load %arg16[%c0_4, %c0_5] : memref<1x32xf32, #tpu.memory_space<vmem>>, vector<1x32xf32>
    %9 = vector.broadcast %8 : vector<1x32xf32> to vector<16x32xf32>
    %10 = arith.addf %7, %9 : vector<16x32xf32>
    %cst = arith.constant 0.000000e+00 : f32
    %11 = vector.broadcast %cst : f32 to vector<16x32xf32>
    %12 = arith.maximumf %10, %11 : vector<16x32xf32>
    %c0_6 = arith.constant 0 : index
    %c0_7 = arith.constant 0 : index
    %13 = vector.load %arg17[%c0_6, %c0_7] : memref<1x32xf32, #tpu.memory_space<vmem>>, vector<1x32xf32>
    %14 = vector.broadcast %13 : vector<1x32xf32> to vector<16x32xf32>
    %15 = arith.mulf %12, %14 : vector<16x32xf32>
    %cst_8 = arith.constant dense<0.000000e+00> : vector<16xf32>
    %16 = vector.multi_reduction <add>, %15, %cst_8 [1] : vector<16x32xf32> to vector<16xf32>
    %17 = vector.shape_cast %16 : vector<16xf32> to vector<16x1xf32>
    %c0_9 = arith.constant 0 : index
    %c0_10 = arith.constant 0 : index
    %18 = vector.load %arg18[%c0_9, %c0_10] : memref<1x1xf32, #tpu.memory_space<vmem>>, vector<1x1xf32>
    %19 = vector.broadcast %18 : vector<1x1xf32> to vector<16x1xf32>
    %20 = arith.addf %17, %19 : vector<16x1xf32>
    %cst_11 = arith.constant 0.000000e+00 : f32
    %21 = vector.broadcast %cst_11 : f32 to vector<16x1xf32>
    %22 = arith.subf %21, %20 : vector<16x1xf32>
    %23 = math.exp %22 : vector<16x1xf32>
    %cst_12 = arith.constant 1.000000e+00 : f32
    %24 = vector.broadcast %cst_12 : f32 to vector<16x1xf32>
    %25 = arith.addf %24, %23 : vector<16x1xf32>
    %cst_13 = arith.constant 1.000000e+00 : f32
    %26 = vector.broadcast %cst_13 : f32 to vector<16x1xf32>
    %27 = arith.divf %26, %25 : vector<16x1xf32>
    %cst_14 = arith.constant 1.000000e+01 : f32
    %28 = vector.broadcast %cst_14 : f32 to vector<16x1xf32>
    %29 = arith.subf %3, %28 : vector<16x1xf32>
    %30 = arith.mulf %29, %29 : vector<16x1xf32>
    %cst_15 = arith.constant 0.000000e+00 : f32
    %31 = vector.broadcast %cst_15 : f32 to vector<16x1xf32>
    %32 = arith.subf %31, %30 : vector<16x1xf32>
    %cst_16 = arith.constant 2.000000e+02 : f32
    %33 = vector.broadcast %cst_16 : f32 to vector<16x1xf32>
    %34 = arith.divf %32, %33 : vector<16x1xf32>
    %35 = math.exp %34 : vector<16x1xf32>
    %cst_17 = arith.constant 1.000000e+01 : f32
    %36 = vector.broadcast %cst_17 : f32 to vector<16x1xf32>
    %37 = arith.cmpf ole, %3, %36 : vector<16x1xf32>
    %38 = arith.extui %37 : vector<16x1xi1> to vector<16x1xi32>
    %39 = arith.sitofp %38 : vector<16x1xi32> to vector<16x1xf32>
    %40 = arith.mulf %35, %39 : vector<16x1xf32>
    %cst_18 = arith.constant 0.000000e+00 : f32
    %41 = vector.broadcast %cst_18 : f32 to vector<16x1xf32>
    %42 = arith.cmpf oge, %3, %41 : vector<16x1xf32>
    %43 = arith.extui %42 : vector<16x1xi1> to vector<16x1xi32>
    %44 = arith.sitofp %43 : vector<16x1xi32> to vector<16x1xf32>
    %45 = arith.mulf %40, %44 : vector<16x1xf32>
    %46 = arith.mulf %27, %45 : vector<16x1xf32>
    %c0_19 = arith.constant 0 : index
    %c0_20 = arith.constant 0 : index
    %47 = vector.load %arg3[%c0_19, %c0_20] : memref<16x128xf32, #tpu.memory_space<vmem>>, vector<16x128xf32>
    %c0_21 = arith.constant 0 : index
    %c0_22 = arith.constant 0 : index
    %48 = vector.load %arg10[%c0_21, %c0_22] : memref<128x128xf32, #tpu.memory_space<vmem>>, vector<128x128xf32>
    %cst_23 = arith.constant dense<0.000000e+00> : vector<16x128xf32>
    %49 = tpu.matmul %47, %48, %cst_23 {dimension_numbers = #tpu.dot_dimension_numbers<[1], [0], [0], [1], [0, 0, 1, 1], [], []>} : vector<16x128xf32>, vector<128x128xf32>, vector<16x128xf32> -> vector<16x128xf32>
    %c0_24 = arith.constant 0 : index
    %c0_25 = arith.constant 0 : index
    %50 = vector.load %arg11[%c0_24, %c0_25] : memref<1x128xf32, #tpu.memory_space<vmem>>, vector<1x128xf32>
    %51 = vector.broadcast %50 : vector<1x128xf32> to vector<16x128xf32>
    %52 = arith.addf %49, %51 : vector<16x128xf32>
    %c0_26 = arith.constant 0 : index
    %c0_27 = arith.constant 0 : index
    %53 = vector.load %arg12[%c0_26, %c0_27] : memref<1x1xf32, #tpu.memory_space<vmem>>, vector<1x1xf32>
    %54 = vector.broadcast %53 : vector<1x1xf32> to vector<16x128xf32>
    %55 = arith.mulf %54, %52 : vector<16x128xf32>
    %cst_28 = arith.constant 0.000000e+00 : f32
    %56 = vector.broadcast %cst_28 : f32 to vector<16x128xf32>
    %57 = arith.maximumf %55, %56 : vector<16x128xf32>
    %58 = math.absf %55 : vector<16x128xf32>
    %cst_29 = arith.constant 0.000000e+00 : f32
    %59 = vector.broadcast %cst_29 : f32 to vector<16x128xf32>
    %60 = arith.subf %59, %58 : vector<16x128xf32>
    %61 = math.exp %60 : vector<16x128xf32>
    %cst_30 = arith.constant 1.000000e+00 : f32
    %62 = vector.broadcast %cst_30 : f32 to vector<16x128xf32>
    %63 = arith.addf %62, %61 : vector<16x128xf32>
    %64 = math.log %63 : vector<16x128xf32>
    %65 = arith.addf %57, %64 : vector<16x128xf32>
    %cst_31 = arith.constant 0.693147182 : f32
    %66 = vector.broadcast %cst_31 : f32 to vector<16x128xf32>
    %67 = arith.subf %65, %66 : vector<16x128xf32>
    %c0_32 = arith.constant 0 : index
    %c0_33 = arith.constant 0 : index
    %68 = vector.load %arg13[%c0_32, %c0_33] : memref<128x128xf32, #tpu.memory_space<vmem>>, vector<128x128xf32>
    %cst_34 = arith.constant dense<0.000000e+00> : vector<16x128xf32>
    %69 = tpu.matmul %67, %68, %cst_34 {dimension_numbers = #tpu.dot_dimension_numbers<[1], [0], [0], [1], [0, 0, 1, 1], [], []>} : vector<16x128xf32>, vector<128x128xf32>, vector<16x128xf32> -> vector<16x128xf32>
    %c0_35 = arith.constant 0 : index
    %c0_36 = arith.constant 0 : index
    %70 = vector.load %arg14[%c0_35, %c0_36] : memref<1x128xf32, #tpu.memory_space<vmem>>, vector<1x128xf32>
    %71 = vector.broadcast %70 : vector<1x128xf32> to vector<16x128xf32>
    %72 = arith.addf %69, %71 : vector<16x128xf32>
    %73 = vector.broadcast %46 : vector<16x1xf32> to vector<16x128xf32>
    %74 = arith.mulf %72, %73 : vector<16x128xf32>
    %c16_i32 = arith.constant 16 : i32
    %75 = arith.muli %arg0, %c16_i32 : i32
    %76 = tpu.iota {dimensions = array<i32: 0>} : vector<16x1xi32>
    %77 = vector.broadcast %75 : i32 to vector<16x1xi32>
    %78 = arith.addi %77, %76 : vector<16x1xi32>
    %c40_i32 = arith.constant 40 : i32
    %79 = vector.broadcast %c40_i32 : i32 to vector<16x1xi32>
    %80 = arith.cmpi slt, %78, %79 : vector<16x1xi32>
    %cst_37 = arith.constant 0.000000e+00 : f32
    %81 = vector.shape_cast %80 : vector<16x1xi1> to vector<16x1xi1>
    %82 = vector.broadcast %81 : vector<16x1xi1> to vector<16x128xi1>
    %83 = vector.broadcast %cst_37 : f32 to vector<16x128xf32>
    %84 = arith.select %82, %74, %83 : vector<16x128xi1>, vector<16x128xf32>
    %85 = tpu.iota {dimensions = array<i32: 1>} : vector<16x16xi32>
    %c0_38 = arith.constant 0 : index
    %c0_39 = arith.constant 0 : index
    %86 = vector.load %arg4[%c0_38, %c0_39] : memref<16x1xi32, #tpu.memory_space<vmem>>, vector<16x1xi32>
    %87 = vector.broadcast %86 : vector<16x1xi32> to vector<16x16xi32>
    %88 = arith.cmpi eq, %87, %85 : vector<16x16xi32>
    %89 = arith.extui %88 : vector<16x16xi1> to vector<16x16xi32>
    %90 = arith.sitofp %89 : vector<16x16xi32> to vector<16x16xf32>
    %c0_40 = arith.constant 0 : index
    %c0_41 = arith.constant 0 : index
    %91 = vector.load %arg5[%c0_40, %c0_41] : memref<16x1xi32, #tpu.memory_space<vmem>>, vector<16x1xi32>
    %92 = vector.broadcast %91 : vector<16x1xi32> to vector<16x16xi32>
    %93 = arith.cmpi eq, %92, %85 : vector<16x16xi32>
    %94 = arith.extui %93 : vector<16x16xi1> to vector<16x16xi32>
    %95 = arith.sitofp %94 : vector<16x16xi32> to vector<16x16xf32>
    %c0_42 = arith.constant 0 : index
    %c0_43 = arith.constant 0 : index
    %96 = vector.load %arg24[%c0_42, %c0_43] : memref<16x128xf32, #tpu.memory_space<vmem>>, vector<16x128xf32>
    %cst_44 = arith.constant dense<0.000000e+00> : vector<16x128xf32>
    %97 = tpu.matmul %90, %96, %cst_44 {dimension_numbers = #tpu.dot_dimension_numbers<[1], [0], [0], [1], [0, 0, 1, 1], [], []>} : vector<16x16xf32>, vector<16x128xf32>, vector<16x128xf32> -> vector<16x128xf32>
    %98 = arith.mulf %97, %84 : vector<16x128xf32>
    %c0_45 = arith.constant 0 : index
    %c0_46 = arith.constant 0 : index
    %99 = vector.load %arg25[%c0_45, %c0_46] : memref<16x128xf32, #tpu.memory_space<vmem>>, vector<16x128xf32>
    %cst_47 = arith.constant dense<0.000000e+00> : vector<16x128xf32>
    %100 = tpu.matmul %95, %98, %cst_47 {dimension_numbers = #tpu.dot_dimension_numbers<[0], [0], [1], [1], [0, 1, 1, 1], [], []>} : vector<16x16xf32>, vector<16x128xf32>, vector<16x128xf32> -> vector<16x128xf32>
    %101 = arith.addf %99, %100 : vector<16x128xf32>
    %c0_48 = arith.constant 0 : index
    %c0_49 = arith.constant 0 : index
    %102 = vector.load %arg25[%c0_48, %c0_49] : memref<16x128xf32, #tpu.memory_space<vmem>>, vector<16x128xf32>
    tpu.vector_store %arg25[%c0_48, %c0_49], %101 {strides = array<i32>} : memref<16x128xf32, #tpu.memory_space<vmem>>, vector<16x128xf32>,
    %c2_i32 = arith.constant 2 : i32
    %103 = arith.cmpi eq, %arg0, %c2_i32 : i32
    %104 = arith.extui %103 : i1 to i32
    %c0_i32_50 = arith.constant 0 : i32
    %105 = arith.cmpi ne, %104, %c0_i32_50 : i32
    scf.if %105 {
      %c0_51 = arith.constant 0 : index
      %c0_52 = arith.constant 0 : index
      %106 = vector.load %arg25[%c0_51, %c0_52] : memref<16x128xf32, #tpu.memory_space<vmem>>, vector<16x128xf32>
      %c0_53 = arith.constant 0 : index
      %c0_54 = arith.constant 0 : index
      %107 = vector.load %arg19[%c0_53, %c0_54] : memref<128x128xf32, #tpu.memory_space<vmem>>, vector<128x128xf32>
      %cst_55 = arith.constant dense<0.000000e+00> : vector<16x128xf32>
      %108 = tpu.matmul %106, %107, %cst_55 {dimension_numbers = #tpu.dot_dimension_numbers<[1], [0], [0], [1], [0, 0, 1, 1], [], []>} : vector<16x128xf32>, vector<128x128xf32>, vector<16x128xf32> -> vector<16x128xf32>
      %c0_56 = arith.constant 0 : index
      %c0_57 = arith.constant 0 : index
      %109 = vector.load %arg20[%c0_56, %c0_57] : memref<1x128xf32, #tpu.memory_space<vmem>>, vector<1x128xf32>
      %110 = vector.broadcast %109 : vector<1x128xf32> to vector<16x128xf32>
      %111 = arith.addf %108, %110 : vector<16x128xf32>
      %c0_58 = arith.constant 0 : index
      %c0_59 = arith.constant 0 : index
      %112 = vector.load %arg21[%c0_58, %c0_59] : memref<1x128xf32, #tpu.memory_space<vmem>>, vector<1x128xf32>
      %c0_60 = arith.constant 0 : index
      %c0_61 = arith.constant 0 : index
      %113 = vector.load %arg22[%c0_60, %c0_61] : memref<1x128xf32, #tpu.memory_space<vmem>>, vector<1x128xf32>
      %cst_62 = arith.constant dense<0.000000e+00> : vector<128xf32>
      %114 = vector.multi_reduction <add>, %111, %cst_62 [0] : vector<16x128xf32> to vector<128xf32>
      %115 = vector.shape_cast %114 : vector<128xf32> to vector<1x128xf32>
      %cst_63 = arith.constant 1.600000e+01 : f32
      %116 = vector.broadcast %cst_63 : f32 to vector<1x128xf32>
      %117 = arith.divf %115, %116 : vector<1x128xf32>
      %118 = vector.broadcast %117 : vector<1x128xf32> to vector<16x128xf32>
      %119 = arith.subf %111, %118 : vector<16x128xf32>
      %120 = arith.mulf %119, %119 : vector<16x128xf32>
      %cst_64 = arith.constant dense<0.000000e+00> : vector<128xf32>
      %121 = vector.multi_reduction <add>, %120, %cst_64 [0] : vector<16x128xf32> to vector<128xf32>
      %122 = vector.shape_cast %121 : vector<128xf32> to vector<1x128xf32>
      %cst_65 = arith.constant 1.600000e+01 : f32
      %123 = vector.broadcast %cst_65 : f32 to vector<1x128xf32>
      %124 = arith.divf %122, %123 : vector<1x128xf32>
      %125 = vector.broadcast %117 : vector<1x128xf32> to vector<16x128xf32>
      %126 = arith.subf %111, %125 : vector<16x128xf32>
      %cst_66 = arith.constant 9.99999974E-6 : f32
      %127 = vector.broadcast %cst_66 : f32 to vector<1x128xf32>
      %128 = arith.addf %124, %127 : vector<1x128xf32>
      %129 = math.rsqrt %128 : vector<1x128xf32>
      %130 = vector.broadcast %129 : vector<1x128xf32> to vector<16x128xf32>
      %131 = arith.mulf %126, %130 : vector<16x128xf32>
      %132 = vector.broadcast %112 : vector<1x128xf32> to vector<16x128xf32>
      %133 = arith.mulf %131, %132 : vector<16x128xf32>
      %134 = vector.broadcast %113 : vector<1x128xf32> to vector<16x128xf32>
      %135 = arith.addf %133, %134 : vector<16x128xf32>
      %c0_67 = arith.constant 0 : index
      %c0_68 = arith.constant 0 : index
      %136 = vector.load %arg23[%c0_67, %c0_68] : memref<16x128xf32, #tpu.memory_space<vmem>>, vector<16x128xf32>
      tpu.vector_store %arg23[%c0_67, %c0_68], %135 {strides = array<i32>} : memref<16x128xf32, #tpu.memory_space<vmem>>, vector<16x128xf32>,
    } else {
    }
    return
  }
  func.func @transform_0(%arg0: i32) -> (i32, i32) {
    %c0_i32 = arith.constant 0 : i32
    %c0_i32_0 = arith.constant 0 : i32
    %c0_i32_1 = arith.constant 0 : i32
    return %c0_i32, %c0_i32_0 : i32, i32
  }
  func.func @transform_1(%arg0: i32) -> (i32, i32) {
    %c0_i32 = arith.constant 0 : i32
    %c0_i32_0 = arith.constant 0 : i32
    return %arg0, %c0_i32 : i32, i32
  }
  func.func @transform_2(%arg0: i32) -> (i32, i32) {
    %c0_i32 = arith.constant 0 : i32
    %c0_i32_0 = arith.constant 0 : i32
    return %arg0, %c0_i32 : i32, i32
  }
  func.func @transform_3(%arg0: i32) -> (i32, i32) {
    %c0_i32 = arith.constant 0 : i32
    %c0_i32_0 = arith.constant 0 : i32
    return %arg0, %c0_i32 : i32, i32
  }
  func.func @transform_4(%arg0: i32) -> (i32, i32) {
    %c0_i32 = arith.constant 0 : i32
    %c0_i32_0 = arith.constant 0 : i32
    return %arg0, %c0_i32 : i32, i32
  }
  func.func @transform_5(%arg0: i32) -> (i32, i32) {
    %c0_i32 = arith.constant 0 : i32
    %c0_i32_0 = arith.constant 0 : i32
    %c0_i32_1 = arith.constant 0 : i32
    return %c0_i32, %c0_i32_0 : i32, i32
  }
  func.func @transform_6(%arg0: i32) -> (i32, i32) {
    %c0_i32 = arith.constant 0 : i32
    %c0_i32_0 = arith.constant 0 : i32
    %c0_i32_1 = arith.constant 0 : i32
    return %c0_i32, %c0_i32_0 : i32, i32
  }
  func.func @transform_7(%arg0: i32) -> (i32, i32) {
    %c0_i32 = arith.constant 0 : i32
    %c0_i32_0 = arith.constant 0 : i32
    %c0_i32_1 = arith.constant 0 : i32
    return %c0_i32, %c0_i32_0 : i32, i32
  }
  func.func @transform_8(%arg0: i32) -> (i32, i32) {
    %c0_i32 = arith.constant 0 : i32
    %c0_i32_0 = arith.constant 0 : i32
    %c0_i32_1 = arith.constant 0 : i32
    return %c0_i32, %c0_i32_0 : i32, i32
  }
  func.func @transform_9(%arg0: i32) -> (i32, i32) {
    %c0_i32 = arith.constant 0 : i32
    %c0_i32_0 = arith.constant 0 : i32
    %c0_i32_1 = arith.constant 0 : i32
    return %c0_i32, %c0_i32_0 : i32, i32
  }
  func.func @transform_10(%arg0: i32) -> (i32, i32) {
    %c0_i32 = arith.constant 0 : i32
    %c0_i32_0 = arith.constant 0 : i32
    %c0_i32_1 = arith.constant 0 : i32
    return %c0_i32, %c0_i32_0 : i32, i32
  }
  func.func @transform_11(%arg0: i32) -> (i32, i32) {
    %c0_i32 = arith.constant 0 : i32
    %c0_i32_0 = arith.constant 0 : i32
    %c0_i32_1 = arith.constant 0 : i32
    return %c0_i32, %c0_i32_0 : i32, i32
  }
  func.func @transform_12(%arg0: i32) -> (i32, i32) {
    %c0_i32 = arith.constant 0 : i32
    %c0_i32_0 = arith.constant 0 : i32
    %c0_i32_1 = arith.constant 0 : i32
    return %c0_i32, %c0_i32_0 : i32, i32
  }
  func.func @transform_13(%arg0: i32) -> (i32, i32) {
    %c0_i32 = arith.constant 0 : i32
    %c0_i32_0 = arith.constant 0 : i32
    %c0_i32_1 = arith.constant 0 : i32
    return %c0_i32, %c0_i32_0 : i32, i32
  }
  func.func @transform_14(%arg0: i32) -> (i32, i32) {
    %c0_i32 = arith.constant 0 : i32
    %c0_i32_0 = arith.constant 0 : i32
    %c0_i32_1 = arith.constant 0 : i32
    return %c0_i32, %c0_i32_0 : i32, i32
  }
  func.func @transform_15(%arg0: i32) -> (i32, i32) {
    %c0_i32 = arith.constant 0 : i32
    %c0_i32_0 = arith.constant 0 : i32
    %c0_i32_1 = arith.constant 0 : i32
    return %c0_i32, %c0_i32_0 : i32, i32
  }
  func.func @transform_16(%arg0: i32) -> (i32, i32) {
    %c0_i32 = arith.constant 0 : i32
    %c0_i32_0 = arith.constant 0 : i32
    %c0_i32_1 = arith.constant 0 : i32
    return %c0_i32, %c0_i32_0 : i32, i32
  }
  func.func @transform_17(%arg0: i32) -> (i32, i32) {
    %c0_i32 = arith.constant 0 : i32
    %c0_i32_0 = arith.constant 0 : i32
    %c0_i32_1 = arith.constant 0 : i32
    return %c0_i32, %c0_i32_0 : i32, i32
  }
  func.func @transform_18(%arg0: i32) -> (i32, i32) {
    %c0_i32 = arith.constant 0 : i32
    %c0_i32_0 = arith.constant 0 : i32
    %c0_i32_1 = arith.constant 0 : i32
    return %c0_i32, %c0_i32_0 : i32, i32
  }
  func.func @transform_19(%arg0: i32) -> (i32, i32) {
    %c0_i32 = arith.constant 0 : i32
    %c0_i32_0 = arith.constant 0 : i32
    %c0_i32_1 = arith.constant 0 : i32
    return %c0_i32, %c0_i32_0 : i32, i32
  }
  func.func @transform_20(%arg0: i32) -> (i32, i32) {
    %c0_i32 = arith.constant 0 : i32
    %c0_i32_0 = arith.constant 0 : i32
    %c0_i32_1 = arith.constant 0 : i32
    return %c0_i32, %c0_i32_0 : i32, i32
  }
  func.func @transform_21(%arg0: i32) -> (i32, i32) {
    %c0_i32 = arith.constant 0 : i32
    %c0_i32_0 = arith.constant 0 : i32
    %c0_i32_1 = arith.constant 0 : i32
    return %c0_i32, %c0_i32_0 : i32, i32
  }
  func.func @transform_22(%arg0: i32) -> (i32, i32) {
    %c0_i32 = arith.constant 0 : i32
    %c0_i32_0 = arith.constant 0 : i32
    %c0_i32_1 = arith.constant 0 : i32
    return %c0_i32, %c0_i32_0 : i32, i32
  }
}

module attributes {stable_mosaic.version = 11 : i64} {
  func.func @_tail_kernel(%arg0: i32, %arg1: memref<16x128xf32, #tpu.memory_space<vmem>>, %arg2: memref<16x128xf32, #tpu.memory_space<vmem>>, %arg3: memref<16x128xf32, #tpu.memory_space<vmem>>, %arg4: memref<1x1xf32, #tpu.memory_space<vmem>>, %arg5: memref<256x128xf32, #tpu.memory_space<vmem>>, %arg6: memref<1x128xf32, #tpu.memory_space<vmem>>, %arg7: memref<128x64xf32, #tpu.memory_space<vmem>>, %arg8: memref<1x64xf32, #tpu.memory_space<vmem>>, %arg9: memref<1x64xf32, #tpu.memory_space<vmem>>, %arg10: memref<1x1xf32, #tpu.memory_space<vmem>>, %arg11: memref<128x8xf32, #tpu.memory_space<vmem>>, %arg12: memref<8x128xf32, #tpu.memory_space<vmem>>, %arg13: memref<16x128xf32, #tpu.memory_space<vmem>>) attributes {dimension_semantics = [#tpu.dimension_semantics<parallel>], iteration_bounds = array<i64: 1>, scalar_prefetch = 0 : i64, scratch_operands = 0 : i64, tpu.core_type = #tpu.core_type<tc>, window_params = [{transform_indices = @transform_0, window_bounds = array<i64: 16, 128>}, {transform_indices = @transform_1, window_bounds = array<i64: 16, 128>}, {transform_indices = @transform_2, window_bounds = array<i64: 16, 128>}, {pipeline_mode = #tpu.pipeline_mode<synchronous>, transform_indices = @transform_3, window_bounds = array<i64: 1, 1>}, {pipeline_mode = #tpu.pipeline_mode<synchronous>, transform_indices = @transform_4, window_bounds = array<i64: 256, 128>}, {pipeline_mode = #tpu.pipeline_mode<synchronous>, transform_indices = @transform_5, window_bounds = array<i64: 1, 128>}, {pipeline_mode = #tpu.pipeline_mode<synchronous>, transform_indices = @transform_6, window_bounds = array<i64: 128, 64>}, {pipeline_mode = #tpu.pipeline_mode<synchronous>, transform_indices = @transform_7, window_bounds = array<i64: 1, 64>}, {pipeline_mode = #tpu.pipeline_mode<synchronous>, transform_indices = @transform_8, window_bounds = array<i64: 1, 64>}, {pipeline_mode = #tpu.pipeline_mode<synchronous>, transform_indices = @transform_9, window_bounds = array<i64: 1, 1>}, {pipeline_mode = #tpu.pipeline_mode<synchronous>, transform_indices = @transform_10, window_bounds = array<i64: 128, 8>}, {pipeline_mode = #tpu.pipeline_mode<synchronous>, transform_indices = @transform_11, window_bounds = array<i64: 8, 128>}, {transform_indices = @transform_12, window_bounds = array<i64: 16, 128>}]} {
    %c0 = arith.constant 0 : index
    %c0_0 = arith.constant 0 : index
    %0 = vector.load %arg4[%c0, %c0_0] : memref<1x1xf32, #tpu.memory_space<vmem>>, vector<1x1xf32>
    %c0_1 = arith.constant 0 : index
    %c0_2 = arith.constant 0 : index
    %1 = vector.load %arg2[%c0_1, %c0_2] : memref<16x128xf32, #tpu.memory_space<vmem>>, vector<16x128xf32>
    %2 = vector.broadcast %0 : vector<1x1xf32> to vector<16x128xf32>
    %3 = arith.mulf %2, %1 : vector<16x128xf32>
    %cst = arith.constant 0.000000e+00 : f32
    %4 = vector.broadcast %cst : f32 to vector<16x128xf32>
    %5 = arith.maximumf %3, %4 : vector<16x128xf32>
    %6 = math.absf %3 : vector<16x128xf32>
    %cst_3 = arith.constant 0.000000e+00 : f32
    %7 = vector.broadcast %cst_3 : f32 to vector<16x128xf32>
    %8 = arith.subf %7, %6 : vector<16x128xf32>
    %9 = math.exp %8 : vector<16x128xf32>
    %cst_4 = arith.constant 1.000000e+00 : f32
    %10 = vector.broadcast %cst_4 : f32 to vector<16x128xf32>
    %11 = arith.addf %10, %9 : vector<16x128xf32>
    %12 = math.log %11 : vector<16x128xf32>
    %13 = arith.addf %5, %12 : vector<16x128xf32>
    %cst_5 = arith.constant 0.693147182 : f32
    %14 = vector.broadcast %cst_5 : f32 to vector<16x128xf32>
    %15 = arith.subf %13, %14 : vector<16x128xf32>
    %c0_6 = arith.constant 0 : index
    %c0_7 = arith.constant 0 : index
    %16 = vector.load %arg4[%c0_6, %c0_7] : memref<1x1xf32, #tpu.memory_space<vmem>>, vector<1x1xf32>
    %c0_8 = arith.constant 0 : index
    %c0_9 = arith.constant 0 : index
    %17 = vector.load %arg3[%c0_8, %c0_9] : memref<16x128xf32, #tpu.memory_space<vmem>>, vector<16x128xf32>
    %18 = vector.broadcast %16 : vector<1x1xf32> to vector<16x128xf32>
    %19 = arith.mulf %18, %17 : vector<16x128xf32>
    %cst_10 = arith.constant 0.000000e+00 : f32
    %20 = vector.broadcast %cst_10 : f32 to vector<16x128xf32>
    %21 = arith.maximumf %19, %20 : vector<16x128xf32>
    %22 = math.absf %19 : vector<16x128xf32>
    %cst_11 = arith.constant 0.000000e+00 : f32
    %23 = vector.broadcast %cst_11 : f32 to vector<16x128xf32>
    %24 = arith.subf %23, %22 : vector<16x128xf32>
    %25 = math.exp %24 : vector<16x128xf32>
    %cst_12 = arith.constant 1.000000e+00 : f32
    %26 = vector.broadcast %cst_12 : f32 to vector<16x128xf32>
    %27 = arith.addf %26, %25 : vector<16x128xf32>
    %28 = math.log %27 : vector<16x128xf32>
    %29 = arith.addf %21, %28 : vector<16x128xf32>
    %cst_13 = arith.constant 0.693147182 : f32
    %30 = vector.broadcast %cst_13 : f32 to vector<16x128xf32>
    %31 = arith.subf %29, %30 : vector<16x128xf32>
    %c0_14 = arith.constant 0 : index
    %c0_15 = arith.constant 0 : index
    %32 = vector.load %arg5[%c0_14, %c0_15] : memref<256x128xf32, #tpu.memory_space<vmem>>, vector<128x128xf32>
    %cst_16 = arith.constant dense<0.000000e+00> : vector<16x128xf32>
    %33 = tpu.matmul %15, %32, %cst_16 {dimension_numbers = #tpu.dot_dimension_numbers<[1], [0], [0], [1], [0, 0, 1, 1], [], []>} : vector<16x128xf32>, vector<128x128xf32>, vector<16x128xf32> -> vector<16x128xf32>
    %c128 = arith.constant 128 : index
    %c0_17 = arith.constant 0 : index
    %34 = vector.load %arg5[%c128, %c0_17] : memref<256x128xf32, #tpu.memory_space<vmem>>, vector<128x128xf32>
    %cst_18 = arith.constant dense<0.000000e+00> : vector<16x128xf32>
    %35 = tpu.matmul %31, %34, %cst_18 {dimension_numbers = #tpu.dot_dimension_numbers<[1], [0], [0], [1], [0, 0, 1, 1], [], []>} : vector<16x128xf32>, vector<128x128xf32>, vector<16x128xf32> -> vector<16x128xf32>
    %36 = arith.addf %33, %35 : vector<16x128xf32>
    %c0_19 = arith.constant 0 : index
    %c0_20 = arith.constant 0 : index
    %37 = vector.load %arg6[%c0_19, %c0_20] : memref<1x128xf32, #tpu.memory_space<vmem>>, vector<1x128xf32>
    %38 = vector.broadcast %37 : vector<1x128xf32> to vector<16x128xf32>
    %39 = arith.addf %36, %38 : vector<16x128xf32>
    %c0_21 = arith.constant 0 : index
    %c0_22 = arith.constant 0 : index
    %40 = vector.load %arg7[%c0_21, %c0_22] : memref<128x64xf32, #tpu.memory_space<vmem>>, vector<128x64xf32>
    %cst_23 = arith.constant dense<0.000000e+00> : vector<16x64xf32>
    %41 = tpu.matmul %39, %40, %cst_23 {dimension_numbers = #tpu.dot_dimension_numbers<[1], [0], [0], [1], [0, 0, 1, 1], [], []>} : vector<16x128xf32>, vector<128x64xf32>, vector<16x64xf32> -> vector<16x64xf32>
    %c0_24 = arith.constant 0 : index
    %c0_25 = arith.constant 0 : index
    %42 = vector.load %arg8[%c0_24, %c0_25] : memref<1x64xf32, #tpu.memory_space<vmem>>, vector<1x64xf32>
    %43 = vector.broadcast %42 : vector<1x64xf32> to vector<16x64xf32>
    %44 = arith.addf %41, %43 : vector<16x64xf32>
    %cst_26 = arith.constant 0.000000e+00 : f32
    %45 = vector.broadcast %cst_26 : f32 to vector<16x64xf32>
    %46 = arith.maximumf %44, %45 : vector<16x64xf32>
    %c0_27 = arith.constant 0 : index
    %c0_28 = arith.constant 0 : index
    %47 = vector.load %arg9[%c0_27, %c0_28] : memref<1x64xf32, #tpu.memory_space<vmem>>, vector<1x64xf32>
    %48 = vector.broadcast %47 : vector<1x64xf32> to vector<16x64xf32>
    %49 = arith.mulf %46, %48 : vector<16x64xf32>
    %cst_29 = arith.constant dense<0.000000e+00> : vector<16xf32>
    %50 = vector.multi_reduction <add>, %49, %cst_29 [1] : vector<16x64xf32> to vector<16xf32>
    %51 = vector.shape_cast %50 : vector<16xf32> to vector<16x1xf32>
    %c0_30 = arith.constant 0 : index
    %c0_31 = arith.constant 0 : index
    %52 = vector.load %arg10[%c0_30, %c0_31] : memref<1x1xf32, #tpu.memory_space<vmem>>, vector<1x1xf32>
    %53 = vector.broadcast %52 : vector<1x1xf32> to vector<16x1xf32>
    %54 = arith.addf %51, %53 : vector<16x1xf32>
    %cst_32 = arith.constant 0.000000e+00 : f32
    %55 = vector.broadcast %cst_32 : f32 to vector<16x1xf32>
    %56 = arith.subf %55, %54 : vector<16x1xf32>
    %57 = math.exp %56 : vector<16x1xf32>
    %cst_33 = arith.constant 1.000000e+00 : f32
    %58 = vector.broadcast %cst_33 : f32 to vector<16x1xf32>
    %59 = arith.addf %58, %57 : vector<16x1xf32>
    %cst_34 = arith.constant 1.000000e+00 : f32
    %60 = vector.broadcast %cst_34 : f32 to vector<16x1xf32>
    %61 = arith.divf %60, %59 : vector<16x1xf32>
    %62 = vector.broadcast %61 : vector<16x1xf32> to vector<16x128xf32>
    %63 = arith.mulf %39, %62 : vector<16x128xf32>
    %c0_35 = arith.constant 0 : index
    %c0_36 = arith.constant 0 : index
    %64 = vector.load %arg11[%c0_35, %c0_36] : memref<128x8xf32, #tpu.memory_space<vmem>>, vector<128x8xf32>
    %cst_37 = arith.constant dense<0.000000e+00> : vector<16x8xf32>
    %65 = tpu.matmul %63, %64, %cst_37 {dimension_numbers = #tpu.dot_dimension_numbers<[1], [0], [0], [1], [0, 0, 1, 1], [], []>} : vector<16x128xf32>, vector<128x8xf32>, vector<16x8xf32> -> vector<16x8xf32>
    %cst_38 = arith.constant 0.000000e+00 : f32
    %66 = vector.broadcast %cst_38 : f32 to vector<16x8xf32>
    %67 = arith.maximumf %65, %66 : vector<16x8xf32>
    %c0_39 = arith.constant 0 : index
    %c0_40 = arith.constant 0 : index
    %68 = vector.load %arg12[%c0_39, %c0_40] : memref<8x128xf32, #tpu.memory_space<vmem>>, vector<8x128xf32>
    %cst_41 = arith.constant dense<0.000000e+00> : vector<16x128xf32>
    %69 = tpu.matmul %67, %68, %cst_41 {dimension_numbers = #tpu.dot_dimension_numbers<[1], [0], [0], [1], [0, 0, 1, 1], [], []>} : vector<16x8xf32>, vector<8x128xf32>, vector<16x128xf32> -> vector<16x128xf32>
    %cst_42 = arith.constant 0.000000e+00 : f32
    %70 = vector.broadcast %cst_42 : f32 to vector<16x128xf32>
    %71 = arith.subf %70, %69 : vector<16x128xf32>
    %72 = math.exp %71 : vector<16x128xf32>
    %cst_43 = arith.constant 1.000000e+00 : f32
    %73 = vector.broadcast %cst_43 : f32 to vector<16x128xf32>
    %74 = arith.addf %73, %72 : vector<16x128xf32>
    %cst_44 = arith.constant 1.000000e+00 : f32
    %75 = vector.broadcast %cst_44 : f32 to vector<16x128xf32>
    %76 = arith.divf %75, %74 : vector<16x128xf32>
    %c0_45 = arith.constant 0 : index
    %c0_46 = arith.constant 0 : index
    %77 = vector.load %arg1[%c0_45, %c0_46] : memref<16x128xf32, #tpu.memory_space<vmem>>, vector<16x128xf32>
    %78 = arith.mulf %63, %76 : vector<16x128xf32>
    %79 = arith.addf %77, %78 : vector<16x128xf32>
    %c0_47 = arith.constant 0 : index
    %c0_48 = arith.constant 0 : index
    %80 = vector.load %arg13[%c0_47, %c0_48] : memref<16x128xf32, #tpu.memory_space<vmem>>, vector<16x128xf32>
    tpu.vector_store %arg13[%c0_47, %c0_48], %79 {strides = array<i32>} : memref<16x128xf32, #tpu.memory_space<vmem>>, vector<16x128xf32>,
    return
  }
  func.func @transform_0(%arg0: i32) -> (i32, i32) {
    %c0_i32 = arith.constant 0 : i32
    %c0_i32_0 = arith.constant 0 : i32
    return %arg0, %c0_i32 : i32, i32
  }
  func.func @transform_1(%arg0: i32) -> (i32, i32) {
    %c0_i32 = arith.constant 0 : i32
    %c0_i32_0 = arith.constant 0 : i32
    return %arg0, %c0_i32 : i32, i32
  }
  func.func @transform_2(%arg0: i32) -> (i32, i32) {
    %c0_i32 = arith.constant 0 : i32
    %c0_i32_0 = arith.constant 0 : i32
    return %arg0, %c0_i32 : i32, i32
  }
  func.func @transform_3(%arg0: i32) -> (i32, i32) {
    %c0_i32 = arith.constant 0 : i32
    %c0_i32_0 = arith.constant 0 : i32
    %c0_i32_1 = arith.constant 0 : i32
    return %c0_i32, %c0_i32_0 : i32, i32
  }
  func.func @transform_4(%arg0: i32) -> (i32, i32) {
    %c0_i32 = arith.constant 0 : i32
    %c0_i32_0 = arith.constant 0 : i32
    %c0_i32_1 = arith.constant 0 : i32
    return %c0_i32, %c0_i32_0 : i32, i32
  }
  func.func @transform_5(%arg0: i32) -> (i32, i32) {
    %c0_i32 = arith.constant 0 : i32
    %c0_i32_0 = arith.constant 0 : i32
    %c0_i32_1 = arith.constant 0 : i32
    return %c0_i32, %c0_i32_0 : i32, i32
  }
  func.func @transform_6(%arg0: i32) -> (i32, i32) {
    %c0_i32 = arith.constant 0 : i32
    %c0_i32_0 = arith.constant 0 : i32
    %c0_i32_1 = arith.constant 0 : i32
    return %c0_i32, %c0_i32_0 : i32, i32
  }
  func.func @transform_7(%arg0: i32) -> (i32, i32) {
    %c0_i32 = arith.constant 0 : i32
    %c0_i32_0 = arith.constant 0 : i32
    %c0_i32_1 = arith.constant 0 : i32
    return %c0_i32, %c0_i32_0 : i32, i32
  }
  func.func @transform_8(%arg0: i32) -> (i32, i32) {
    %c0_i32 = arith.constant 0 : i32
    %c0_i32_0 = arith.constant 0 : i32
    %c0_i32_1 = arith.constant 0 : i32
    return %c0_i32, %c0_i32_0 : i32, i32
  }
  func.func @transform_9(%arg0: i32) -> (i32, i32) {
    %c0_i32 = arith.constant 0 : i32
    %c0_i32_0 = arith.constant 0 : i32
    %c0_i32_1 = arith.constant 0 : i32
    return %c0_i32, %c0_i32_0 : i32, i32
  }
  func.func @transform_10(%arg0: i32) -> (i32, i32) {
    %c0_i32 = arith.constant 0 : i32
    %c0_i32_0 = arith.constant 0 : i32
    %c0_i32_1 = arith.constant 0 : i32
    return %c0_i32, %c0_i32_0 : i32, i32
  }
  func.func @transform_11(%arg0: i32) -> (i32, i32) {
    %c0_i32 = arith.constant 0 : i32
    %c0_i32_0 = arith.constant 0 : i32
    %c0_i32_1 = arith.constant 0 : i32
    return %c0_i32, %c0_i32_0 : i32, i32
  }
  func.func @transform_12(%arg0: i32) -> (i32, i32) {
    %c0_i32 = arith.constant 0 : i32
    %c0_i32_0 = arith.constant 0 : i32
    return %arg0, %c0_i32 : i32, i32
  }
}

module attributes {stable_mosaic.version = 11 : i64} {
  func.func @_tail_kernel(%arg0: i32, %arg1: memref<16x128xf32, #tpu.memory_space<vmem>>, %arg2: memref<16x128xf32, #tpu.memory_space<vmem>>, %arg3: memref<16x128xf32, #tpu.memory_space<vmem>>, %arg4: memref<1x1xf32, #tpu.memory_space<vmem>>, %arg5: memref<256x128xf32, #tpu.memory_space<vmem>>, %arg6: memref<1x128xf32, #tpu.memory_space<vmem>>, %arg7: memref<128x64xf32, #tpu.memory_space<vmem>>, %arg8: memref<1x64xf32, #tpu.memory_space<vmem>>, %arg9: memref<1x64xf32, #tpu.memory_space<vmem>>, %arg10: memref<1x1xf32, #tpu.memory_space<vmem>>, %arg11: memref<128x8xf32, #tpu.memory_space<vmem>>, %arg12: memref<8x128xf32, #tpu.memory_space<vmem>>, %arg13: memref<16x128xf32, #tpu.memory_space<vmem>>) attributes {dimension_semantics = [#tpu.dimension_semantics<parallel>], iteration_bounds = array<i64: 1>, scalar_prefetch = 0 : i64, scratch_operands = 0 : i64, tpu.core_type = #tpu.core_type<tc>, window_params = [{transform_indices = @transform_0, window_bounds = array<i64: 16, 128>}, {transform_indices = @transform_1, window_bounds = array<i64: 16, 128>}, {transform_indices = @transform_2, window_bounds = array<i64: 16, 128>}, {pipeline_mode = #tpu.pipeline_mode<synchronous>, transform_indices = @transform_3, window_bounds = array<i64: 1, 1>}, {pipeline_mode = #tpu.pipeline_mode<synchronous>, transform_indices = @transform_4, window_bounds = array<i64: 256, 128>}, {pipeline_mode = #tpu.pipeline_mode<synchronous>, transform_indices = @transform_5, window_bounds = array<i64: 1, 128>}, {pipeline_mode = #tpu.pipeline_mode<synchronous>, transform_indices = @transform_6, window_bounds = array<i64: 128, 64>}, {pipeline_mode = #tpu.pipeline_mode<synchronous>, transform_indices = @transform_7, window_bounds = array<i64: 1, 64>}, {pipeline_mode = #tpu.pipeline_mode<synchronous>, transform_indices = @transform_8, window_bounds = array<i64: 1, 64>}, {pipeline_mode = #tpu.pipeline_mode<synchronous>, transform_indices = @transform_9, window_bounds = array<i64: 1, 1>}, {pipeline_mode = #tpu.pipeline_mode<synchronous>, transform_indices = @transform_10, window_bounds = array<i64: 128, 8>}, {pipeline_mode = #tpu.pipeline_mode<synchronous>, transform_indices = @transform_11, window_bounds = array<i64: 8, 128>}, {transform_indices = @transform_12, window_bounds = array<i64: 16, 128>}]} {
    %c0 = arith.constant 0 : index
    %c0_0 = arith.constant 0 : index
    %0 = vector.load %arg4[%c0, %c0_0] : memref<1x1xf32, #tpu.memory_space<vmem>>, vector<1x1xf32>
    %c0_1 = arith.constant 0 : index
    %c0_2 = arith.constant 0 : index
    %1 = vector.load %arg2[%c0_1, %c0_2] : memref<16x128xf32, #tpu.memory_space<vmem>>, vector<16x128xf32>
    %2 = vector.broadcast %0 : vector<1x1xf32> to vector<16x128xf32>
    %3 = arith.mulf %2, %1 : vector<16x128xf32>
    %cst = arith.constant 0.000000e+00 : f32
    %4 = vector.broadcast %cst : f32 to vector<16x128xf32>
    %5 = arith.maximumf %3, %4 : vector<16x128xf32>
    %6 = math.absf %3 : vector<16x128xf32>
    %cst_3 = arith.constant 0.000000e+00 : f32
    %7 = vector.broadcast %cst_3 : f32 to vector<16x128xf32>
    %8 = arith.subf %7, %6 : vector<16x128xf32>
    %9 = math.exp %8 : vector<16x128xf32>
    %cst_4 = arith.constant 1.000000e+00 : f32
    %10 = vector.broadcast %cst_4 : f32 to vector<16x128xf32>
    %11 = arith.addf %10, %9 : vector<16x128xf32>
    %12 = math.log %11 : vector<16x128xf32>
    %13 = arith.addf %5, %12 : vector<16x128xf32>
    %cst_5 = arith.constant 0.693147182 : f32
    %14 = vector.broadcast %cst_5 : f32 to vector<16x128xf32>
    %15 = arith.subf %13, %14 : vector<16x128xf32>
    %c0_6 = arith.constant 0 : index
    %c0_7 = arith.constant 0 : index
    %16 = vector.load %arg4[%c0_6, %c0_7] : memref<1x1xf32, #tpu.memory_space<vmem>>, vector<1x1xf32>
    %c0_8 = arith.constant 0 : index
    %c0_9 = arith.constant 0 : index
    %17 = vector.load %arg3[%c0_8, %c0_9] : memref<16x128xf32, #tpu.memory_space<vmem>>, vector<16x128xf32>
    %18 = vector.broadcast %16 : vector<1x1xf32> to vector<16x128xf32>
    %19 = arith.mulf %18, %17 : vector<16x128xf32>
    %cst_10 = arith.constant 0.000000e+00 : f32
    %20 = vector.broadcast %cst_10 : f32 to vector<16x128xf32>
    %21 = arith.maximumf %19, %20 : vector<16x128xf32>
    %22 = math.absf %19 : vector<16x128xf32>
    %cst_11 = arith.constant 0.000000e+00 : f32
    %23 = vector.broadcast %cst_11 : f32 to vector<16x128xf32>
    %24 = arith.subf %23, %22 : vector<16x128xf32>
    %25 = math.exp %24 : vector<16x128xf32>
    %cst_12 = arith.constant 1.000000e+00 : f32
    %26 = vector.broadcast %cst_12 : f32 to vector<16x128xf32>
    %27 = arith.addf %26, %25 : vector<16x128xf32>
    %28 = math.log %27 : vector<16x128xf32>
    %29 = arith.addf %21, %28 : vector<16x128xf32>
    %cst_13 = arith.constant 0.693147182 : f32
    %30 = vector.broadcast %cst_13 : f32 to vector<16x128xf32>
    %31 = arith.subf %29, %30 : vector<16x128xf32>
    %c0_14 = arith.constant 0 : index
    %c0_15 = arith.constant 0 : index
    %32 = vector.load %arg5[%c0_14, %c0_15] : memref<256x128xf32, #tpu.memory_space<vmem>>, vector<128x128xf32>
    %cst_16 = arith.constant dense<0.000000e+00> : vector<16x128xf32>
    %33 = tpu.matmul %15, %32, %cst_16 {dimension_numbers = #tpu.dot_dimension_numbers<[1], [0], [0], [1], [0, 0, 1, 1], [], []>} : vector<16x128xf32>, vector<128x128xf32>, vector<16x128xf32> -> vector<16x128xf32>
    %c128 = arith.constant 128 : index
    %c0_17 = arith.constant 0 : index
    %34 = vector.load %arg5[%c128, %c0_17] : memref<256x128xf32, #tpu.memory_space<vmem>>, vector<128x128xf32>
    %cst_18 = arith.constant dense<0.000000e+00> : vector<16x128xf32>
    %35 = tpu.matmul %31, %34, %cst_18 {dimension_numbers = #tpu.dot_dimension_numbers<[1], [0], [0], [1], [0, 0, 1, 1], [], []>} : vector<16x128xf32>, vector<128x128xf32>, vector<16x128xf32> -> vector<16x128xf32>
    %36 = arith.addf %33, %35 : vector<16x128xf32>
    %c0_19 = arith.constant 0 : index
    %c0_20 = arith.constant 0 : index
    %37 = vector.load %arg6[%c0_19, %c0_20] : memref<1x128xf32, #tpu.memory_space<vmem>>, vector<1x128xf32>
    %38 = vector.broadcast %37 : vector<1x128xf32> to vector<16x128xf32>
    %39 = arith.addf %36, %38 : vector<16x128xf32>
    %c0_21 = arith.constant 0 : index
    %c0_22 = arith.constant 0 : index
    %40 = vector.load %arg7[%c0_21, %c0_22] : memref<128x64xf32, #tpu.memory_space<vmem>>, vector<128x64xf32>
    %cst_23 = arith.constant dense<0.000000e+00> : vector<16x64xf32>
    %41 = tpu.matmul %39, %40, %cst_23 {dimension_numbers = #tpu.dot_dimension_numbers<[1], [0], [0], [1], [0, 0, 1, 1], [], []>} : vector<16x128xf32>, vector<128x64xf32>, vector<16x64xf32> -> vector<16x64xf32>
    %c0_24 = arith.constant 0 : index
    %c0_25 = arith.constant 0 : index
    %42 = vector.load %arg8[%c0_24, %c0_25] : memref<1x64xf32, #tpu.memory_space<vmem>>, vector<1x64xf32>
    %43 = vector.broadcast %42 : vector<1x64xf32> to vector<16x64xf32>
    %44 = arith.addf %41, %43 : vector<16x64xf32>
    %cst_26 = arith.constant 0.000000e+00 : f32
    %45 = vector.broadcast %cst_26 : f32 to vector<16x64xf32>
    %46 = arith.maximumf %44, %45 : vector<16x64xf32>
    %c0_27 = arith.constant 0 : index
    %c0_28 = arith.constant 0 : index
    %47 = vector.load %arg9[%c0_27, %c0_28] : memref<1x64xf32, #tpu.memory_space<vmem>>, vector<1x64xf32>
    %48 = vector.broadcast %47 : vector<1x64xf32> to vector<16x64xf32>
    %49 = arith.mulf %46, %48 : vector<16x64xf32>
    %cst_29 = arith.constant dense<0.000000e+00> : vector<16xf32>
    %50 = vector.multi_reduction <add>, %49, %cst_29 [1] : vector<16x64xf32> to vector<16xf32>
    %51 = vector.shape_cast %50 : vector<16xf32> to vector<16x1xf32>
    %c0_30 = arith.constant 0 : index
    %c0_31 = arith.constant 0 : index
    %52 = vector.load %arg10[%c0_30, %c0_31] : memref<1x1xf32, #tpu.memory_space<vmem>>, vector<1x1xf32>
    %53 = vector.broadcast %52 : vector<1x1xf32> to vector<16x1xf32>
    %54 = arith.addf %51, %53 : vector<16x1xf32>
    %cst_32 = arith.constant 0.000000e+00 : f32
    %55 = vector.broadcast %cst_32 : f32 to vector<16x1xf32>
    %56 = arith.subf %55, %54 : vector<16x1xf32>
    %57 = math.exp %56 : vector<16x1xf32>
    %cst_33 = arith.constant 1.000000e+00 : f32
    %58 = vector.broadcast %cst_33 : f32 to vector<16x1xf32>
    %59 = arith.addf %58, %57 : vector<16x1xf32>
    %cst_34 = arith.constant 1.000000e+00 : f32
    %60 = vector.broadcast %cst_34 : f32 to vector<16x1xf32>
    %61 = arith.divf %60, %59 : vector<16x1xf32>
    %62 = vector.broadcast %61 : vector<16x1xf32> to vector<16x128xf32>
    %63 = arith.mulf %39, %62 : vector<16x128xf32>
    %c0_35 = arith.constant 0 : index
    %c0_36 = arith.constant 0 : index
    %64 = vector.load %arg11[%c0_35, %c0_36] : memref<128x8xf32, #tpu.memory_space<vmem>>, vector<128x8xf32>
    %cst_37 = arith.constant dense<0.000000e+00> : vector<16x8xf32>
    %65 = tpu.matmul %63, %64, %cst_37 {dimension_numbers = #tpu.dot_dimension_numbers<[1], [0], [0], [1], [0, 0, 1, 1], [], []>} : vector<16x128xf32>, vector<128x8xf32>, vector<16x8xf32> -> vector<16x8xf32>
    %cst_38 = arith.constant 0.000000e+00 : f32
    %66 = vector.broadcast %cst_38 : f32 to vector<16x8xf32>
    %67 = arith.maximumf %65, %66 : vector<16x8xf32>
    %c0_39 = arith.constant 0 : index
    %c0_40 = arith.constant 0 : index
    %68 = vector.load %arg12[%c0_39, %c0_40] : memref<8x128xf32, #tpu.memory_space<vmem>>, vector<8x128xf32>
    %cst_41 = arith.constant dense<0.000000e+00> : vector<16x128xf32>
    %69 = tpu.matmul %67, %68, %cst_41 {dimension_numbers = #tpu.dot_dimension_numbers<[1], [0], [0], [1], [0, 0, 1, 1], [], []>} : vector<16x8xf32>, vector<8x128xf32>, vector<16x128xf32> -> vector<16x128xf32>
    %cst_42 = arith.constant 0.000000e+00 : f32
    %70 = vector.broadcast %cst_42 : f32 to vector<16x128xf32>
    %71 = arith.subf %70, %69 : vector<16x128xf32>
    %72 = math.exp %71 : vector<16x128xf32>
    %cst_43 = arith.constant 1.000000e+00 : f32
    %73 = vector.broadcast %cst_43 : f32 to vector<16x128xf32>
    %74 = arith.addf %73, %72 : vector<16x128xf32>
    %cst_44 = arith.constant 1.000000e+00 : f32
    %75 = vector.broadcast %cst_44 : f32 to vector<16x128xf32>
    %76 = arith.divf %75, %74 : vector<16x128xf32>
    %c0_45 = arith.constant 0 : index
    %c0_46 = arith.constant 0 : index
    %77 = vector.load %arg1[%c0_45, %c0_46] : memref<16x128xf32, #tpu.memory_space<vmem>>, vector<16x128xf32>
    %78 = arith.mulf %63, %76 : vector<16x128xf32>
    %79 = arith.addf %77, %78 : vector<16x128xf32>
    %c0_47 = arith.constant 0 : index
    %c0_48 = arith.constant 0 : index
    %80 = vector.load %arg13[%c0_47, %c0_48] : memref<16x128xf32, #tpu.memory_space<vmem>>, vector<16x128xf32>
    tpu.vector_store %arg13[%c0_47, %c0_48], %79 {strides = array<i32>} : memref<16x128xf32, #tpu.memory_space<vmem>>, vector<16x128xf32>,
    return
  }
  func.func @transform_0(%arg0: i32) -> (i32, i32) {
    %c0_i32 = arith.constant 0 : i32
    %c0_i32_0 = arith.constant 0 : i32
    return %arg0, %c0_i32 : i32, i32
  }
  func.func @transform_1(%arg0: i32) -> (i32, i32) {
    %c0_i32 = arith.constant 0 : i32
    %c0_i32_0 = arith.constant 0 : i32
    return %arg0, %c0_i32 : i32, i32
  }
  func.func @transform_2(%arg0: i32) -> (i32, i32) {
    %c0_i32 = arith.constant 0 : i32
    %c0_i32_0 = arith.constant 0 : i32
    return %arg0, %c0_i32 : i32, i32
  }
  func.func @transform_3(%arg0: i32) -> (i32, i32) {
    %c0_i32 = arith.constant 0 : i32
    %c0_i32_0 = arith.constant 0 : i32
    %c0_i32_1 = arith.constant 0 : i32
    return %c0_i32, %c0_i32_0 : i32, i32
  }
  func.func @transform_4(%arg0: i32) -> (i32, i32) {
    %c0_i32 = arith.constant 0 : i32
    %c0_i32_0 = arith.constant 0 : i32
    %c0_i32_1 = arith.constant 0 : i32
    return %c0_i32, %c0_i32_0 : i32, i32
  }
  func.func @transform_5(%arg0: i32) -> (i32, i32) {
    %c0_i32 = arith.constant 0 : i32
    %c0_i32_0 = arith.constant 0 : i32
    %c0_i32_1 = arith.constant 0 : i32
    return %c0_i32, %c0_i32_0 : i32, i32
  }
  func.func @transform_6(%arg0: i32) -> (i32, i32) {
    %c0_i32 = arith.constant 0 : i32
    %c0_i32_0 = arith.constant 0 : i32
    %c0_i32_1 = arith.constant 0 : i32
    return %c0_i32, %c0_i32_0 : i32, i32
  }
  func.func @transform_7(%arg0: i32) -> (i32, i32) {
    %c0_i32 = arith.constant 0 : i32
    %c0_i32_0 = arith.constant 0 : i32
    %c0_i32_1 = arith.constant 0 : i32
    return %c0_i32, %c0_i32_0 : i32, i32
  }
  func.func @transform_8(%arg0: i32) -> (i32, i32) {
    %c0_i32 = arith.constant 0 : i32
    %c0_i32_0 = arith.constant 0 : i32
    %c0_i32_1 = arith.constant 0 : i32
    return %c0_i32, %c0_i32_0 : i32, i32
  }
  func.func @transform_9(%arg0: i32) -> (i32, i32) {
    %c0_i32 = arith.constant 0 : i32
    %c0_i32_0 = arith.constant 0 : i32
    %c0_i32_1 = arith.constant 0 : i32
    return %c0_i32, %c0_i32_0 : i32, i32
  }
  func.func @transform_10(%arg0: i32) -> (i32, i32) {
    %c0_i32 = arith.constant 0 : i32
    %c0_i32_0 = arith.constant 0 : i32
    %c0_i32_1 = arith.constant 0 : i32
    return %c0_i32, %c0_i32_0 : i32, i32
  }
  func.func @transform_11(%arg0: i32) -> (i32, i32) {
    %c0_i32 = arith.constant 0 : i32
    %c0_i32_0 = arith.constant 0 : i32
    %c0_i32_1 = arith.constant 0 : i32
    return %c0_i32, %c0_i32_0 : i32, i32
  }
  func.func @transform_12(%arg0: i32) -> (i32, i32) {
    %c0_i32 = arith.constant 0 : i32
    %c0_i32_0 = arith.constant 0 : i32
    return %arg0, %c0_i32 : i32, i32
  }
}

</mosaic_0001>

<llo_original>
// kernel: schnet_forward.8
$region0: #{schnet_forward.8}
  #allocation0 [shape = 'u32[]', space=smem, size = 0x4, offset = 0x4, fixed_abs, tag = 'smem constant byte address 0x4 - core index']
  #allocation1 [shape = 'u32[144,128]{1,0:T(1,128)}', space=vmem, size = 0x12000, scoped, tag = 'internal scratch']
  #allocation2 [shape = 'f32[1,1]{1,0:T(1,128)S(1)}', space=vmem, size = 0x200, scoped, tag = 'scoped memory for schnet_forward.8']
  #allocation3 [shape = 'f32[1,1]{1,0:T(1,128)S(1)}', space=vmem, size = 0x200, scoped, tag = 'scoped memory for schnet_forward.8']
  %s0 = inlined_call_operand.vmem [shape: f32[16,128], index: 0, kind: input, shape index: {}]
  %s1 = inlined_call_operand.vmem [shape: f32[16,128], index: 1, kind: input, shape index: {}]
  %s2 = inlined_call_operand.vmem [shape: f32[16,128], index: 2, kind: input, shape index: {}]
  %s3 = inlined_call_operand.<no memory space> [shape: f32[1,1], index: 3, kind: input, shape index: {}]
  %s4 = inlined_call_operand.vmem [shape: f32[256,128], index: 4, kind: input, shape index: {}]
  %s5 = inlined_call_operand.vmem [shape: f32[1,128], index: 5, kind: input, shape index: {}]
  %s6 = inlined_call_operand.vmem [shape: f32[128,64], index: 6, kind: input, shape index: {}]
  %s7 = inlined_call_operand.vmem [shape: f32[1,64], index: 7, kind: input, shape index: {}]
  %s8 = inlined_call_operand.vmem [shape: f32[1,64], index: 8, kind: input, shape index: {}]
  %s9 = inlined_call_operand.<no memory space> [shape: f32[1,1], index: 9, kind: input, shape index: {}]
  %s10 = inlined_call_operand.vmem [shape: f32[128,8], index: 10, kind: input, shape index: {}]
  %s11 = inlined_call_operand.vmem [shape: f32[8,128], index: 11, kind: input, shape index: {}]
  %s12 = inlined_call_operand.vmem [shape: f32[16,128], index: 12, kind: output, shape index: {}]
  %s13 = sld [smem:[#allocation0]]
  $region58: #{schnet_forward.8} parent=0
    _
  %s15 = ssub.s32 1, %s13
  %s16 = scalar_select 0, %s15, %s13
  %v17 = vstv %s3
  %18 = vst [vmem:[#allocation2] sm:$0x1] %v17
  %v19 = vstv %s9
  %20 = vst [vmem:[#allocation3] sm:$0x1] %v19
  // Predicated region
  $region2: #{schnet_forward.8} parent=0 // pred_check
    _
  $region3: #{schnet_forward.8} parent=0 // pred_check_branch
    %22 = sbr.rel (0) target = $region5
  $region4: #{schnet_forward.8} parent=0 // pred_region
    _
  $region5: #{schnet_forward.8} parent=0 // pred_fallthru
    _
  // Predicated region
  $region6: #{schnet_forward.8} parent=0 // pred_check
    _
  $region7: #{schnet_forward.8} parent=0 // pred_check_branch
    %24 = sbr.rel (0) target = $region9
  $region8: #{schnet_forward.8} parent=0 // pred_region
    _
  $region9: #{schnet_forward.8} parent=0 // pred_fallthru
    _
  // Predicated region
  $region10: #{schnet_forward.8} parent=0 // pred_check
    _
  $region11: #{schnet_forward.8} parent=0 // pred_check_branch
    %26 = sbr.rel (0) target = $region13
  $region12: #{schnet_forward.8} parent=0 // pred_region
    _
  $region13: #{schnet_forward.8} parent=0 // pred_fallthru
    _
  // Predicated region
  $region14: #{schnet_forward.8} parent=0 // pred_check
    _
  $region15: #{schnet_forward.8} parent=0 // pred_check_branch
    %28 = sbr.rel (0) target = $region17
  $region16: #{schnet_forward.8} parent=0 // pred_region
    _
  $region17: #{schnet_forward.8} parent=0 // pred_fallthru
    _
  // Predicated region
  $region18: #{schnet_forward.8} parent=0 // pred_check
    _
  $region19: #{schnet_forward.8} parent=0 // pred_check_branch
    %30 = sbr.rel (0) target = $region21
  $region20: #{schnet_forward.8} parent=0 // pred_region
    _
  $region21: #{schnet_forward.8} parent=0 // pred_fallthru
    _
  // Predicated region
  $region22: #{schnet_forward.8} parent=0 // pred_check
    _
  $region23: #{schnet_forward.8} parent=0 // pred_check_branch
    %32 = sbr.rel (0) target = $region25
  $region24: #{schnet_forward.8} parent=0 // pred_region
    _
  $region25: #{schnet_forward.8} parent=0 // pred_fallthru
    _
  // Predicated region
  $region26: #{schnet_forward.8} parent=0 // pred_check
    _
  $region27: #{schnet_forward.8} parent=0 // pred_check_branch
    %34 = sbr.rel (0) target = $region29
  $region28: #{schnet_forward.8} parent=0 // pred_region
    _
  $region29: #{schnet_forward.8} parent=0 // pred_fallthru
    _
  // Predicated region
  $region30: #{schnet_forward.8} parent=0 // pred_check
    _
  $region31: #{schnet_forward.8} parent=0 // pred_check_branch
    %36 = sbr.rel (0) target = $region33
  $region32: #{schnet_forward.8} parent=0 // pred_region
    _
  $region33: #{schnet_forward.8} parent=0 // pred_fallthru
    _
  // Predicated region
  $region34: #{schnet_forward.8} parent=0 // pred_check
    _
  $region35: #{schnet_forward.8} parent=0 // pred_check_branch
    %38 = sbr.rel (0) target = $region37
  $region36: #{schnet_forward.8} parent=0 // pred_region
    _
  $region37: #{schnet_forward.8} parent=0 // pred_fallthru
    _
  // Predicated region
  $region38: #{schnet_forward.8} parent=0 // pred_check
    _
  $region39: #{schnet_forward.8} parent=0 // pred_check_branch
    %40 = sbr.rel (0) target = $region41
  $region40: #{schnet_forward.8} parent=0 // pred_region
    _
  $region41: #{schnet_forward.8} parent=0 // pred_fallthru
    _
  // Predicated region
  $region42: #{schnet_forward.8} parent=0 // pred_check
    _
  $region43: #{schnet_forward.8} parent=0 // pred_check_branch
    %42 = sbr.rel (0) target = $region45
  $region44: #{schnet_forward.8} parent=0 // pred_region
    _
  $region45: #{schnet_forward.8} parent=0 // pred_fallthru
    _
  // Predicated region
  $region46: #{schnet_forward.8} parent=0 // pred_check
    _
  $region47: #{schnet_forward.8} parent=0 // pred_check_branch
    %44 = sbr.rel (0) target = $region49
  $region48: #{schnet_forward.8} parent=0 // pred_region
    _
  $region49: #{schnet_forward.8} parent=0 // pred_fallthru
    _
  %v45 = vld [vmem:[#allocation2] sm:$0x1]
  %v46 = vld [vmem:[%s1] sm:$0xff]
  %v47 = vld [vmem:[%s1 + $0x8] sm:$0xff]
  %v49 = vlaneseq
  %v50 = vshrl.u32 %v49, 7
  %v51 = vsub.s32 0, %v50
  %v52 = vrot.slane %v45, %v51
  %53 = vset.pattern.permute.xlu0 0
  %54 = vperm.xlu0 %53, %v52
  %v55 = vpop.permute.xlu0 %54
  %v57 = vmul.f32 %v55, %v46
  %v58 = vmul.f32 %v55, %v47
  %v59 = vmax.f32 %v57, 0.0
  %v60 = vmax.f32 %v58, 0.0
  %v61 = vand.u32 2147483647, %v57
  %v62 = vand.u32 2147483647, %v58
  %v63 = vsub.f32 0.0, %v61
  %v64 = vsub.f32 0.0, %v62
  %v65 = vmul.f32 %v63, 1.442695
  %v66 = vpow.pop %v65
  %v67 = vmul.f32 %v64, 1.442695
  %v68 = vpow.pop %v67
  %v69 = vadd.f32 %v66, 1.0
  %v70 = vadd.f32 %v68, 1.0
  %v71 = vlog2.pop %v69
  %v72 = vmul.f32 %v71, 0.6931472
  %v73 = vlog2.pop %v70
  %v74 = vmul.f32 %v73, 0.6931472
  %v75 = vadd.f32 %v59, %v72
  %v76 = vadd.f32 %v60, %v74
  %v77 = vsub.f32 %v75, 0.6931472
  %v78 = vsub.f32 %v76, 0.6931472
  %v79 = vld [vmem:[%s2] sm:$0xff]
  %v80 = vld [vmem:[%s2 + $0x8] sm:$0xff]
  %v81 = vmul.f32 %v55, %v79
  %v82 = vmul.f32 %v55, %v80
  %v83 = vmax.f32 %v81, 0.0
  %v84 = vmax.f32 %v82, 0.0
  %v85 = vand.u32 2147483647, %v81
  %v86 = vand.u32 2147483647, %v82
  %v87 = vsub.f32 0.0, %v85
  %v88 = vsub.f32 0.0, %v86
  %v89 = vmul.f32 %v87, 1.442695
  %v90 = vpow.pop %v89
  %v91 = vmul.f32 %v88, 1.442695
  %v92 = vpow.pop %v91
  %v93 = vadd.f32 %v90, 1.0
  %v94 = vadd.f32 %v92, 1.0
  %v95 = vlog2.pop %v93
  %v96 = vmul.f32 %v95, 0.6931472
  %v97 = vlog2.pop %v94
  %v98 = vmul.f32 %v97, 0.6931472
  %v99 = vadd.f32 %v83, %v96
  %v100 = vadd.f32 %v84, %v98
  %v101 = vsub.f32 %v99, 0.6931472
  %v102 = vsub.f32 %v100, 0.6931472
  %v103 = vld [vmem:[%s4] sm:$0xff]
  %v104 = vld [vmem:[%s4 + $0x8] sm:$0xff]
  %v105 = vld [vmem:[%s4 + $0x10] sm:$0xff]
  %v106 = vld [vmem:[%s4 + $0x18] sm:$0xff]
  %v107 = vld [vmem:[%s4 + $0x20] sm:$0xff]
  %v108 = vld [vmem:[%s4 + $0x28] sm:$0xff]
  %v109 = vld [vmem:[%s4 + $0x30] sm:$0xff]
  %v110 = vld [vmem:[%s4 + $0x38] sm:$0xff]
  %v111 = vld [vmem:[%s4 + $0x40] sm:$0xff]
  %v112 = vld [vmem:[%s4 + $0x48] sm:$0xff]
  %v113 = vld [vmem:[%s4 + $0x50] sm:$0xff]
  %v114 = vld [vmem:[%s4 + $0x58] sm:$0xff]
  %v115 = vld [vmem:[%s4 + $0x60] sm:$0xff]
  %v116 = vld [vmem:[%s4 + $0x68] sm:$0xff]
  %v117 = vld [vmem:[%s4 + $0x70] sm:$0xff]
  %v118 = vld [vmem:[%s4 + $0x78] sm:$0xff]
  %v119 = vld [vmem:[%s4 + $0x80] sm:$0xff]
  %v120 = vld [vmem:[%s4 + $0x88] sm:$0xff]
  %v121 = vld [vmem:[%s4 + $0x90] sm:$0xff]
  %v122 = vld [vmem:[%s4 + $0x98] sm:$0xff]
  %v123 = vld [vmem:[%s4 + $0xa0] sm:$0xff]
  %v124 = vld [vmem:[%s4 + $0xa8] sm:$0xff]
  %v125 = vld [vmem:[%s4 + $0xb0] sm:$0xff]
  %v126 = vld [vmem:[%s4 + $0xb8] sm:$0xff]
  %v127 = vld [vmem:[%s4 + $0xc0] sm:$0xff]
  %v128 = vld [vmem:[%s4 + $0xc8] sm:$0xff]
  %v129 = vld [vmem:[%s4 + $0xd0] sm:$0xff]
  %v130 = vld [vmem:[%s4 + $0xd8] sm:$0xff]
  %v131 = vld [vmem:[%s4 + $0xe0] sm:$0xff]
  %v132 = vld [vmem:[%s4 + $0xe8] sm:$0xff]
  %v133 = vld [vmem:[%s4 + $0xf0] sm:$0xff]
  %v134 = vld [vmem:[%s4 + $0xf8] sm:$0xff]
  %135 = vmatprep.subr.mxu0 0.0
  %136 = vmatpush1.msra.mxu0 %v119
  %137 = vmatprep.subr.mxu0 0.0
  %138 = vmatpush1.msra.mxu0 %v120
  %139 = vmatprep.subr.mxu0 0.0
  %140 = vmatpush1.msra.mxu0 %v121
  %141 = vmatprep.subr.mxu0 0.0
  %142 = vmatpush1.msra.mxu0 %v122
  %143 = vmatprep.subr.mxu0 0.0
  %144 = vmatpush1.msra.mxu0 %v123
  %145 = vmatprep.subr.mxu0 0.0
  %146 = vmatpush1.msra.mxu0 %v124
  %147 = vmatprep.subr.mxu0 0.0
  %148 = vmatpush1.msra.mxu0 %v125
  %149 = vmatprep.subr.mxu0 0.0
  %150 = vmatpush1.msra.mxu0 %v126
  %151 = vmatprep.subr.mxu0 0.0
  %152 = vmatpush1.msra.mxu0 %v127
  %153 = vmatprep.subr.mxu0 0.0
  %154 = vmatpush1.msra.mxu0 %v128
  %155 = vmatprep.subr.mxu0 0.0
  %156 = vmatpush1.msra.mxu0 %v129
  %157 = vmatprep.subr.mxu0 0.0
  %158 = vmatpush1.msra.mxu0 %v130
  %159 = vmatprep.subr.mxu0 0.0
  %160 = vmatpush1.msra.mxu0 %v131
  %161 = vmatprep.subr.mxu0 0.0
  %162 = vmatpush1.msra.mxu0 %v132
  %163 = vmatprep.subr.mxu0 0.0
  %164 = vmatpush1.msra.mxu0 %v133
  %165 = vmatprep.subr.mxu0 0.0
  %166 = vmatpush1.msra.mxu0 %v134
  %167 = vmatprep.subr.mxu0 0.0
  %168 = vmatpush1.msra.mxu0 0.0
  %169 = vmatprep.subr.mxu0 0.0
  %170 = vmatpush1.msra.mxu0 0.0
  %171 = vmatprep.subr.mxu0 0.0
  %172 = vmatpush1.msra.mxu0 0.0
  %173 = vmatprep.subr.mxu0 0.0
  %174 = vmatpush1.msra.mxu0 0.0
  %175 = vmatprep.subr.mxu0 0.0
  %176 = vmatpush1.msra.mxu0 0.0
  %177 = vmatprep.subr.mxu0 0.0
  %178 = vmatpush1.msra.mxu0 0.0
  %179 = vmatprep.subr.mxu0 0.0
  %180 = vmatpush1.msra.mxu0 0.0
  %181 = vmatprep.subr.mxu0 0.0
  %182 = vmatpush1.msra.mxu0 0.0
  %183 = vmatprep.subr.mxu0 0.0
  %184 = vmatpush1.msra.mxu0 0.0
  %185 = vmatprep.subr.mxu0 0.0
  %186 = vmatpush1.msra.mxu0 0.0
  %187 = vmatprep.subr.mxu0 0.0
  %188 = vmatpush1.msra.mxu0 0.0
  %189 = vmatprep.subr.mxu0 0.0
  %190 = vmatpush1.msra.mxu0 0.0
  %191 = vmatprep.subr.mxu0 0.0
  %192 = vmatpush1.msra.mxu0 0.0
  %193 = vmatprep.subr.mxu0 0.0
  %194 = vmatpush1.msra.mxu0 0.0
  %195 = vmatprep.subr.mxu0 0.0
  %196 = vmatpush1.msra.mxu0 0.0
  %197 = vmatprep.subr.mxu0 0.0
  %198 = vmatpush1.msra.mxu0 0.0
  %199 = vmatprep.mubr.f32.mxu0 0.0
  %200 = vmatmul.mubr.f32.gmra.mrb[0].mxu0 %v101
  %v201 = vpop.f32.mrb[0].mxu0
  %v202 = vadd.f32 0.0, %v201
  %v203 = vpop.f32.mrb[0].mxu0
  %204 = vmatprep.mubr.f32.mxu0 0.0
  %205 = vmatmul.mubr.f32.gmra.mrb[0].mxu0 %v102
  %v206 = vpop.f32.mrb[0].mxu0
  %v207 = vadd.f32 0.0, %v206
  %v208 = vpop.f32.mrb[0].mxu0
  %209 = vdwg.mxu0
  %210 = vmatprep.subr.mxu0 0.0
  %211 = vmatpush1.msra.mxu0 %v103
  %212 = vmatprep.subr.mxu0 0.0
  %213 = vmatpush1.msra.mxu0 %v104
  %214 = vmatprep.subr.mxu0 0.0
  %215 = vmatpush1.msra.mxu0 %v105
  %216 = vmatprep.subr.mxu0 0.0
  %217 = vmatpush1.msra.mxu0 %v106
  %218 = vmatprep.subr.mxu0 0.0
  %219 = vmatpush1.msra.mxu0 %v107
  %220 = vmatprep.subr.mxu0 0.0
  %221 = vmatpush1.msra.mxu0 %v108
  %222 = vmatprep.subr.mxu0 0.0
  %223 = vmatpush1.msra.mxu0 %v109
  %224 = vmatprep.subr.mxu0 0.0
  %225 = vmatpush1.msra.mxu0 %v110
  %226 = vmatprep.subr.mxu0 0.0
  %227 = vmatpush1.msra.mxu0 %v111
  %228 = vmatprep.subr.mxu0 0.0
  %229 = vmatpush1.msra.mxu0 %v112
  %230 = vmatprep.subr.mxu0 0.0
  %231 = vmatpush1.msra.mxu0 %v113
  %232 = vmatprep.subr.mxu0 0.0
  %233 = vmatpush1.msra.mxu0 %v114
  %234 = vmatprep.subr.mxu0 0.0
  %235 = vmatpush1.msra.mxu0 %v115
  %236 = vmatprep.subr.mxu0 0.0
  %237 = vmatpush1.msra.mxu0 %v116
  %238 = vmatprep.subr.mxu0 0.0
  %239 = vmatpush1.msra.mxu0 %v117
  %240 = vmatprep.subr.mxu0 0.0
  %241 = vmatpush1.msra.mxu0 %v118
  %242 = vmatprep.subr.mxu0 0.0
  %243 = vmatpush1.msra.mxu0 0.0
  %244 = vmatprep.subr.mxu0 0.0
  %245 = vmatpush1.msra.mxu0 0.0
  %246 = vmatprep.subr.mxu0 0.0
  %247 = vmatpush1.msra.mxu0 0.0
  %248 = vmatprep.subr.mxu0 0.0
  %249 = vmatpush1.msra.mxu0 0.0
  %250 = vmatprep.subr.mxu0 0.0
  %251 = vmatpush1.msra.mxu0 0.0
  %252 = vmatprep.subr.mxu0 0.0
  %253 = vmatpush1.msra.mxu0 0.0
  %254 = vmatprep.subr.mxu0 0.0
  %255 = vmatpush1.msra.mxu0 0.0
  %256 = vmatprep.subr.mxu0 0.0
  %257 = vmatpush1.msra.mxu0 0.0
  %258 = vmatprep.subr.mxu0 0.0
  %259 = vmatpush1.msra.mxu0 0.0
  %260 = vmatprep.subr.mxu0 0.0
  %261 = vmatpush1.msra.mxu0 0.0
  %262 = vmatprep.subr.mxu0 0.0
  %263 = vmatpush1.msra.mxu0 0.0
  %264 = vmatprep.subr.mxu0 0.0
  %265 = vmatpush1.msra.mxu0 0.0
  %266 = vmatprep.subr.mxu0 0.0
  %267 = vmatpush1.msra.mxu0 0.0
  %268 = vmatprep.subr.mxu0 0.0
  %269 = vmatpush1.msra.mxu0 0.0
  %270 = vmatprep.subr.mxu0 0.0
  %271 = vmatpush1.msra.mxu0 0.0
  %272 = vmatprep.subr.mxu0 0.0
  %273 = vmatpush1.msra.mxu0 0.0
  %274 = vmatprep.mubr.f32.mxu0 0.0
  %275 = vmatmul.mubr.f32.gmra.mrb[0].mxu0 %v77
  %v276 = vpop.f32.mrb[0].mxu0
  %v277 = vadd.f32 %v202, %v276
  %v278 = vpop.f32.mrb[0].mxu0
  %279 = vmatprep.mubr.f32.mxu0 0.0
  %280 = vmatmul.mubr.f32.gmra.mrb[0].mxu0 %v78
  %v281 = vpop.f32.mrb[0].mxu0
  %v282 = vadd.f32 %v207, %v281
  %v283 = vpop.f32.mrb[0].mxu0
  %284 = vdwg.mxu0
  %v285 = vld [vmem:[%s5] sm:$0x1]
  %v287 = vlaneseq
  %v288 = vshrl.u32 %v287, 7
  %v289 = vsub.s32 0, %v288
  %v290 = vrot.slane %v285, %v289
  %v292 = vadd.f32 %v277, %v290
  %v293 = vadd.f32 %v282, %v290
  %v294 = vld [vmem:[%s6] sm:$0xff]
  %v295 = vld [vmem:[%s6 + $0x8] sm:$0xff]
  %v296 = vld [vmem:[%s6 + $0x10] sm:$0xff]
  %v297 = vld [vmem:[%s6 + $0x18] sm:$0xff]
  %v298 = vld [vmem:[%s6 + $0x20] sm:$0xff]
  %v299 = vld [vmem:[%s6 + $0x28] sm:$0xff]
  %v300 = vld [vmem:[%s6 + $0x30] sm:$0xff]
  %v301 = vld [vmem:[%s6 + $0x38] sm:$0xff]
  %v302 = vld [vmem:[%s6 + $0x40] sm:$0xff]
  %v303 = vld [vmem:[%s6 + $0x48] sm:$0xff]
  %v304 = vld [vmem:[%s6 + $0x50] sm:$0xff]
  %v305 = vld [vmem:[%s6 + $0x58] sm:$0xff]
  %v306 = vld [vmem:[%s6 + $0x60] sm:$0xff]
  %v307 = vld [vmem:[%s6 + $0x68] sm:$0xff]
  %v308 = vld [vmem:[%s6 + $0x70] sm:$0xff]
  %v309 = vld [vmem:[%s6 + $0x78] sm:$0xff]
  %v310 = vld [vmem:[%s7] sm:$0x1]
  %v312 = vlaneseq
  %v313 = vshrl.u32 %v312, 7
  %v314 = vsub.s32 0, %v313
  %v315 = vrot.slane %v310, %v314
  %317 = vmatprep.subr.mxu0 0.0
  %318 = vmatpush1.msra.mxu0 %v294
  %319 = vmatprep.subr.mxu0 0.0
  %320 = vmatpush1.msra.mxu0 %v295
  %321 = vmatprep.subr.mxu0 0.0
  %322 = vmatpush1.msra.mxu0 %v296
  %323 = vmatprep.subr.mxu0 0.0
  %324 = vmatpush1.msra.mxu0 %v297
  %325 = vmatprep.subr.mxu0 0.0
  %326 = vmatpush1.msra.mxu0 %v298
  %327 = vmatprep.subr.mxu0 0.0
  %328 = vmatpush1.msra.mxu0 %v299
  %329 = vmatprep.subr.mxu0 0.0
  %330 = vmatpush1.msra.mxu0 %v300
  %331 = vmatprep.subr.mxu0 0.0
  %332 = vmatpush1.msra.mxu0 %v301
  %333 = vmatprep.subr.mxu0 0.0
  %334 = vmatpush1.msra.mxu0 %v302
  %335 = vmatprep.subr.mxu0 0.0
  %336 = vmatpush1.msra.mxu0 %v303
  %337 = vmatprep.subr.mxu0 0.0
  %338 = vmatpush1.msra.mxu0 %v304
  %339 = vmatprep.subr.mxu0 0.0
  %340 = vmatpush1.msra.mxu0 %v305
  %341 = vmatprep.subr.mxu0 0.0
  %342 = vmatpush1.msra.mxu0 %v306
  %343 = vmatprep.subr.mxu0 0.0
  %344 = vmatpush1.msra.mxu0 %v307
  %345 = vmatprep.subr.mxu0 0.0
  %346 = vmatpush1.msra.mxu0 %v308
  %347 = vmatprep.subr.mxu0 0.0
  %348 = vmatpush1.msra.mxu0 %v309
  %349 = vmatprep.subr.mxu0 0.0
  %350 = vmatpush1.msra.mxu0 0.0
  %351 = vmatprep.subr.mxu0 0.0
  %352 = vmatpush1.msra.mxu0 0.0
  %353 = vmatprep.subr.mxu0 0.0
  %354 = vmatpush1.msra.mxu0 0.0
  %355 = vmatprep.subr.mxu0 0.0
  %356 = vmatpush1.msra.mxu0 0.0
  %357 = vmatprep.subr.mxu0 0.0
  %358 = vmatpush1.msra.mxu0 0.0
  %359 = vmatprep.subr.mxu0 0.0
  %360 = vmatpush1.msra.mxu0 0.0
  %361 = vmatprep.subr.mxu0 0.0
  %362 = vmatpush1.msra.mxu0 0.0
  %363 = vmatprep.subr.mxu0 0.0
  %364 = vmatpush1.msra.mxu0 0.0
  %365 = vmatprep.subr.mxu0 0.0
  %366 = vmatpush1.msra.mxu0 0.0
  %367 = vmatprep.subr.mxu0 0.0
  %368 = vmatpush1.msra.mxu0 0.0
  %369 = vmatprep.subr.mxu0 0.0
  %370 = vmatpush1.msra.mxu0 0.0
  %371 = vmatprep.subr.mxu0 0.0
  %372 = vmatpush1.msra.mxu0 0.0
  %373 = vmatprep.subr.mxu0 0.0
  %374 = vmatpush1.msra.mxu0 0.0
  %375 = vmatprep.subr.mxu0 0.0
  %376 = vmatpush1.msra.mxu0 0.0
  %377 = vmatprep.subr.mxu0 0.0
  %378 = vmatpush1.msra.mxu0 0.0
  %379 = vmatprep.subr.mxu0 0.0
  %380 = vmatpush1.msra.mxu0 0.0
  %381 = vmatprep.mubr.f32.mxu0 0.0
  %382 = vmatmul.mubr.f32.gmra.mrb[0].mxu0 %v292
  %v383 = vpop.f32.mrb[0].mxu0
  %v384 = vadd.f32 %v315, %v383
  %v385 = vpop.f32.mrb[0].mxu0
  %386 = vmatprep.mubr.f32.mxu0 0.0
  %387 = vmatmul.mubr.f32.gmra.mrb[0].mxu0 %v293
  %v388 = vpop.f32.mrb[0].mxu0
  %v389 = vadd.f32 %v315, %v388
  %v390 = vpop.f32.mrb[0].mxu0
  %391 = vdwg.mxu0
  %v392 = vmax.f32 %v384, 0.0
  %v393 = vmax.f32 %v389, 0.0
  %v394 = vld [vmem:[%s8] sm:$0x1]
  %v396 = vlaneseq
  %v397 = vshrl.u32 %v396, 7
  %v398 = vsub.s32 0, %v397
  %v399 = vrot.slane %v394, %v398
  %v401 = vmul.f32 %v392, %v399
  %v402 = vmul.f32 %v393, %v399
  %vm403 = vcmask 523264
  %v404 = vsel %vm403, %v401, 0.0
  %405 = vadd.xlane.f32.xlu0 %v404
  %v406 = vpop.xlane.xlu0 %405
  %v407 = vsel %vm403, %v402, 0.0
  %408 = vadd.xlane.f32.xlu0 %v407
  %v409 = vpop.xlane.xlu0 %408
  %v410 = vld [vmem:[#allocation3] sm:$0x1]
  %v412 = vlaneseq
  %v413 = vshrl.u32 %v412, 7
  %v414 = vsub.s32 0, %v413
  %v415 = vrot.slane %v410, %v414
  %v417 = vadd.f32 %v406, %v415
  %v418 = vadd.f32 %v409, %v415
  %v419 = vsub.f32 0.0, %v417
  %v420 = vsub.f32 0.0, %v418
  %v421 = vmul.f32 %v419, 1.442695
  %v422 = vpow.pop %v421
  %v423 = vmul.f32 %v420, 1.442695
  %v424 = vpow.pop %v423
  %v425 = vadd.f32 %v422, 1.0
  %v426 = vadd.f32 %v424, 1.0
  %v427 = vrcp.pop %v425
  %v428 = vmul.f32 1.0, %v427
  %v429 = vrcp.pop %v426
  %v430 = vmul.f32 1.0, %v429
  %432 = vset.pattern.permute.xlu0 0
  %433 = vperm.xlu0 %432, %v428
  %v434 = vpop.permute.xlu0 %433
  %437 = vset.pattern.permute.xlu0 0
  %438 = vperm.xlu0 %437, %v430
  %v439 = vpop.permute.xlu0 %438
  %v441 = vmul.f32 %v292, %v434
  %v442 = vmul.f32 %v293, %v439
  %v443 = vld [vmem:[%s10] sm:$0xff]
  %v444 = vld [vmem:[%s10 + $0x8] sm:$0xff]
  %v445 = vld [vmem:[%s10 + $0x10] sm:$0xff]
  %v446 = vld [vmem:[%s10 + $0x18] sm:$0xff]
  %v447 = vld [vmem:[%s10 + $0x20] sm:$0xff]
  %v448 = vld [vmem:[%s10 + $0x28] sm:$0xff]
  %v449 = vld [vmem:[%s10 + $0x30] sm:$0xff]
  %v450 = vld [vmem:[%s10 + $0x38] sm:$0xff]
  %v451 = vld [vmem:[%s10 + $0x40] sm:$0xff]
  %v452 = vld [vmem:[%s10 + $0x48] sm:$0xff]
  %v453 = vld [vmem:[%s10 + $0x50] sm:$0xff]
  %v454 = vld [vmem:[%s10 + $0x58] sm:$0xff]
  %v455 = vld [vmem:[%s10 + $0x60] sm:$0xff]
  %v456 = vld [vmem:[%s10 + $0x68] sm:$0xff]
  %v457 = vld [vmem:[%s10 + $0x70] sm:$0xff]
  %v458 = vld [vmem:[%s10 + $0x78] sm:$0xff]
  %459 = vmatprep.subr.mxu0 0.0
  %460 = vmatpush1.msra.mxu0 %v443
  %461 = vmatprep.subr.mxu0 0.0
  %462 = vmatpush1.msra.mxu0 %v444
  %463 = vmatprep.subr.mxu0 0.0
  %464 = vmatpush1.msra.mxu0 %v445
  %465 = vmatprep.subr.mxu0 0.0
  %466 = vmatpush1.msra.mxu0 %v446
  %467 = vmatprep.subr.mxu0 0.0
  %468 = vmatpush1.msra.mxu0 %v447
  %469 = vmatprep.subr.mxu0 0.0
  %470 = vmatpush1.msra.mxu0 %v448
  %471 = vmatprep.subr.mxu0 0.0
  %472 = vmatpush1.msra.mxu0 %v449
  %473 = vmatprep.subr.mxu0 0.0
  %474 = vmatpush1.msra.mxu0 %v450
  %475 = vmatprep.subr.mxu0 0.0
  %476 = vmatpush1.msra.mxu0 %v451
  %477 = vmatprep.subr.mxu0 0.0
  %478 = vmatpush1.msra.mxu0 %v452
  %479 = vmatprep.subr.mxu0 0.0
  %480 = vmatpush1.msra.mxu0 %v453
  %481 = vmatprep.subr.mxu0 0.0
  %482 = vmatpush1.msra.mxu0 %v454
  %483 = vmatprep.subr.mxu0 0.0
  %484 = vmatpush1.msra.mxu0 %v455
  %485 = vmatprep.subr.mxu0 0.0
  %486 = vmatpush1.msra.mxu0 %v456
  %487 = vmatprep.subr.mxu0 0.0
  %488 = vmatpush1.msra.mxu0 %v457
  %489 = vmatprep.subr.mxu0 0.0
  %490 = vmatpush1.msra.mxu0 %v458
  %491 = vmatprep.subr.mxu0 0.0
  %492 = vmatpush1.msra.mxu0 0.0
  %493 = vmatprep.subr.mxu0 0.0
  %494 = vmatpush1.msra.mxu0 0.0
  %495 = vmatprep.subr.mxu0 0.0
  %496 = vmatpush1.msra.mxu0 0.0
  %497 = vmatprep.subr.mxu0 0.0
  %498 = vmatpush1.msra.mxu0 0.0
  %499 = vmatprep.subr.mxu0 0.0
  %500 = vmatpush1.msra.mxu0 0.0
  %501 = vmatprep.subr.mxu0 0.0
  %502 = vmatpush1.msra.mxu0 0.0
  %503 = vmatprep.subr.mxu0 0.0
  %504 = vmatpush1.msra.mxu0 0.0
  %505 = vmatprep.subr.mxu0 0.0
  %506 = vmatpush1.msra.mxu0 0.0
  %507 = vmatprep.subr.mxu0 0.0
  %508 = vmatpush1.msra.mxu0 0.0
  %509 = vmatprep.subr.mxu0 0.0
  %510 = vmatpush1.msra.mxu0 0.0
  %511 = vmatprep.subr.mxu0 0.0
  %512 = vmatpush1.msra.mxu0 0.0
  %513 = vmatprep.subr.mxu0 0.0
  %514 = vmatpush1.msra.mxu0 0.0
  %515 = vmatprep.subr.mxu0 0.0
  %516 = vmatpush1.msra.mxu0 0.0
  %517 = vmatprep.subr.mxu0 0.0
  %518 = vmatpush1.msra.mxu0 0.0
  %519 = vmatprep.subr.mxu0 0.0
  %520 = vmatpush1.msra.mxu0 0.0
  %521 = vmatprep.subr.mxu0 0.0
  %522 = vmatpush1.msra.mxu0 0.0
  %523 = vmatprep.mubr.f32.mxu0 0.0
  %524 = vmatmul.mubr.f32.gmra.mrb[0].mxu0 %v441
  %v525 = vpop.f32.mrb[0].mxu0
  %v526 = vadd.f32 0.0, %v525
  %v527 = vpop.f32.mrb[0].mxu0
  %528 = vmatprep.mubr.f32.mxu0 0.0
  %529 = vmatmul.mubr.f32.gmra.mrb[0].mxu0 %v442
  %v530 = vpop.f32.mrb[0].mxu0
  %v531 = vadd.f32 0.0, %v530
  %v532 = vpop.f32.mrb[0].mxu0
  %533 = vdwg.mxu0
  %v534 = vmax.f32 %v526, 0.0
  %v535 = vmax.f32 %v531, 0.0
  %v536 = vld [vmem:[%s11] sm:$0xff]
  %vm537 = vcmask 64512
  %v539 = vsel %vm537, %v534, 0
  %v542 = vsel %vm537, %v535, 0
  %544 = vmatprep.subr.mxu0 0.0
  %545 = vmatpush1.msra.mxu0 %v536
  %546 = vmatprep.subr.mxu0 0.0
  %547 = vmatpush1.msra.mxu0 0.0
  %548 = vmatprep.subr.mxu0 0.0
  %549 = vmatpush1.msra.mxu0 0.0
  %550 = vmatprep.subr.mxu0 0.0
  %551 = vmatpush1.msra.mxu0 0.0
  %552 = vmatprep.subr.mxu0 0.0
  %553 = vmatpush1.msra.mxu0 0.0
  %554 = vmatprep.subr.mxu0 0.0
  %555 = vmatpush1.msra.mxu0 0.0
  %556 = vmatprep.subr.mxu0 0.0
  %557 = vmatpush1.msra.mxu0 0.0
  %558 = vmatprep.subr.mxu0 0.0
  %559 = vmatpush1.msra.mxu0 0.0
  %560 = vmatprep.subr.mxu0 0.0
  %561 = vmatpush1.msra.mxu0 0.0
  %562 = vmatprep.subr.mxu0 0.0
  %563 = vmatpush1.msra.mxu0 0.0
  %564 = vmatprep.subr.mxu0 0.0
  %565 = vmatpush1.msra.mxu0 0.0
  %566 = vmatprep.subr.mxu0 0.0
  %567 = vmatpush1.msra.mxu0 0.0
  %568 = vmatprep.subr.mxu0 0.0
  %569 = vmatpush1.msra.mxu0 0.0
  %570 = vmatprep.subr.mxu0 0.0
  %571 = vmatpush1.msra.mxu0 0.0
  %572 = vmatprep.subr.mxu0 0.0
  %573 = vmatpush1.msra.mxu0 0.0
  %574 = vmatprep.subr.mxu0 0.0
  %575 = vmatpush1.msra.mxu0 0.0
  %576 = vmatprep.subr.mxu0 0.0
  %577 = vmatpush1.msra.mxu0 0.0
  %578 = vmatprep.subr.mxu0 0.0
  %579 = vmatpush1.msra.mxu0 0.0
  %580 = vmatprep.subr.mxu0 0.0
  %581 = vmatpush1.msra.mxu0 0.0
  %582 = vmatprep.subr.mxu0 0.0
  %583 = vmatpush1.msra.mxu0 0.0
  %584 = vmatprep.subr.mxu0 0.0
  %585 = vmatpush1.msra.mxu0 0.0
  %586 = vmatprep.subr.mxu0 0.0
  %587 = vmatpush1.msra.mxu0 0.0
  %588 = vmatprep.subr.mxu0 0.0
  %589 = vmatpush1.msra.mxu0 0.0
  %590 = vmatprep.subr.mxu0 0.0
  %591 = vmatpush1.msra.mxu0 0.0
  %592 = vmatprep.subr.mxu0 0.0
  %593 = vmatpush1.msra.mxu0 0.0
  %594 = vmatprep.subr.mxu0 0.0
  %595 = vmatpush1.msra.mxu0 0.0
  %596 = vmatprep.subr.mxu0 0.0
  %597 = vmatpush1.msra.mxu0 0.0
  %598 = vmatprep.subr.mxu0 0.0
  %599 = vmatpush1.msra.mxu0 0.0
  %600 = vmatprep.subr.mxu0 0.0
  %601 = vmatpush1.msra.mxu0 0.0
  %602 = vmatprep.subr.mxu0 0.0
  %603 = vmatpush1.msra.mxu0 0.0
  %604 = vmatprep.subr.mxu0 0.0
  %605 = vmatpush1.msra.mxu0 0.0
  %606 = vmatprep.subr.mxu0 0.0
  %607 = vmatpush1.msra.mxu0 0.0
  %608 = vmatprep.mubr.f32.mxu0 0.0
  %609 = vmatmul.mubr.f32.gmra.mrb[0].mxu0 %v539
  %v610 = vpop.f32.mrb[0].mxu0
  %v611 = vadd.f32 0.0, %v610
  %v612 = vpop.f32.mrb[0].mxu0
  %613 = vmatprep.mubr.f32.mxu0 0.0
  %614 = vmatmul.mubr.f32.gmra.mrb[0].mxu0 %v542
  %v615 = vpop.f32.mrb[0].mxu0
  %v616 = vadd.f32 0.0, %v615
  %v617 = vpop.f32.mrb[0].mxu0
  %618 = vdwg.mxu0
  %v619 = vsub.f32 0.0, %v611
  %v620 = vsub.f32 0.0, %v616
  %v621 = vmul.f32 %v619, 1.442695
  %v622 = vpow.pop %v621
  %v623 = vmul.f32 %v620, 1.442695
  %v624 = vpow.pop %v623
  %v625 = vadd.f32 %v622, 1.0
  %v626 = vadd.f32 %v624, 1.0
  %v627 = vrcp.pop %v625
  %v628 = vmul.f32 1.0, %v627
  %v629 = vrcp.pop %v626
  %v630 = vmul.f32 1.0, %v629
  %v631 = vld [vmem:[%s0] sm:$0xff]
  %v632 = vld [vmem:[%s0 + $0x8] sm:$0xff]
  %v633 = vmul.f32 %v441, %v628
  %v634 = vmul.f32 %v442, %v630
  %v635 = vadd.f32 %v631, %v633
  %v636 = vadd.f32 %v632, %v634
  %637 = vst [vmem:[%s12] sm:$0xff] %v635
  %638 = vst [vmem:[%s12 + $0x8] sm:$0xff] %v636
  // Predicated region
  $region50: #{schnet_forward.8} parent=0 // pred_check
    _
  $region51: #{schnet_forward.8} parent=0 // pred_check_branch
    %640 = sbr.rel (0) target = $region53
  $region52: #{schnet_forward.8} parent=0 // pred_region
    _
  $region53: #{schnet_forward.8} parent=0 // pred_fallthru
    _
  // Predicated region
  $region54: #{schnet_forward.8} parent=0 // pred_check
    _
  $region55: #{schnet_forward.8} parent=0 // pred_check_branch
    %642 = sbr.rel (0) target = $region57
  $region56: #{schnet_forward.8} parent=0 // pred_region
    _
  $region57: #{schnet_forward.8} parent=0 // pred_fallthru
    _

// kernel: schnet_forward.11
$region0: #{schnet_forward.11}
  #allocation0 [shape = 'u32[]', space=smem, size = 0x4, offset = 0x4, fixed_abs, tag = 'smem constant byte address 0x4 - core index']
  #allocation1 [shape = 'u32[144,128]{1,0:T(1,128)}', space=vmem, size = 0x12000, scoped, tag = 'internal scratch']
  #allocation2 [shape = 'f32[1,1]{1,0:T(1,128)S(1)}', space=vmem, size = 0x200, scoped, tag = 'scoped memory for schnet_forward.11']
  #allocation3 [shape = 'f32[1,1]{1,0:T(1,128)S(1)}', space=vmem, size = 0x200, scoped, tag = 'scoped memory for schnet_forward.11']
  %s0 = inlined_call_operand.vmem [shape: f32[16,128], index: 0, kind: input, shape index: {}]
  %s1 = inlined_call_operand.vmem [shape: f32[16,128], index: 1, kind: input, shape index: {}]
  %s2 = inlined_call_operand.vmem [shape: f32[16,128], index: 2, kind: input, shape index: {}]
  %s3 = inlined_call_operand.<no memory space> [shape: f32[1,1], index: 3, kind: input, shape index: {}]
  %s4 = inlined_call_operand.vmem [shape: f32[256,128], index: 4, kind: input, shape index: {}]
  %s5 = inlined_call_operand.vmem [shape: f32[1,128], index: 5, kind: input, shape index: {}]
  %s6 = inlined_call_operand.vmem [shape: f32[128,64], index: 6, kind: input, shape index: {}]
  %s7 = inlined_call_operand.vmem [shape: f32[1,64], index: 7, kind: input, shape index: {}]
  %s8 = inlined_call_operand.vmem [shape: f32[1,64], index: 8, kind: input, shape index: {}]
  %s9 = inlined_call_operand.<no memory space> [shape: f32[1,1], index: 9, kind: input, shape index: {}]
  %s10 = inlined_call_operand.vmem [shape: f32[128,8], index: 10, kind: input, shape index: {}]
  %s11 = inlined_call_operand.vmem [shape: f32[8,128], index: 11, kind: input, shape index: {}]
  %s12 = inlined_call_operand.hbm [shape: f32[16,128], index: 12, kind: output, shape index: {}]
  %s13 = sld [smem:[#allocation0]]
  $region58: #{schnet_forward.11} parent=0
    _
  %s15 = ssub.s32 1, %s13
  %s16 = scalar_select 0, %s15, %s13
  %v17 = vstv %s3
  %18 = vst [vmem:[#allocation2] sm:$0x1] %v17
  %v19 = vstv %s9
  %20 = vst [vmem:[#allocation3] sm:$0x1] %v19
  $region1: #{schnet_forward.11} parent=0
    #allocation4 [shape = 'u8[8192]{0}', space=vmem, size = 0x2000, scoped, tag = 'output window, operand 0, single buffered']
    #allocation5 [shape = 's32[1]{0}', space=sflag, size = 0x4, scoped, tag = 'scoped memory for schnet_forward.11']
    %21 = vsyncpa [#allocation5], 0
    // Predicated region
    $region2: #{schnet_forward.11} parent=1 // pred_check
      _
    $region3: #{schnet_forward.11} parent=1 // pred_check_branch
      %23 = sbr.rel (0) target = $region5
    $region4: #{schnet_forward.11} parent=1 // pred_region
      _
    $region5: #{schnet_forward.11} parent=1 // pred_fallthru
      _
    // Predicated region
    $region6: #{schnet_forward.11} parent=1 // pred_check
      _
    $region7: #{schnet_forward.11} parent=1 // pred_check_branch
      %25 = sbr.rel (0) target = $region9
    $region8: #{schnet_forward.11} parent=1 // pred_region
      _
    $region9: #{schnet_forward.11} parent=1 // pred_fallthru
      _
    // Predicated region
    $region10: #{schnet_forward.11} parent=1 // pred_check
      _
    $region11: #{schnet_forward.11} parent=1 // pred_check_branch
      %27 = sbr.rel (0) target = $region13
    $region12: #{schnet_forward.11} parent=1 // pred_region
      _
    $region13: #{schnet_forward.11} parent=1 // pred_fallthru
      _
    // Predicated region
    $region14: #{schnet_forward.11} parent=1 // pred_check
      _
    $region15: #{schnet_forward.11} parent=1 // pred_check_branch
      %29 = sbr.rel (0) target = $region17
    $region16: #{schnet_forward.11} parent=1 // pred_region
      _
    $region17: #{schnet_forward.11} parent=1 // pred_fallthru
      _
    // Predicated region
    $region18: #{schnet_forward.11} parent=1 // pred_check
      _
    $region19: #{schnet_forward.11} parent=1 // pred_check_branch
      %31 = sbr.rel (0) target = $region21
    $region20: #{schnet_forward.11} parent=1 // pred_region
      _
    $region21: #{schnet_forward.11} parent=1 // pred_fallthru
      _
    // Predicated region
    $region22: #{schnet_forward.11} parent=1 // pred_check
      _
    $region23: #{schnet_forward.11} parent=1 // pred_check_branch
      %33 = sbr.rel (0) target = $region25
    $region24: #{schnet_forward.11} parent=1 // pred_region
      _
    $region25: #{schnet_forward.11} parent=1 // pred_fallthru
      _
    // Predicated region
    $region26: #{schnet_forward.11} parent=1 // pred_check
      _
    $region27: #{schnet_forward.11} parent=1 // pred_check_branch
      %35 = sbr.rel (0) target = $region29
    $region28: #{schnet_forward.11} parent=1 // pred_region
      _
    $region29: #{schnet_forward.11} parent=1 // pred_fallthru
      _
    // Predicated region
    $region30: #{schnet_forward.11} parent=1 // pred_check
      _
    $region31: #{schnet_forward.11} parent=1 // pred_check_branch
      %37 = sbr.rel (0) target = $region33
    $region32: #{schnet_forward.11} parent=1 // pred_region
      _
    $region33: #{schnet_forward.11} parent=1 // pred_fallthru
      _
    // Predicated region
    $region34: #{schnet_forward.11} parent=1 // pred_check
      _
    $region35: #{schnet_forward.11} parent=1 // pred_check_branch
      %39 = sbr.rel (0) target = $region37
    $region36: #{schnet_forward.11} parent=1 // pred_region
      _
    $region37: #{schnet_forward.11} parent=1 // pred_fallthru
      _
    // Predicated region
    $region38: #{schnet_forward.11} parent=1 // pred_check
      _
    $region39: #{schnet_forward.11} parent=1 // pred_check_branch
      %41 = sbr.rel (0) target = $region41
    $region40: #{schnet_forward.11} parent=1 // pred_region
      _
    $region41: #{schnet_forward.11} parent=1 // pred_fallthru
      _
    // Predicated region
    $region42: #{schnet_forward.11} parent=1 // pred_check
      _
    $region43: #{schnet_forward.11} parent=1 // pred_check_branch
      %43 = sbr.rel (0) target = $region45
    $region44: #{schnet_forward.11} parent=1 // pred_region
      _
    $region45: #{schnet_forward.11} parent=1 // pred_fallthru
      _
    // Predicated region
    $region46: #{schnet_forward.11} parent=1 // pred_check
      _
    $region47: #{schnet_forward.11} parent=1 // pred_check_branch
      %45 = sbr.rel (0) target = $region49
    $region48: #{schnet_forward.11} parent=1 // pred_region
      _
    $region49: #{schnet_forward.11} parent=1 // pred_fallthru
      _
    %v46 = vld [vmem:[#allocation2] sm:$0x1]
    %v47 = vld [vmem:[%s1] sm:$0xff]
    %v48 = vld [vmem:[%s1 + $0x8] sm:$0xff]
    %v50 = vlaneseq
    %v51 = vshrl.u32 %v50, 7
    %v52 = vsub.s32 0, %v51
    %v53 = vrot.slane %v46, %v52
    %54 = vset.pattern.permute.xlu0 0
    %55 = vperm.xlu0 %54, %v53
    %v56 = vpop.permute.xlu0 %55
    %v58 = vmul.f32 %v56, %v47
    %v59 = vmul.f32 %v56, %v48
    %v60 = vmax.f32 %v58, 0.0
    %v61 = vmax.f32 %v59, 0.0
    %v62 = vand.u32 2147483647, %v58
    %v63 = vand.u32 2147483647, %v59
    %v64 = vsub.f32 0.0, %v62
    %v65 = vsub.f32 0.0, %v63
    %v66 = vmul.f32 %v64, 1.442695
    %v67 = vpow.pop %v66
    %v68 = vmul.f32 %v65, 1.442695
    %v69 = vpow.pop %v68
    %v70 = vadd.f32 %v67, 1.0
    %v71 = vadd.f32 %v69, 1.0
    %v72 = vlog2.pop %v70
    %v73 = vmul.f32 %v72, 0.6931472
    %v74 = vlog2.pop %v71
    %v75 = vmul.f32 %v74, 0.6931472
    %v76 = vadd.f32 %v60, %v73
    %v77 = vadd.f32 %v61, %v75
    %v78 = vsub.f32 %v76, 0.6931472
    %v79 = vsub.f32 %v77, 0.6931472
    %v80 = vld [vmem:[%s2] sm:$0xff]
    %v81 = vld [vmem:[%s2 + $0x8] sm:$0xff]
    %v82 = vmul.f32 %v56, %v80
    %v83 = vmul.f32 %v56, %v81
    %v84 = vmax.f32 %v82, 0.0
    %v85 = vmax.f32 %v83, 0.0
    %v86 = vand.u32 2147483647, %v82
    %v87 = vand.u32 2147483647, %v83
    %v88 = vsub.f32 0.0, %v86
    %v89 = vsub.f32 0.0, %v87
    %v90 = vmul.f32 %v88, 1.442695
    %v91 = vpow.pop %v90
    %v92 = vmul.f32 %v89, 1.442695
    %v93 = vpow.pop %v92
    %v94 = vadd.f32 %v91, 1.0
    %v95 = vadd.f32 %v93, 1.0
    %v96 = vlog2.pop %v94
    %v97 = vmul.f32 %v96, 0.6931472
    %v98 = vlog2.pop %v95
    %v99 = vmul.f32 %v98, 0.6931472
    %v100 = vadd.f32 %v84, %v97
    %v101 = vadd.f32 %v85, %v99
    %v102 = vsub.f32 %v100, 0.6931472
    %v103 = vsub.f32 %v101, 0.6931472
    %v104 = vld [vmem:[%s4] sm:$0xff]
    %v105 = vld [vmem:[%s4 + $0x8] sm:$0xff]
    %v106 = vld [vmem:[%s4 + $0x10] sm:$0xff]
    %v107 = vld [vmem:[%s4 + $0x18] sm:$0xff]
    %v108 = vld [vmem:[%s4 + $0x20] sm:$0xff]
    %v109 = vld [vmem:[%s4 + $0x28] sm:$0xff]
    %v110 = vld [vmem:[%s4 + $0x30] sm:$0xff]
    %v111 = vld [vmem:[%s4 + $0x38] sm:$0xff]
    %v112 = vld [vmem:[%s4 + $0x40] sm:$0xff]
    %v113 = vld [vmem:[%s4 + $0x48] sm:$0xff]
    %v114 = vld [vmem:[%s4 + $0x50] sm:$0xff]
    %v115 = vld [vmem:[%s4 + $0x58] sm:$0xff]
    %v116 = vld [vmem:[%s4 + $0x60] sm:$0xff]
    %v117 = vld [vmem:[%s4 + $0x68] sm:$0xff]
    %v118 = vld [vmem:[%s4 + $0x70] sm:$0xff]
    %v119 = vld [vmem:[%s4 + $0x78] sm:$0xff]
    %v120 = vld [vmem:[%s4 + $0x80] sm:$0xff]
    %v121 = vld [vmem:[%s4 + $0x88] sm:$0xff]
    %v122 = vld [vmem:[%s4 + $0x90] sm:$0xff]
    %v123 = vld [vmem:[%s4 + $0x98] sm:$0xff]
    %v124 = vld [vmem:[%s4 + $0xa0] sm:$0xff]
    %v125 = vld [vmem:[%s4 + $0xa8] sm:$0xff]
    %v126 = vld [vmem:[%s4 + $0xb0] sm:$0xff]
    %v127 = vld [vmem:[%s4 + $0xb8] sm:$0xff]
    %v128 = vld [vmem:[%s4 + $0xc0] sm:$0xff]
    %v129 = vld [vmem:[%s4 + $0xc8] sm:$0xff]
    %v130 = vld [vmem:[%s4 + $0xd0] sm:$0xff]
    %v131 = vld [vmem:[%s4 + $0xd8] sm:$0xff]
    %v132 = vld [vmem:[%s4 + $0xe0] sm:$0xff]
    %v133 = vld [vmem:[%s4 + $0xe8] sm:$0xff]
    %v134 = vld [vmem:[%s4 + $0xf0] sm:$0xff]
    %v135 = vld [vmem:[%s4 + $0xf8] sm:$0xff]
    %136 = vmatprep.subr.mxu0 0.0
    %137 = vmatpush1.msra.mxu0 %v120
    %138 = vmatprep.subr.mxu0 0.0
    %139 = vmatpush1.msra.mxu0 %v121
    %140 = vmatprep.subr.mxu0 0.0
    %141 = vmatpush1.msra.mxu0 %v122
    %142 = vmatprep.subr.mxu0 0.0
    %143 = vmatpush1.msra.mxu0 %v123
    %144 = vmatprep.subr.mxu0 0.0
    %145 = vmatpush1.msra.mxu0 %v124
    %146 = vmatprep.subr.mxu0 0.0
    %147 = vmatpush1.msra.mxu0 %v125
    %148 = vmatprep.subr.mxu0 0.0
    %149 = vmatpush1.msra.mxu0 %v126
    %150 = vmatprep.subr.mxu0 0.0
    %151 = vmatpush1.msra.mxu0 %v127
    %152 = vmatprep.subr.mxu0 0.0
    %153 = vmatpush1.msra.mxu0 %v128
    %154 = vmatprep.subr.mxu0 0.0
    %155 = vmatpush1.msra.mxu0 %v129
    %156 = vmatprep.subr.mxu0 0.0
    %157 = vmatpush1.msra.mxu0 %v130
    %158 = vmatprep.subr.mxu0 0.0
    %159 = vmatpush1.msra.mxu0 %v131
    %160 = vmatprep.subr.mxu0 0.0
    %161 = vmatpush1.msra.mxu0 %v132
    %162 = vmatprep.subr.mxu0 0.0
    %163 = vmatpush1.msra.mxu0 %v133
    %164 = vmatprep.subr.mxu0 0.0
    %165 = vmatpush1.msra.mxu0 %v134
    %166 = vmatprep.subr.mxu0 0.0
    %167 = vmatpush1.msra.mxu0 %v135
    %168 = vmatprep.subr.mxu0 0.0
    %169 = vmatpush1.msra.mxu0 0.0
    %170 = vmatprep.subr.mxu0 0.0
    %171 = vmatpush1.msra.mxu0 0.0
    %172 = vmatprep.subr.mxu0 0.0
    %173 = vmatpush1.msra.mxu0 0.0
    %174 = vmatprep.subr.mxu0 0.0
    %175 = vmatpush1.msra.mxu0 0.0
    %176 = vmatprep.subr.mxu0 0.0
    %177 = vmatpush1.msra.mxu0 0.0
    %178 = vmatprep.subr.mxu0 0.0
    %179 = vmatpush1.msra.mxu0 0.0
    %180 = vmatprep.subr.mxu0 0.0
    %181 = vmatpush1.msra.mxu0 0.0
    %182 = vmatprep.subr.mxu0 0.0
    %183 = vmatpush1.msra.mxu0 0.0
    %184 = vmatprep.subr.mxu0 0.0
    %185 = vmatpush1.msra.mxu0 0.0
    %186 = vmatprep.subr.mxu0 0.0
    %187 = vmatpush1.msra.mxu0 0.0
    %188 = vmatprep.subr.mxu0 0.0
    %189 = vmatpush1.msra.mxu0 0.0
    %190 = vmatprep.subr.mxu0 0.0
    %191 = vmatpush1.msra.mxu0 0.0
    %192 = vmatprep.subr.mxu0 0.0
    %193 = vmatpush1.msra.mxu0 0.0
    %194 = vmatprep.subr.mxu0 0.0
    %195 = vmatpush1.msra.mxu0 0.0
    %196 = vmatprep.subr.mxu0 0.0
    %197 = vmatpush1.msra.mxu0 0.0
    %198 = vmatprep.subr.mxu0 0.0
    %199 = vmatpush1.msra.mxu0 0.0
    %200 = vmatprep.mubr.f32.mxu0 0.0
    %201 = vmatmul.mubr.f32.gmra.mrb[0].mxu0 %v102
    %v202 = vpop.f32.mrb[0].mxu0
    %v203 = vadd.f32 0.0, %v202
    %v204 = vpop.f32.mrb[0].mxu0
    %205 = vmatprep.mubr.f32.mxu0 0.0
    %206 = vmatmul.mubr.f32.gmra.mrb[0].mxu0 %v103
    %v207 = vpop.f32.mrb[0].mxu0
    %v208 = vadd.f32 0.0, %v207
    %v209 = vpop.f32.mrb[0].mxu0
    %210 = vdwg.mxu0
    %211 = vmatprep.subr.mxu0 0.0
    %212 = vmatpush1.msra.mxu0 %v104
    %213 = vmatprep.subr.mxu0 0.0
    %214 = vmatpush1.msra.mxu0 %v105
    %215 = vmatprep.subr.mxu0 0.0
    %216 = vmatpush1.msra.mxu0 %v106
    %217 = vmatprep.subr.mxu0 0.0
    %218 = vmatpush1.msra.mxu0 %v107
    %219 = vmatprep.subr.mxu0 0.0
    %220 = vmatpush1.msra.mxu0 %v108
    %221 = vmatprep.subr.mxu0 0.0
    %222 = vmatpush1.msra.mxu0 %v109
    %223 = vmatprep.subr.mxu0 0.0
    %224 = vmatpush1.msra.mxu0 %v110
    %225 = vmatprep.subr.mxu0 0.0
    %226 = vmatpush1.msra.mxu0 %v111
    %227 = vmatprep.subr.mxu0 0.0
    %228 = vmatpush1.msra.mxu0 %v112
    %229 = vmatprep.subr.mxu0 0.0
    %230 = vmatpush1.msra.mxu0 %v113
    %231 = vmatprep.subr.mxu0 0.0
    %232 = vmatpush1.msra.mxu0 %v114
    %233 = vmatprep.subr.mxu0 0.0
    %234 = vmatpush1.msra.mxu0 %v115
    %235 = vmatprep.subr.mxu0 0.0
    %236 = vmatpush1.msra.mxu0 %v116
    %237 = vmatprep.subr.mxu0 0.0
    %238 = vmatpush1.msra.mxu0 %v117
    %239 = vmatprep.subr.mxu0 0.0
    %240 = vmatpush1.msra.mxu0 %v118
    %241 = vmatprep.subr.mxu0 0.0
    %242 = vmatpush1.msra.mxu0 %v119
    %243 = vmatprep.subr.mxu0 0.0
    %244 = vmatpush1.msra.mxu0 0.0
    %245 = vmatprep.subr.mxu0 0.0
    %246 = vmatpush1.msra.mxu0 0.0
    %247 = vmatprep.subr.mxu0 0.0
    %248 = vmatpush1.msra.mxu0 0.0
    %249 = vmatprep.subr.mxu0 0.0
    %250 = vmatpush1.msra.mxu0 0.0
    %251 = vmatprep.subr.mxu0 0.0
    %252 = vmatpush1.msra.mxu0 0.0
    %253 = vmatprep.subr.mxu0 0.0
    %254 = vmatpush1.msra.mxu0 0.0
    %255 = vmatprep.subr.mxu0 0.0
    %256 = vmatpush1.msra.mxu0 0.0
    %257 = vmatprep.subr.mxu0 0.0
    %258 = vmatpush1.msra.mxu0 0.0
    %259 = vmatprep.subr.mxu0 0.0
    %260 = vmatpush1.msra.mxu0 0.0
    %261 = vmatprep.subr.mxu0 0.0
    %262 = vmatpush1.msra.mxu0 0.0
    %263 = vmatprep.subr.mxu0 0.0
    %264 = vmatpush1.msra.mxu0 0.0
    %265 = vmatprep.subr.mxu0 0.0
    %266 = vmatpush1.msra.mxu0 0.0
    %267 = vmatprep.subr.mxu0 0.0
    %268 = vmatpush1.msra.mxu0 0.0
    %269 = vmatprep.subr.mxu0 0.0
    %270 = vmatpush1.msra.mxu0 0.0
    %271 = vmatprep.subr.mxu0 0.0
    %272 = vmatpush1.msra.mxu0 0.0
    %273 = vmatprep.subr.mxu0 0.0
    %274 = vmatpush1.msra.mxu0 0.0
    %275 = vmatprep.mubr.f32.mxu0 0.0
    %276 = vmatmul.mubr.f32.gmra.mrb[0].mxu0 %v78
    %v277 = vpop.f32.mrb[0].mxu0
    %v278 = vadd.f32 %v203, %v277
    %v279 = vpop.f32.mrb[0].mxu0
    %280 = vmatprep.mubr.f32.mxu0 0.0
    %281 = vmatmul.mubr.f32.gmra.mrb[0].mxu0 %v79
    %v282 = vpop.f32.mrb[0].mxu0
    %v283 = vadd.f32 %v208, %v282
    %v284 = vpop.f32.mrb[0].mxu0
    %285 = vdwg.mxu0
    %v286 = vld [vmem:[%s5] sm:$0x1]
    %v288 = vlaneseq
    %v289 = vshrl.u32 %v288, 7
    %v290 = vsub.s32 0, %v289
    %v291 = vrot.slane %v286, %v290
    %v293 = vadd.f32 %v278, %v291
    %v294 = vadd.f32 %v283, %v291
    %v295 = vld [vmem:[%s6] sm:$0xff]
    %v296 = vld [vmem:[%s6 + $0x8] sm:$0xff]
    %v297 = vld [vmem:[%s6 + $0x10] sm:$0xff]
    %v298 = vld [vmem:[%s6 + $0x18] sm:$0xff]
    %v299 = vld [vmem:[%s6 + $0x20] sm:$0xff]
    %v300 = vld [vmem:[%s6 + $0x28] sm:$0xff]
    %v301 = vld [vmem:[%s6 + $0x30] sm:$0xff]
    %v302 = vld [vmem:[%s6 + $0x38] sm:$0xff]
    %v303 = vld [vmem:[%s6 + $0x40] sm:$0xff]
    %v304 = vld [vmem:[%s6 + $0x48] sm:$0xff]
    %v305 = vld [vmem:[%s6 + $0x50] sm:$0xff]
    %v306 = vld [vmem:[%s6 + $0x58] sm:$0xff]
    %v307 = vld [vmem:[%s6 + $0x60] sm:$0xff]
    %v308 = vld [vmem:[%s6 + $0x68] sm:$0xff]
    %v309 = vld [vmem:[%s6 + $0x70] sm:$0xff]
    %v310 = vld [vmem:[%s6 + $0x78] sm:$0xff]
    %v311 = vld [vmem:[%s7] sm:$0x1]
    %v313 = vlaneseq
    %v314 = vshrl.u32 %v313, 7
    %v315 = vsub.s32 0, %v314
    %v316 = vrot.slane %v311, %v315
    %318 = vmatprep.subr.mxu0 0.0
    %319 = vmatpush1.msra.mxu0 %v295
    %320 = vmatprep.subr.mxu0 0.0
    %321 = vmatpush1.msra.mxu0 %v296
    %322 = vmatprep.subr.mxu0 0.0
    %323 = vmatpush1.msra.mxu0 %v297
    %324 = vmatprep.subr.mxu0 0.0
    %325 = vmatpush1.msra.mxu0 %v298
    %326 = vmatprep.subr.mxu0 0.0
    %327 = vmatpush1.msra.mxu0 %v299
    %328 = vmatprep.subr.mxu0 0.0
    %329 = vmatpush1.msra.mxu0 %v300
    %330 = vmatprep.subr.mxu0 0.0
    %331 = vmatpush1.msra.mxu0 %v301
    %332 = vmatprep.subr.mxu0 0.0
    %333 = vmatpush1.msra.mxu0 %v302
    %334 = vmatprep.subr.mxu0 0.0
    %335 = vmatpush1.msra.mxu0 %v303
    %336 = vmatprep.subr.mxu0 0.0
    %337 = vmatpush1.msra.mxu0 %v304
    %338 = vmatprep.subr.mxu0 0.0
    %339 = vmatpush1.msra.mxu0 %v305
    %340 = vmatprep.subr.mxu0 0.0
    %341 = vmatpush1.msra.mxu0 %v306
    %342 = vmatprep.subr.mxu0 0.0
    %343 = vmatpush1.msra.mxu0 %v307
    %344 = vmatprep.subr.mxu0 0.0
    %345 = vmatpush1.msra.mxu0 %v308
    %346 = vmatprep.subr.mxu0 0.0
    %347 = vmatpush1.msra.mxu0 %v309
    %348 = vmatprep.subr.mxu0 0.0
    %349 = vmatpush1.msra.mxu0 %v310
    %350 = vmatprep.subr.mxu0 0.0
    %351 = vmatpush1.msra.mxu0 0.0
    %352 = vmatprep.subr.mxu0 0.0
    %353 = vmatpush1.msra.mxu0 0.0
    %354 = vmatprep.subr.mxu0 0.0
    %355 = vmatpush1.msra.mxu0 0.0
    %356 = vmatprep.subr.mxu0 0.0
    %357 = vmatpush1.msra.mxu0 0.0
    %358 = vmatprep.subr.mxu0 0.0
    %359 = vmatpush1.msra.mxu0 0.0
    %360 = vmatprep.subr.mxu0 0.0
    %361 = vmatpush1.msra.mxu0 0.0
    %362 = vmatprep.subr.mxu0 0.0
    %363 = vmatpush1.msra.mxu0 0.0
    %364 = vmatprep.subr.mxu0 0.0
    %365 = vmatpush1.msra.mxu0 0.0
    %366 = vmatprep.subr.mxu0 0.0
    %367 = vmatpush1.msra.mxu0 0.0
    %368 = vmatprep.subr.mxu0 0.0
    %369 = vmatpush1.msra.mxu0 0.0
    %370 = vmatprep.subr.mxu0 0.0
    %371 = vmatpush1.msra.mxu0 0.0
    %372 = vmatprep.subr.mxu0 0.0
    %373 = vmatpush1.msra.mxu0 0.0
    %374 = vmatprep.subr.mxu0 0.0
    %375 = vmatpush1.msra.mxu0 0.0
    %376 = vmatprep.subr.mxu0 0.0
    %377 = vmatpush1.msra.mxu0 0.0
    %378 = vmatprep.subr.mxu0 0.0
    %379 = vmatpush1.msra.mxu0 0.0
    %380 = vmatprep.subr.mxu0 0.0
    %381 = vmatpush1.msra.mxu0 0.0
    %382 = vmatprep.mubr.f32.mxu0 0.0
    %383 = vmatmul.mubr.f32.gmra.mrb[0].mxu0 %v293
    %v384 = vpop.f32.mrb[0].mxu0
    %v385 = vadd.f32 %v316, %v384
    %v386 = vpop.f32.mrb[0].mxu0
    %387 = vmatprep.mubr.f32.mxu0 0.0
    %388 = vmatmul.mubr.f32.gmra.mrb[0].mxu0 %v294
    %v389 = vpop.f32.mrb[0].mxu0
    %v390 = vadd.f32 %v316, %v389
    %v391 = vpop.f32.mrb[0].mxu0
    %392 = vdwg.mxu0
    %v393 = vmax.f32 %v385, 0.0
    %v394 = vmax.f32 %v390, 0.0
    %v395 = vld [vmem:[%s8] sm:$0x1]
    %v397 = vlaneseq
    %v398 = vshrl.u32 %v397, 7
    %v399 = vsub.s32 0, %v398
    %v400 = vrot.slane %v395, %v399
    %v402 = vmul.f32 %v393, %v400
    %v403 = vmul.f32 %v394, %v400
    %vm404 = vcmask 523264
    %v405 = vsel %vm404, %v402, 0.0
    %406 = vadd.xlane.f32.xlu0 %v405
    %v407 = vpop.xlane.xlu0 %406
    %v408 = vsel %vm404, %v403, 0.0
    %409 = vadd.xlane.f32.xlu0 %v408
    %v410 = vpop.xlane.xlu0 %409
    %v411 = vld [vmem:[#allocation3] sm:$0x1]
    %v413 = vlaneseq
    %v414 = vshrl.u32 %v413, 7
    %v415 = vsub.s32 0, %v414
    %v416 = vrot.slane %v411, %v415
    %v418 = vadd.f32 %v407, %v416
    %v419 = vadd.f32 %v410, %v416
    %v420 = vsub.f32 0.0, %v418
    %v421 = vsub.f32 0.0, %v419
    %v422 = vmul.f32 %v420, 1.442695
    %v423 = vpow.pop %v422
    %v424 = vmul.f32 %v421, 1.442695
    %v425 = vpow.pop %v424
    %v426 = vadd.f32 %v423, 1.0
    %v427 = vadd.f32 %v425, 1.0
    %v428 = vrcp.pop %v426
    %v429 = vmul.f32 1.0, %v428
    %v430 = vrcp.pop %v427
    %v431 = vmul.f32 1.0, %v430
    %433 = vset.pattern.permute.xlu0 0
    %434 = vperm.xlu0 %433, %v429
    %v435 = vpop.permute.xlu0 %434
    %438 = vset.pattern.permute.xlu0 0
    %439 = vperm.xlu0 %438, %v431
    %v440 = vpop.permute.xlu0 %439
    %v442 = vmul.f32 %v293, %v435
    %v443 = vmul.f32 %v294, %v440
    %v444 = vld [vmem:[%s10] sm:$0xff]
    %v445 = vld [vmem:[%s10 + $0x8] sm:$0xff]
    %v446 = vld [vmem:[%s10 + $0x10] sm:$0xff]
    %v447 = vld [vmem:[%s10 + $0x18] sm:$0xff]
    %v448 = vld [vmem:[%s10 + $0x20] sm:$0xff]
    %v449 = vld [vmem:[%s10 + $0x28] sm:$0xff]
    %v450 = vld [vmem:[%s10 + $0x30] sm:$0xff]
    %v451 = vld [vmem:[%s10 + $0x38] sm:$0xff]
    %v452 = vld [vmem:[%s10 + $0x40] sm:$0xff]
    %v453 = vld [vmem:[%s10 + $0x48] sm:$0xff]
    %v454 = vld [vmem:[%s10 + $0x50] sm:$0xff]
    %v455 = vld [vmem:[%s10 + $0x58] sm:$0xff]
    %v456 = vld [vmem:[%s10 + $0x60] sm:$0xff]
    %v457 = vld [vmem:[%s10 + $0x68] sm:$0xff]
    %v458 = vld [vmem:[%s10 + $0x70] sm:$0xff]
    %v459 = vld [vmem:[%s10 + $0x78] sm:$0xff]
    %460 = vmatprep.subr.mxu0 0.0
    %461 = vmatpush1.msra.mxu0 %v444
    %462 = vmatprep.subr.mxu0 0.0
    %463 = vmatpush1.msra.mxu0 %v445
    %464 = vmatprep.subr.mxu0 0.0
    %465 = vmatpush1.msra.mxu0 %v446
    %466 = vmatprep.subr.mxu0 0.0
    %467 = vmatpush1.msra.mxu0 %v447
    %468 = vmatprep.subr.mxu0 0.0
    %469 = vmatpush1.msra.mxu0 %v448
    %470 = vmatprep.subr.mxu0 0.0
    %471 = vmatpush1.msra.mxu0 %v449
    %472 = vmatprep.subr.mxu0 0.0
    %473 = vmatpush1.msra.mxu0 %v450
    %474 = vmatprep.subr.mxu0 0.0
    %475 = vmatpush1.msra.mxu0 %v451
    %476 = vmatprep.subr.mxu0 0.0
    %477 = vmatpush1.msra.mxu0 %v452
    %478 = vmatprep.subr.mxu0 0.0
    %479 = vmatpush1.msra.mxu0 %v453
    %480 = vmatprep.subr.mxu0 0.0
    %481 = vmatpush1.msra.mxu0 %v454
    %482 = vmatprep.subr.mxu0 0.0
    %483 = vmatpush1.msra.mxu0 %v455
    %484 = vmatprep.subr.mxu0 0.0
    %485 = vmatpush1.msra.mxu0 %v456
    %486 = vmatprep.subr.mxu0 0.0
    %487 = vmatpush1.msra.mxu0 %v457
    %488 = vmatprep.subr.mxu0 0.0
    %489 = vmatpush1.msra.mxu0 %v458
    %490 = vmatprep.subr.mxu0 0.0
    %491 = vmatpush1.msra.mxu0 %v459
    %492 = vmatprep.subr.mxu0 0.0
    %493 = vmatpush1.msra.mxu0 0.0
    %494 = vmatprep.subr.mxu0 0.0
    %495 = vmatpush1.msra.mxu0 0.0
    %496 = vmatprep.subr.mxu0 0.0
    %497 = vmatpush1.msra.mxu0 0.0
    %498 = vmatprep.subr.mxu0 0.0
    %499 = vmatpush1.msra.mxu0 0.0
    %500 = vmatprep.subr.mxu0 0.0
    %501 = vmatpush1.msra.mxu0 0.0
    %502 = vmatprep.subr.mxu0 0.0
    %503 = vmatpush1.msra.mxu0 0.0
    %504 = vmatprep.subr.mxu0 0.0
    %505 = vmatpush1.msra.mxu0 0.0
    %506 = vmatprep.subr.mxu0 0.0
    %507 = vmatpush1.msra.mxu0 0.0
    %508 = vmatprep.subr.mxu0 0.0
    %509 = vmatpush1.msra.mxu0 0.0
    %510 = vmatprep.subr.mxu0 0.0
    %511 = vmatpush1.msra.mxu0 0.0
    %512 = vmatprep.subr.mxu0 0.0
    %513 = vmatpush1.msra.mxu0 0.0
    %514 = vmatprep.subr.mxu0 0.0
    %515 = vmatpush1.msra.mxu0 0.0
    %516 = vmatprep.subr.mxu0 0.0
    %517 = vmatpush1.msra.mxu0 0.0
    %518 = vmatprep.subr.mxu0 0.0
    %519 = vmatpush1.msra.mxu0 0.0
    %520 = vmatprep.subr.mxu0 0.0
    %521 = vmatpush1.msra.mxu0 0.0
    %522 = vmatprep.subr.mxu0 0.0
    %523 = vmatpush1.msra.mxu0 0.0
    %524 = vmatprep.mubr.f32.mxu0 0.0
    %525 = vmatmul.mubr.f32.gmra.mrb[0].mxu0 %v442
    %v526 = vpop.f32.mrb[0].mxu0
    %v527 = vadd.f32 0.0, %v526
    %v528 = vpop.f32.mrb[0].mxu0
    %529 = vmatprep.mubr.f32.mxu0 0.0
    %530 = vmatmul.mubr.f32.gmra.mrb[0].mxu0 %v443
    %v531 = vpop.f32.mrb[0].mxu0
    %v532 = vadd.f32 0.0, %v531
    %v533 = vpop.f32.mrb[0].mxu0
    %534 = vdwg.mxu0
    %v535 = vmax.f32 %v527, 0.0
    %v536 = vmax.f32 %v532, 0.0
    %v537 = vld [vmem:[%s11] sm:$0xff]
    %vm538 = vcmask 64512
    %v540 = vsel %vm538, %v535, 0
    %v543 = vsel %vm538, %v536, 0
    %545 = vmatprep.subr.mxu0 0.0
    %546 = vmatpush1.msra.mxu0 %v537
    %547 = vmatprep.subr.mxu0 0.0
    %548 = vmatpush1.msra.mxu0 0.0
    %549 = vmatprep.subr.mxu0 0.0
    %550 = vmatpush1.msra.mxu0 0.0
    %551 = vmatprep.subr.mxu0 0.0
    %552 = vmatpush1.msra.mxu0 0.0
    %553 = vmatprep.subr.mxu0 0.0
    %554 = vmatpush1.msra.mxu0 0.0
    %555 = vmatprep.subr.mxu0 0.0
    %556 = vmatpush1.msra.mxu0 0.0
    %557 = vmatprep.subr.mxu0 0.0
    %558 = vmatpush1.msra.mxu0 0.0
    %559 = vmatprep.subr.mxu0 0.0
    %560 = vmatpush1.msra.mxu0 0.0
    %561 = vmatprep.subr.mxu0 0.0
    %562 = vmatpush1.msra.mxu0 0.0
    %563 = vmatprep.subr.mxu0 0.0
    %564 = vmatpush1.msra.mxu0 0.0
    %565 = vmatprep.subr.mxu0 0.0
    %566 = vmatpush1.msra.mxu0 0.0
    %567 = vmatprep.subr.mxu0 0.0
    %568 = vmatpush1.msra.mxu0 0.0
    %569 = vmatprep.subr.mxu0 0.0
    %570 = vmatpush1.msra.mxu0 0.0
    %571 = vmatprep.subr.mxu0 0.0
    %572 = vmatpush1.msra.mxu0 0.0
    %573 = vmatprep.subr.mxu0 0.0
    %574 = vmatpush1.msra.mxu0 0.0
    %575 = vmatprep.subr.mxu0 0.0
    %576 = vmatpush1.msra.mxu0 0.0
    %577 = vmatprep.subr.mxu0 0.0
    %578 = vmatpush1.msra.mxu0 0.0
    %579 = vmatprep.subr.mxu0 0.0
    %580 = vmatpush1.msra.mxu0 0.0
    %581 = vmatprep.subr.mxu0 0.0
    %582 = vmatpush1.msra.mxu0 0.0
    %583 = vmatprep.subr.mxu0 0.0
    %584 = vmatpush1.msra.mxu0 0.0
    %585 = vmatprep.subr.mxu0 0.0
    %586 = vmatpush1.msra.mxu0 0.0
    %587 = vmatprep.subr.mxu0 0.0
    %588 = vmatpush1.msra.mxu0 0.0
    %589 = vmatprep.subr.mxu0 0.0
    %590 = vmatpush1.msra.mxu0 0.0
    %591 = vmatprep.subr.mxu0 0.0
    %592 = vmatpush1.msra.mxu0 0.0
    %593 = vmatprep.subr.mxu0 0.0
    %594 = vmatpush1.msra.mxu0 0.0
    %595 = vmatprep.subr.mxu0 0.0
    %596 = vmatpush1.msra.mxu0 0.0
    %597 = vmatprep.subr.mxu0 0.0
    %598 = vmatpush1.msra.mxu0 0.0
    %599 = vmatprep.subr.mxu0 0.0
    %600 = vmatpush1.msra.mxu0 0.0
    %601 = vmatprep.subr.mxu0 0.0
    %602 = vmatpush1.msra.mxu0 0.0
    %603 = vmatprep.subr.mxu0 0.0
    %604 = vmatpush1.msra.mxu0 0.0
    %605 = vmatprep.subr.mxu0 0.0
    %606 = vmatpush1.msra.mxu0 0.0
    %607 = vmatprep.subr.mxu0 0.0
    %608 = vmatpush1.msra.mxu0 0.0
    %609 = vmatprep.mubr.f32.mxu0 0.0
    %610 = vmatmul.mubr.f32.gmra.mrb[0].mxu0 %v540
    %v611 = vpop.f32.mrb[0].mxu0
    %v612 = vadd.f32 0.0, %v611
    %v613 = vpop.f32.mrb[0].mxu0
    %614 = vmatprep.mubr.f32.mxu0 0.0
    %615 = vmatmul.mubr.f32.gmra.mrb[0].mxu0 %v543
    %v616 = vpop.f32.mrb[0].mxu0
    %v617 = vadd.f32 0.0, %v616
    %v618 = vpop.f32.mrb[0].mxu0
    %619 = vdwg.mxu0
    %v620 = vsub.f32 0.0, %v612
    %v621 = vsub.f32 0.0, %v617
    %v622 = vmul.f32 %v620, 1.442695
    %v623 = vpow.pop %v622
    %v624 = vmul.f32 %v621, 1.442695
    %v625 = vpow.pop %v624
    %v626 = vadd.f32 %v623, 1.0
    %v627 = vadd.f32 %v625, 1.0
    %v628 = vrcp.pop %v626
    %v629 = vmul.f32 1.0, %v628
    %v630 = vrcp.pop %v627
    %v631 = vmul.f32 1.0, %v630
    %v632 = vld [vmem:[%s0] sm:$0xff]
    %v633 = vld [vmem:[%s0 + $0x8] sm:$0xff]
    %v634 = vmul.f32 %v442, %v629
    %v635 = vmul.f32 %v443, %v631
    %v636 = vadd.f32 %v632, %v634
    %v637 = vadd.f32 %v633, %v635
    %638 = vst [vmem:[#allocation4] sm:$0xff] %v636
    %639 = vst [vmem:[#allocation4 + $0x8] sm:$0xff] %v637
    // Predicated region
    $region50: #{schnet_forward.11} parent=1 // pred_check
      _
    $region51: #{schnet_forward.11} parent=1 // pred_check_branch
      %641 = sbr.rel (0) target = $region53
    $region52: #{schnet_forward.11} parent=1 // pred_region
      %s643 = ssub.s32 256, 256
      %644 = vsyncadd [#allocation5], %s643
      %s645 = sshll.u32 [#allocation4], 4
      %s646 = int_to_ptr.vmem [resolvable:$true] %s645
      %651 = dma.vmem_to_hbm [thread:$0]  %s646, 256, %s12, [#allocation5], 128, 128, 8
    $region53: #{schnet_forward.11} parent=1 // pred_fallthru
      _
    // Predicated region
    $region54: #{schnet_forward.11} parent=1 // pred_check
      _
    $region55: #{schnet_forward.11} parent=1 // pred_check_branch
      %653 = sbr.rel (0) target = $region57
    $region56: #{schnet_forward.11} parent=1 // pred_region
      %654 = dma.done [#allocation5], 256
    $region57: #{schnet_forward.11} parent=1 // pred_fallthru
      _
    %655 = vsyncpa [#allocation5], 1

// kernel: schnet_forward.7
$region0: #{schnet_forward.7}
  #allocation0 [shape = 'u32[]', space=smem, size = 0x4, offset = 0x4, fixed_abs, tag = 'smem constant byte address 0x4 - core index']
  #allocation1 [shape = 'u32[144,128]{1,0:T(1,128)}', space=vmem, size = 0x12000, scoped, tag = 'internal scratch']
  #allocation2 [shape = 'f32[16,64]{1,0:T(8,128)}', space=vmem, size = 0x2000, scoped, tag = 'scratch operand']
  #allocation3 [shape = 'f32[16,64]{1,0:T(8,128)}', space=vmem, size = 0x2000, scoped, tag = 'scratch operand']
  #allocation4 [shape = 'f32[1,1]{1,0:T(1,128)S(1)}', space=vmem, size = 0x200, scoped, tag = 'scoped memory for schnet_forward.7']
  #allocation5 [shape = 'f32[1,1]{1,0:T(1,128)S(1)}', space=vmem, size = 0x200, scoped, tag = 'scoped memory for schnet_forward.7']
  %s0 = inlined_call_operand.vmem [shape: f32[16,128], index: 0, kind: input, shape index: {}]
  %s1 = inlined_call_operand.vmem [shape: f32[48,1], index: 1, kind: input, shape index: {}]
  %s2 = inlined_call_operand.vmem [shape: f32[48,128], index: 2, kind: input, shape index: {}]
  %s3 = inlined_call_operand.vmem [shape: s32[48,1], index: 3, kind: input, shape index: {}]
  %s4 = inlined_call_operand.vmem [shape: s32[48,1], index: 4, kind: input, shape index: {}]
  %s5 = inlined_call_operand.vmem [shape: f32[128,64], index: 5, kind: input, shape index: {}]
  %s6 = inlined_call_operand.vmem [shape: f32[1,64], index: 6, kind: input, shape index: {}]
  %s7 = inlined_call_operand.vmem [shape: f32[1,64], index: 7, kind: input, shape index: {}]
  %s8 = inlined_call_operand.vmem [shape: f32[1,64], index: 8, kind: input, shape index: {}]
  %s9 = inlined_call_operand.vmem [shape: f32[128,64], index: 9, kind: input, shape index: {}]
  %s10 = inlined_call_operand.vmem [shape: f32[1,64], index: 10, kind: input, shape index: {}]
  %s11 = inlined_call_operand.<no memory space> [shape: f32[1,1], index: 11, kind: input, shape index: {}]
  %s12 = inlined_call_operand.vmem [shape: f32[64,64], index: 12, kind: input, shape index: {}]
  %s13 = inlined_call_operand.vmem [shape: f32[1,64], index: 13, kind: input, shape index: {}]
  %s14 = inlined_call_operand.vmem [shape: f32[1,32], index: 14, kind: input, shape index: {}]
  %s15 = inlined_call_operand.vmem [shape: f32[1,32], index: 15, kind: input, shape index: {}]
  %s16 = inlined_call_operand.vmem [shape: f32[1,32], index: 16, kind: input, shape index: {}]
  %s17 = inlined_call_operand.<no memory space> [shape: f32[1,1], index: 17, kind: input, shape index: {}]
  %s18 = inlined_call_operand.vmem [shape: f32[64,128], index: 18, kind: input, shape index: {}]
  %s19 = inlined_call_operand.vmem [shape: f32[1,128], index: 19, kind: input, shape index: {}]
  %s20 = inlined_call_operand.vmem [shape: f32[1,128], index: 20, kind: input, shape index: {}]
  %s21 = inlined_call_operand.vmem [shape: f32[1,128], index: 21, kind: input, shape index: {}]
  %s22 = inlined_call_operand.vmem [shape: f32[16,128], index: 22, kind: output, shape index: {}]
  %s23 = sld [smem:[#allocation0]]
  $region129: #{schnet_forward.7} parent=0
    _
  %s25 = ssub.s32 1, %s23
  %s26 = scalar_select 0, %s25, %s23
  %v27 = vstv %s11
  %28 = vst [vmem:[#allocation4] sm:$0x1] %v27
  %v29 = vstv %s17
  %30 = vst [vmem:[#allocation5] sm:$0x1] %v29
  loop: start=0, step=1, limit=5
  $region2: #{schnet_forward.7} parent=0 // loop_pre_header
    _
  $region3: #{schnet_forward.7} parent=0 // loop_header
    %s32 = sphi 0, %s36
    %p33 = scmp.ge.s32.totalorder %s32, 5
    %s40 = sphi 0, %s40
    %s42 = sphi 0, %s40
    %s43 = sphi 0, %s42
    %s57 = sphi 0, %s43
    %s63 = sphi 0, %s65
    %s66 = sphi 0, %s63
    %s67 = sphi 0, %s66
    %s83 = sphi 0, %s67
    %s89 = sphi 0, %s91
    %s92 = sphi 0, %s89
    %s93 = sphi 0, %s92
    %s109 = sphi 0, %s93
    %s115 = sphi 0, %s117
    %s118 = sphi 0, %s115
    %s119 = sphi 0, %s118
    %s135 = sphi 0, %s119
    %s141 = sphi 0, %s143
    %s144 = sphi 0, %s141
    %s145 = sphi 0, %s144
    %s161 = sphi 0, %s145
    %s165 = sphi 0, %s165
    %s167 = sphi 0, %s165
    %s168 = sphi 0, %s167
    %s182 = sphi 0, %s168
    %s186 = sphi 0, %s186
    %s188 = sphi 0, %s186
    %s189 = sphi 0, %s188
    %s203 = sphi 0, %s189
    %s207 = sphi 0, %s207
    %s209 = sphi 0, %s207
    %s210 = sphi 0, %s209
    %s224 = sphi 0, %s210
    %s228 = sphi 0, %s228
    %s230 = sphi 0, %s228
    %s231 = sphi 0, %s230
    %s245 = sphi 0, %s231
    %s249 = sphi 0, %s249
    %s251 = sphi 0, %s249
    %s252 = sphi 0, %s251
    %s266 = sphi 0, %s252
    %s270 = sphi 0, %s270
    %s272 = sphi 0, %s270
    %s273 = sphi 0, %s272
    %s287 = sphi 0, %s273
    %s291 = sphi 0, %s291
    %s293 = sphi 0, %s291
    %s294 = sphi 0, %s293
    %s308 = sphi 0, %s294
    %s312 = sphi 0, %s312
    %s314 = sphi 0, %s312
    %s315 = sphi 0, %s314
    %s329 = sphi 0, %s315
    %s333 = sphi 0, %s333
    %s335 = sphi 0, %s333
    %s336 = sphi 0, %s335
    %s350 = sphi 0, %s336
    %s354 = sphi 0, %s354
    %s356 = sphi 0, %s354
    %s357 = sphi 0, %s356
    %s371 = sphi 0, %s357
    %s375 = sphi 0, %s375
    %s377 = sphi 0, %s375
    %s378 = sphi 0, %s377
    %s392 = sphi 0, %s378
    %s396 = sphi 0, %s396
    %s398 = sphi 0, %s396
    %s399 = sphi 0, %s398
    %s413 = sphi 0, %s399
    %s417 = sphi 0, %s417
    %s419 = sphi 0, %s417
    %s420 = sphi 0, %s419
    %s434 = sphi 0, %s420
    %s438 = sphi 0, %s438
    %s440 = sphi 0, %s438
    %s441 = sphi 0, %s440
    %s455 = sphi 0, %s441
    %s459 = sphi 0, %s459
    %s461 = sphi 0, %s459
    %s462 = sphi 0, %s461
    %s476 = sphi 0, %s462
    %s480 = sphi 0, %s480
    %s482 = sphi 0, %s480
    %s483 = sphi 0, %s482
    %s497 = sphi 0, %s483
    %s501 = sphi 0, %s501
    %s503 = sphi 0, %s501
    %s504 = sphi 0, %s503
    %s518 = sphi 0, %s504
    %s522 = sphi 0, %s522
    %s524 = sphi 0, %s522
    %s525 = sphi 0, %s524
    %s539 = sphi 0, %s525
  $region4: #{schnet_forward.7} parent=0 // loop_header_branch
    %35 = sbr.rel (%p33) target = $region8
  $region5: #{schnet_forward.7} parent=0 // loop_body
    %s37 = ssub.s32 %s32, 1
    %s38 = ssub.s32 %s32, 2
    %s39 = sadd.s32 %s32, 1
    %s41 = sadd.s32 %s40, 1
    %p44 = scmp.eq.s32.totalorder %s32, 2
    %p45 = scmp.ne.s32.totalorder %s40, %s42
    %p46 = scmp.eq.s32.totalorder %s32, 0
    %p47 = por %p45, %p46
    %p48 = scmp.ne.s32.totalorder %s40, %s42
    %p49 = scmp.eq.s32.totalorder %s37, 2
    %p50 = por %p48, %p49
    %p51 = scmp.ne.s32.totalorder %s42, %s43
    %p52 = scmp.eq.s32.totalorder %s37, 0
    %p53 = por %p51, %p52
    %p54 = scmp.ne.s32.totalorder %s42, %s43
    %p55 = scmp.eq.s32.totalorder %s38, 2
    %p56 = por %p54, %p55
    %p58 = scmp.ne.s32.totalorder %s43, %s57
    %p59 = scmp.eq.s32.totalorder %s38, 0
    %p60 = por %p58, %p59
    %s61 = ssub.s32 %s32, %s39
    %p62 = scmp.eq.s32.totalorder %s61, 0
    %s64 = sadd.s32 %s63, 1
    %s65 = scalar_select %p62, %s63, %s64
    %p68 = pneg %p62
    %p69 = scmp.eq.s32.totalorder %s32, 2
    %p70 = por %p68, %p69
    %p71 = scmp.ne.s32.totalorder %s63, %s66
    %p72 = scmp.eq.s32.totalorder %s32, 0
    %p73 = por %p71, %p72
    %p74 = scmp.ne.s32.totalorder %s63, %s66
    %p75 = scmp.eq.s32.totalorder %s37, 2
    %p76 = por %p74, %p75
    %p77 = scmp.ne.s32.totalorder %s66, %s67
    %p78 = scmp.eq.s32.totalorder %s37, 0
    %p79 = por %p77, %p78
    %p80 = scmp.ne.s32.totalorder %s66, %s67
    %p81 = scmp.eq.s32.totalorder %s38, 2
    %p82 = por %p80, %p81
    %p84 = scmp.ne.s32.totalorder %s67, %s83
    %p85 = scmp.eq.s32.totalorder %s38, 0
    %p86 = por %p84, %p85
    %s87 = ssub.s32 %s32, %s39
    %p88 = scmp.eq.s32.totalorder %s87, 0
    %s90 = sadd.s32 %s89, 1
    %s91 = scalar_select %p88, %s89, %s90
    %p94 = pneg %p88
    %p95 = scmp.eq.s32.totalorder %s32, 2
    %p96 = por %p94, %p95
    %p97 = scmp.ne.s32.totalorder %s89, %s92
    %p98 = scmp.eq.s32.totalorder %s32, 0
    %p99 = por %p97, %p98
    %p100 = scmp.ne.s32.totalorder %s89, %s92
    %p101 = scmp.eq.s32.totalorder %s37, 2
    %p102 = por %p100, %p101
    %p103 = scmp.ne.s32.totalorder %s92, %s93
    %p104 = scmp.eq.s32.totalorder %s37, 0
    %p105 = por %p103, %p104
    %p106 = scmp.ne.s32.totalorder %s92, %s93
    %p107 = scmp.eq.s32.totalorder %s38, 2
    %p108 = por %p106, %p107
    %p110 = scmp.ne.s32.totalorder %s93, %s109
    %p111 = scmp.eq.s32.totalorder %s38, 0
    %p112 = por %p110, %p111
    %s113 = ssub.s32 %s32, %s39
    %p114 = scmp.eq.s32.totalorder %s113, 0
    %s116 = sadd.s32 %s115, 1
    %s117 = scalar_select %p114, %s115, %s116
    %p120 = pneg %p114
    %p121 = scmp.eq.s32.totalorder %s32, 2
    %p122 = por %p120, %p121
    %p123 = scmp.ne.s32.totalorder %s115, %s118
    %p124 = scmp.eq.s32.totalorder %s32, 0
    %p125 = por %p123, %p124
    %p126 = scmp.ne.s32.totalorder %s115, %s118
    %p127 = scmp.eq.s32.totalorder %s37, 2
    %p128 = por %p126, %p127
    %p129 = scmp.ne.s32.totalorder %s118, %s119
    %p130 = scmp.eq.s32.totalorder %s37, 0
    %p131 = por %p129, %p130
    %p132 = scmp.ne.s32.totalorder %s118, %s119
    %p133 = scmp.eq.s32.totalorder %s38, 2
    %p134 = por %p132, %p133
    %p136 = scmp.ne.s32.totalorder %s119, %s135
    %p137 = scmp.eq.s32.totalorder %s38, 0
    %p138 = por %p136, %p137
    %s139 = ssub.s32 %s32, %s39
    %p140 = scmp.eq.s32.totalorder %s139, 0
    %s142 = sadd.s32 %s141, 1
    %s143 = scalar_select %p140, %s141, %s142
    %p146 = pneg %p140
    %p147 = scmp.eq.s32.totalorder %s32, 2
    %p148 = por %p146, %p147
    %p149 = scmp.ne.s32.totalorder %s141, %s144
    %p150 = scmp.eq.s32.totalorder %s32, 0
    %p151 = por %p149, %p150
    %p152 = scmp.ne.s32.totalorder %s141, %s144
    %p153 = scmp.eq.s32.totalorder %s37, 2
    %p154 = por %p152, %p153
    %p155 = scmp.ne.s32.totalorder %s144, %s145
    %p156 = scmp.eq.s32.totalorder %s37, 0
    %p157 = por %p155, %p156
    %p158 = scmp.ne.s32.totalorder %s144, %s145
    %p159 = scmp.eq.s32.totalorder %s38, 2
    %p160 = por %p158, %p159
    %p162 = scmp.ne.s32.totalorder %s145, %s161
    %p163 = scmp.eq.s32.totalorder %s38, 0
    %p164 = por %p162, %p163
    %s166 = sadd.s32 %s165, 1
    %p169 = scmp.eq.s32.totalorder %s32, 2
    %p170 = scmp.ne.s32.totalorder %s165, %s167
    %p171 = scmp.eq.s32.totalorder %s32, 0
    %p172 = por %p170, %p171
    %p173 = scmp.ne.s32.totalorder %s165, %s167
    %p174 = scmp.eq.s32.totalorder %s37, 2
    %p175 = por %p173, %p174
    %p176 = scmp.ne.s32.totalorder %s167, %s168
    %p177 = scmp.eq.s32.totalorder %s37, 0
    %p178 = por %p176, %p177
    %p179 = scmp.ne.s32.totalorder %s167, %s168
    %p180 = scmp.eq.s32.totalorder %s38, 2
    %p181 = por %p179, %p180
    %p183 = scmp.ne.s32.totalorder %s168, %s182
    %p184 = scmp.eq.s32.totalorder %s38, 0
    %p185 = por %p183, %p184
    %s187 = sadd.s32 %s186, 1
    %p190 = scmp.eq.s32.totalorder %s32, 2
    %p191 = scmp.ne.s32.totalorder %s186, %s188
    %p192 = scmp.eq.s32.totalorder %s32, 0
    %p193 = por %p191, %p192
    %p194 = scmp.ne.s32.totalorder %s186, %s188
    %p195 = scmp.eq.s32.totalorder %s37, 2
    %p196 = por %p194, %p195
    %p197 = scmp.ne.s32.totalorder %s188, %s189
    %p198 = scmp.eq.s32.totalorder %s37, 0
    %p199 = por %p197, %p198
    %p200 = scmp.ne.s32.totalorder %s188, %s189
    %p201 = scmp.eq.s32.totalorder %s38, 2
    %p202 = por %p200, %p201
    %p204 = scmp.ne.s32.totalorder %s189, %s203
    %p205 = scmp.eq.s32.totalorder %s38, 0
    %p206 = por %p204, %p205
    %s208 = sadd.s32 %s207, 1
    %p211 = scmp.eq.s32.totalorder %s32, 2
    %p212 = scmp.ne.s32.totalorder %s207, %s209
    %p213 = scmp.eq.s32.totalorder %s32, 0
    %p214 = por %p212, %p213
    %p215 = scmp.ne.s32.totalorder %s207, %s209
    %p216 = scmp.eq.s32.totalorder %s37, 2
    %p217 = por %p215, %p216
    %p218 = scmp.ne.s32.totalorder %s209, %s210
    %p219 = scmp.eq.s32.totalorder %s37, 0
    %p220 = por %p218, %p219
    %p221 = scmp.ne.s32.totalorder %s209, %s210
    %p222 = scmp.eq.s32.totalorder %s38, 2
    %p223 = por %p221, %p222
    %p225 = scmp.ne.s32.totalorder %s210, %s224
    %p226 = scmp.eq.s32.totalorder %s38, 0
    %p227 = por %p225, %p226
    %s229 = sadd.s32 %s228, 1
    %p232 = scmp.eq.s32.totalorder %s32, 2
    %p233 = scmp.ne.s32.totalorder %s228, %s230
    %p234 = scmp.eq.s32.totalorder %s32, 0
    %p235 = por %p233, %p234
    %p236 = scmp.ne.s32.totalorder %s228, %s230
    %p237 = scmp.eq.s32.totalorder %s37, 2
    %p238 = por %p236, %p237
    %p239 = scmp.ne.s32.totalorder %s230, %s231
    %p240 = scmp.eq.s32.totalorder %s37, 0
    %p241 = por %p239, %p240
    %p242 = scmp.ne.s32.totalorder %s230, %s231
    %p243 = scmp.eq.s32.totalorder %s38, 2
    %p244 = por %p242, %p243
    %p246 = scmp.ne.s32.totalorder %s231, %s245
    %p247 = scmp.eq.s32.totalorder %s38, 0
    %p248 = por %p246, %p247
    %s250 = sadd.s32 %s249, 1
    %p253 = scmp.eq.s32.totalorder %s32, 2
    %p254 = scmp.ne.s32.totalorder %s249, %s251
    %p255 = scmp.eq.s32.totalorder %s32, 0
    %p256 = por %p254, %p255
    %p257 = scmp.ne.s32.totalorder %s249, %s251
    %p258 = scmp.eq.s32.totalorder %s37, 2
    %p259 = por %p257, %p258
    %p260 = scmp.ne.s32.totalorder %s251, %s252
    %p261 = scmp.eq.s32.totalorder %s37, 0
    %p262 = por %p260, %p261
    %p263 = scmp.ne.s32.totalorder %s251, %s252
    %p264 = scmp.eq.s32.totalorder %s38, 2
    %p265 = por %p263, %p264
    %p267 = scmp.ne.s32.totalorder %s252, %s266
    %p268 = scmp.eq.s32.totalorder %s38, 0
    %p269 = por %p267, %p268
    %s271 = sadd.s32 %s270, 1
    %p274 = scmp.eq.s32.totalorder %s32, 2
    %p275 = scmp.ne.s32.totalorder %s270, %s272
    %p276 = scmp.eq.s32.totalorder %s32, 0
    %p277 = por %p275, %p276
    %p278 = scmp.ne.s32.totalorder %s270, %s272
    %p279 = scmp.eq.s32.totalorder %s37, 2
    %p280 = por %p278, %p279
    %p281 = scmp.ne.s32.totalorder %s272, %s273
    %p282 = scmp.eq.s32.totalorder %s37, 0
    %p283 = por %p281, %p282
    %p284 = scmp.ne.s32.totalorder %s272, %s273
    %p285 = scmp.eq.s32.totalorder %s38, 2
    %p286 = por %p284, %p285
    %p288 = scmp.ne.s32.totalorder %s273, %s287
    %p289 = scmp.eq.s32.totalorder %s38, 0
    %p290 = por %p288, %p289
    %s292 = sadd.s32 %s291, 1
    %p295 = scmp.eq.s32.totalorder %s32, 2
    %p296 = scmp.ne.s32.totalorder %s291, %s293
    %p297 = scmp.eq.s32.totalorder %s32, 0
    %p298 = por %p296, %p297
    %p299 = scmp.ne.s32.totalorder %s291, %s293
    %p300 = scmp.eq.s32.totalorder %s37, 2
    %p301 = por %p299, %p300
    %p302 = scmp.ne.s32.totalorder %s293, %s294
    %p303 = scmp.eq.s32.totalorder %s37, 0
    %p304 = por %p302, %p303
    %p305 = scmp.ne.s32.totalorder %s293, %s294
    %p306 = scmp.eq.s32.totalorder %s38, 2
    %p307 = por %p305, %p306
    %p309 = scmp.ne.s32.totalorder %s294, %s308
    %p310 = scmp.eq.s32.totalorder %s38, 0
    %p311 = por %p309, %p310
    %s313 = sadd.s32 %s312, 1
    %p316 = scmp.eq.s32.totalorder %s32, 2
    %p317 = scmp.ne.s32.totalorder %s312, %s314
    %p318 = scmp.eq.s32.totalorder %s32, 0
    %p319 = por %p317, %p318
    %p320 = scmp.ne.s32.totalorder %s312, %s314
    %p321 = scmp.eq.s32.totalorder %s37, 2
    %p322 = por %p320, %p321
    %p323 = scmp.ne.s32.totalorder %s314, %s315
    %p324 = scmp.eq.s32.totalorder %s37, 0
    %p325 = por %p323, %p324
    %p326 = scmp.ne.s32.totalorder %s314, %s315
    %p327 = scmp.eq.s32.totalorder %s38, 2
    %p328 = por %p326, %p327
    %p330 = scmp.ne.s32.totalorder %s315, %s329
    %p331 = scmp.eq.s32.totalorder %s38, 0
    %p332 = por %p330, %p331
    %s334 = sadd.s32 %s333, 1
    %p337 = scmp.eq.s32.totalorder %s32, 2
    %p338 = scmp.ne.s32.totalorder %s333, %s335
    %p339 = scmp.eq.s32.totalorder %s32, 0
    %p340 = por %p338, %p339
    %p341 = scmp.ne.s32.totalorder %s333, %s335
    %p342 = scmp.eq.s32.totalorder %s37, 2
    %p343 = por %p341, %p342
    %p344 = scmp.ne.s32.totalorder %s335, %s336
    %p345 = scmp.eq.s32.totalorder %s37, 0
    %p346 = por %p344, %p345
    %p347 = scmp.ne.s32.totalorder %s335, %s336
    %p348 = scmp.eq.s32.totalorder %s38, 2
    %p349 = por %p347, %p348
    %p351 = scmp.ne.s32.totalorder %s336, %s350
    %p352 = scmp.eq.s32.totalorder %s38, 0
    %p353 = por %p351, %p352
    %s355 = sadd.s32 %s354, 1
    %p358 = scmp.eq.s32.totalorder %s32, 2
    %p359 = scmp.ne.s32.totalorder %s354, %s356
    %p360 = scmp.eq.s32.totalorder %s32, 0
    %p361 = por %p359, %p360
    %p362 = scmp.ne.s32.totalorder %s354, %s356
    %p363 = scmp.eq.s32.totalorder %s37, 2
    %p364 = por %p362, %p363
    %p365 = scmp.ne.s32.totalorder %s356, %s357
    %p366 = scmp.eq.s32.totalorder %s37, 0
    %p367 = por %p365, %p366
    %p368 = scmp.ne.s32.totalorder %s356, %s357
    %p369 = scmp.eq.s32.totalorder %s38, 2
    %p370 = por %p368, %p369
    %p372 = scmp.ne.s32.totalorder %s357, %s371
    %p373 = scmp.eq.s32.totalorder %s38, 0
    %p374 = por %p372, %p373
    %s376 = sadd.s32 %s375, 1
    %p379 = scmp.eq.s32.totalorder %s32, 2
    %p380 = scmp.ne.s32.totalorder %s375, %s377
    %p381 = scmp.eq.s32.totalorder %s32, 0
    %p382 = por %p380, %p381
    %p383 = scmp.ne.s32.totalorder %s375, %s377
    %p384 = scmp.eq.s32.totalorder %s37, 2
    %p385 = por %p383, %p384
    %p386 = scmp.ne.s32.totalorder %s377, %s378
    %p387 = scmp.eq.s32.totalorder %s37, 0
    %p388 = por %p386, %p387
    %p389 = scmp.ne.s32.totalorder %s377, %s378
    %p390 = scmp.eq.s32.totalorder %s38, 2
    %p391 = por %p389, %p390
    %p393 = scmp.ne.s32.totalorder %s378, %s392
    %p394 = scmp.eq.s32.totalorder %s38, 0
    %p395 = por %p393, %p394
    %s397 = sadd.s32 %s396, 1
    %p400 = scmp.eq.s32.totalorder %s32, 2
    %p401 = scmp.ne.s32.totalorder %s396, %s398
    %p402 = scmp.eq.s32.totalorder %s32, 0
    %p403 = por %p401, %p402
    %p404 = scmp.ne.s32.totalorder %s396, %s398
    %p405 = scmp.eq.s32.totalorder %s37, 2
    %p406 = por %p404, %p405
    %p407 = scmp.ne.s32.totalorder %s398, %s399
    %p408 = scmp.eq.s32.totalorder %s37, 0
    %p409 = por %p407, %p408
    %p410 = scmp.ne.s32.totalorder %s398, %s399
    %p411 = scmp.eq.s32.totalorder %s38, 2
    %p412 = por %p410, %p411
    %p414 = scmp.ne.s32.totalorder %s399, %s413
    %p415 = scmp.eq.s32.totalorder %s38, 0
    %p416 = por %p414, %p415
    %s418 = sadd.s32 %s417, 1
    %p421 = scmp.eq.s32.totalorder %s32, 2
    %p422 = scmp.ne.s32.totalorder %s417, %s419
    %p423 = scmp.eq.s32.totalorder %s32, 0
    %p424 = por %p422, %p423
    %p425 = scmp.ne.s32.totalorder %s417, %s419
    %p426 = scmp.eq.s32.totalorder %s37, 2
    %p427 = por %p425, %p426
    %p428 = scmp.ne.s32.totalorder %s419, %s420
    %p429 = scmp.eq.s32.totalorder %s37, 0
    %p430 = por %p428, %p429
    %p431 = scmp.ne.s32.totalorder %s419, %s420
    %p432 = scmp.eq.s32.totalorder %s38, 2
    %p433 = por %p431, %p432
    %p435 = scmp.ne.s32.totalorder %s420, %s434
    %p436 = scmp.eq.s32.totalorder %s38, 0
    %p437 = por %p435, %p436
    %s439 = sadd.s32 %s438, 1
    %p442 = scmp.eq.s32.totalorder %s32, 2
    %p443 = scmp.ne.s32.totalorder %s438, %s440
    %p444 = scmp.eq.s32.totalorder %s32, 0
    %p445 = por %p443, %p444
    %p446 = scmp.ne.s32.totalorder %s438, %s440
    %p447 = scmp.eq.s32.totalorder %s37, 2
    %p448 = por %p446, %p447
    %p449 = scmp.ne.s32.totalorder %s440, %s441
    %p450 = scmp.eq.s32.totalorder %s37, 0
    %p451 = por %p449, %p450
    %p452 = scmp.ne.s32.totalorder %s440, %s441
    %p453 = scmp.eq.s32.totalorder %s38, 2
    %p454 = por %p452, %p453
    %p456 = scmp.ne.s32.totalorder %s441, %s455
    %p457 = scmp.eq.s32.totalorder %s38, 0
    %p458 = por %p456, %p457
    %s460 = sadd.s32 %s459, 1
    %p463 = scmp.eq.s32.totalorder %s32, 2
    %p464 = scmp.ne.s32.totalorder %s459, %s461
    %p465 = scmp.eq.s32.totalorder %s32, 0
    %p466 = por %p464, %p465
    %p467 = scmp.ne.s32.totalorder %s459, %s461
    %p468 = scmp.eq.s32.totalorder %s37, 2
    %p469 = por %p467, %p468
    %p470 = scmp.ne.s32.totalorder %s461, %s462
    %p471 = scmp.eq.s32.totalorder %s37, 0
    %p472 = por %p470, %p471
    %p473 = scmp.ne.s32.totalorder %s461, %s462
    %p474 = scmp.eq.s32.totalorder %s38, 2
    %p475 = por %p473, %p474
    %p477 = scmp.ne.s32.totalorder %s462, %s476
    %p478 = scmp.eq.s32.totalorder %s38, 0
    %p479 = por %p477, %p478
    %s481 = sadd.s32 %s480, 1
    %p484 = scmp.eq.s32.totalorder %s32, 2
    %p485 = scmp.ne.s32.totalorder %s480, %s482
    %p486 = scmp.eq.s32.totalorder %s32, 0
    %p487 = por %p485, %p486
    %p488 = scmp.ne.s32.totalorder %s480, %s482
    %p489 = scmp.eq.s32.totalorder %s37, 2
    %p490 = por %p488, %p489
    %p491 = scmp.ne.s32.totalorder %s482, %s483
    %p492 = scmp.eq.s32.totalorder %s37, 0
    %p493 = por %p491, %p492
    %p494 = scmp.ne.s32.totalorder %s482, %s483
    %p495 = scmp.eq.s32.totalorder %s38, 2
    %p496 = por %p494, %p495
    %p498 = scmp.ne.s32.totalorder %s483, %s497
    %p499 = scmp.eq.s32.totalorder %s38, 0
    %p500 = por %p498, %p499
    %s502 = sadd.s32 %s501, 1
    %p505 = scmp.eq.s32.totalorder %s32, 2
    %p506 = scmp.ne.s32.totalorder %s501, %s503
    %p507 = scmp.eq.s32.totalorder %s32, 0
    %p508 = por %p506, %p507
    %p509 = scmp.ne.s32.totalorder %s501, %s503
    %p510 = scmp.eq.s32.totalorder %s37, 2
    %p511 = por %p509, %p510
    %p512 = scmp.ne.s32.totalorder %s503, %s504
    %p513 = scmp.eq.s32.totalorder %s37, 0
    %p514 = por %p512, %p513
    %p515 = scmp.ne.s32.totalorder %s503, %s504
    %p516 = scmp.eq.s32.totalorder %s38, 2
    %p517 = por %p515, %p516
    %p519 = scmp.ne.s32.totalorder %s504, %s518
    %p520 = scmp.eq.s32.totalorder %s38, 0
    %p521 = por %p519, %p520
    %s523 = sadd.s32 %s522, 1
    %p526 = scmp.eq.s32.totalorder %s32, 2
    %p527 = scmp.ne.s32.totalorder %s522, %s524
    %p528 = scmp.eq.s32.totalorder %s32, 0
    %p529 = por %p527, %p528
    %p530 = scmp.ne.s32.totalorder %s522, %s524
    %p531 = scmp.eq.s32.totalorder %s37, 2
    %p532 = por %p530, %p531
    %p533 = scmp.ne.s32.totalorder %s524, %s525
    %p534 = scmp.eq.s32.totalorder %s37, 0
    %p535 = por %p533, %p534
    %p536 = scmp.ne.s32.totalorder %s524, %s525
    %p537 = scmp.eq.s32.totalorder %s38, 2
    %p538 = por %p536, %p537
    %p540 = scmp.ne.s32.totalorder %s525, %s539
    %p541 = scmp.eq.s32.totalorder %s38, 0
    %p542 = por %p540, %p541
    %p543 = scmp.le.s32.totalorder 1, %s32
    %p544 = scmp.lt.s32.totalorder %s32, 4
    %p545 = pnand %p543, %p544
    %p546 = pneg %p545
    // Predicated region
    $region9: #{schnet_forward.7} parent=5 // pred_check
      _
    $region10: #{schnet_forward.7} parent=5 // pred_check_branch
      %548 = sbr.rel (%p545) target = $region12
    $region11: #{schnet_forward.7} parent=5 // pred_region
      %s549 = ssub.s32 %s32, 1
      // Predicated region
      $region13: #{schnet_forward.7} parent=11 // pred_check
        %p550 = pneg %p53
      $region14: #{schnet_forward.7} parent=11 // pred_check_branch
        %552 = sbr.rel (%p550) target = $region16
      $region15: #{schnet_forward.7} parent=11 // pred_region
        _
      $region16: #{schnet_forward.7} parent=11 // pred_fallthru
        _
      // Predicated region
      $region17: #{schnet_forward.7} parent=11 // pred_check
        %p553 = pneg %p178
      $region18: #{schnet_forward.7} parent=11 // pred_check_branch
        %555 = sbr.rel (%p553) target = $region20
      $region19: #{schnet_forward.7} parent=11 // pred_region
        _
      $region20: #{schnet_forward.7} parent=11 // pred_fallthru
        _
      // Predicated region
      $region21: #{schnet_forward.7} parent=11 // pred_check
        %p556 = pneg %p199
      $region22: #{schnet_forward.7} parent=11 // pred_check_branch
        %558 = sbr.rel (%p556) target = $region24
      $region23: #{schnet_forward.7} parent=11 // pred_region
        _
      $region24: #{schnet_forward.7} parent=11 // pred_fallthru
        _
      // Predicated region
      $region25: #{schnet_forward.7} parent=11 // pred_check
        %p559 = pneg %p220
      $region26: #{schnet_forward.7} parent=11 // pred_check_branch
        %561 = sbr.rel (%p559) target = $region28
      $region27: #{schnet_forward.7} parent=11 // pred_region
        _
      $region28: #{schnet_forward.7} parent=11 // pred_fallthru
        _
      // Predicated region
      $region29: #{schnet_forward.7} parent=11 // pred_check
        %p562 = pneg %p241
      $region30: #{schnet_forward.7} parent=11 // pred_check_branch
        %564 = sbr.rel (%p562) target = $region32
      $region31: #{schnet_forward.7} parent=11 // pred_region
        _
      $region32: #{schnet_forward.7} parent=11 // pred_fallthru
        _
      // Predicated region
      $region33: #{schnet_forward.7} parent=11 // pred_check
        %p565 = pneg %p262
      $region34: #{schnet_forward.7} parent=11 // pred_check_branch
        %567 = sbr.rel (%p565) target = $region36
      $region35: #{schnet_forward.7} parent=11 // pred_region
        _
      $region36: #{schnet_forward.7} parent=11 // pred_fallthru
        _
      // Predicated region
      $region37: #{schnet_forward.7} parent=11 // pred_check
        %p568 = pneg %p283
      $region38: #{schnet_forward.7} parent=11 // pred_check_branch
        %570 = sbr.rel (%p568) target = $region40
      $region39: #{schnet_forward.7} parent=11 // pred_region
        _
      $region40: #{schnet_forward.7} parent=11 // pred_fallthru
        _
      // Predicated region
      $region41: #{schnet_forward.7} parent=11 // pred_check
        %p571 = pneg %p304
      $region42: #{schnet_forward.7} parent=11 // pred_check_branch
        %573 = sbr.rel (%p571) target = $region44
      $region43: #{schnet_forward.7} parent=11 // pred_region
        _
      $region44: #{schnet_forward.7} parent=11 // pred_fallthru
        _
      // Predicated region
      $region45: #{schnet_forward.7} parent=11 // pred_check
        %p574 = pneg %p325
      $region46: #{schnet_forward.7} parent=11 // pred_check_branch
        %576 = sbr.rel (%p574) target = $region48
      $region47: #{schnet_forward.7} parent=11 // pred_region
        _
      $region48: #{schnet_forward.7} parent=11 // pred_fallthru
        _
      // Predicated region
      $region49: #{schnet_forward.7} parent=11 // pred_check
        %p577 = pneg %p346
      $region50: #{schnet_forward.7} parent=11 // pred_check_branch
        %579 = sbr.rel (%p577) target = $region52
      $region51: #{schnet_forward.7} parent=11 // pred_region
        _
      $region52: #{schnet_forward.7} parent=11 // pred_fallthru
        _
      // Predicated region
      $region53: #{schnet_forward.7} parent=11 // pred_check
        %p580 = pneg %p367
      $region54: #{schnet_forward.7} parent=11 // pred_check_branch
        %582 = sbr.rel (%p580) target = $region56
      $region55: #{schnet_forward.7} parent=11 // pred_region
        _
      $region56: #{schnet_forward.7} parent=11 // pred_fallthru
        _
      // Predicated region
      $region57: #{schnet_forward.7} parent=11 // pred_check
        %p583 = pneg %p388
      $region58: #{schnet_forward.7} parent=11 // pred_check_branch
        %585 = sbr.rel (%p583) target = $region60
      $region59: #{schnet_forward.7} parent=11 // pred_region
        _
      $region60: #{schnet_forward.7} parent=11 // pred_fallthru
        _
      // Predicated region
      $region61: #{schnet_forward.7} parent=11 // pred_check
        %p586 = pneg %p409
      $region62: #{schnet_forward.7} parent=11 // pred_check_branch
        %588 = sbr.rel (%p586) target = $region64
      $region63: #{schnet_forward.7} parent=11 // pred_region
        _
      $region64: #{schnet_forward.7} parent=11 // pred_fallthru
        _
      // Predicated region
      $region65: #{schnet_forward.7} parent=11 // pred_check
        %p589 = pneg %p430
      $region66: #{schnet_forward.7} parent=11 // pred_check_branch
        %591 = sbr.rel (%p589) target = $region68
      $region67: #{schnet_forward.7} parent=11 // pred_region
        _
      $region68: #{schnet_forward.7} parent=11 // pred_fallthru
        _
      // Predicated region
      $region69: #{schnet_forward.7} parent=11 // pred_check
        %p592 = pneg %p451
      $region70: #{schnet_forward.7} parent=11 // pred_check_branch
        %594 = sbr.rel (%p592) target = $region72
      $region71: #{schnet_forward.7} parent=11 // pred_region
        _
      $region72: #{schnet_forward.7} parent=11 // pred_fallthru
        _
      // Predicated region
      $region73: #{schnet_forward.7} parent=11 // pred_check
        %p595 = pneg %p472
      $region74: #{schnet_forward.7} parent=11 // pred_check_branch
        %597 = sbr.rel (%p595) target = $region76
      $region75: #{schnet_forward.7} parent=11 // pred_region
        _
      $region76: #{schnet_forward.7} parent=11 // pred_fallthru
        _
      // Predicated region
      $region77: #{schnet_forward.7} parent=11 // pred_check
        %p598 = pneg %p493
      $region78: #{schnet_forward.7} parent=11 // pred_check_branch
        %600 = sbr.rel (%p598) target = $region80
      $region79: #{schnet_forward.7} parent=11 // pred_region
        _
      $region80: #{schnet_forward.7} parent=11 // pred_fallthru
        _
      // Predicated region
      $region81: #{schnet_forward.7} parent=11 // pred_check
        %p601 = pneg %p514
      $region82: #{schnet_forward.7} parent=11 // pred_check_branch
        %603 = sbr.rel (%p601) target = $region84
      $region83: #{schnet_forward.7} parent=11 // pred_region
        _
      $region84: #{schnet_forward.7} parent=11 // pred_fallthru
        _
    $region12: #{schnet_forward.7} parent=5 // pred_fallthru
      _
    %p604 = scmp.lt.s32.totalorder %s32, 3
    // Predicated region
    $region85: #{schnet_forward.7} parent=5 // pred_check
      %p605 = pneg %p604
    $region86: #{schnet_forward.7} parent=5 // pred_check_branch
      %607 = sbr.rel (%p605) target = $region88
    $region87: #{schnet_forward.7} parent=5 // pred_region
      // Predicated region
      $region89: #{schnet_forward.7} parent=87 // pred_check
        %p608 = pneg %p73
      $region90: #{schnet_forward.7} parent=87 // pred_check_branch
        %610 = sbr.rel (%p608) target = $region92
      $region91: #{schnet_forward.7} parent=87 // pred_region
        %s611 = smul.u32 2, %s32
        %p612 = scmp.lt.s32.totalorder %s611, 5
        %s613 = scalar_select %p612, %s611, 5
        %s614 = smul.addr %s613, 8
        %s615 = scalar_lea.vmem %s1, %s614
        %s616 = smul.u32 2, %s32
      $region92: #{schnet_forward.7} parent=87 // pred_fallthru
        _
      // Predicated region
      $region93: #{schnet_forward.7} parent=87 // pred_check
        %p617 = pneg %p99
      $region94: #{schnet_forward.7} parent=87 // pred_check_branch
        %619 = sbr.rel (%p617) target = $region96
      $region95: #{schnet_forward.7} parent=87 // pred_region
        %s620 = smul.u32 2, %s32
        %p621 = scmp.lt.s32.totalorder %s620, 5
        %s622 = scalar_select %p621, %s620, 5
        %s623 = smul.addr %s622, 8
        %s624 = scalar_lea.vmem %s2, %s623
        %s625 = smul.u32 2, %s32
      $region96: #{schnet_forward.7} parent=87 // pred_fallthru
        _
      // Predicated region
      $region97: #{schnet_forward.7} parent=87 // pred_check
        %p626 = pneg %p125
      $region98: #{schnet_forward.7} parent=87 // pred_check_branch
        %628 = sbr.rel (%p626) target = $region100
      $region99: #{schnet_forward.7} parent=87 // pred_region
        %s629 = smul.u32 2, %s32
        %p630 = scmp.lt.s32.totalorder %s629, 5
        %s631 = scalar_select %p630, %s629, 5
        %s632 = smul.addr %s631, 8
        %s633 = scalar_lea.vmem %s3, %s632
        %s634 = smul.u32 2, %s32
      $region100: #{schnet_forward.7} parent=87 // pred_fallthru
        _
      // Predicated region
      $region101: #{schnet_forward.7} parent=87 // pred_check
        %p635 = pneg %p151
      $region102: #{schnet_forward.7} parent=87 // pred_check_branch
        %637 = sbr.rel (%p635) target = $region104
      $region103: #{schnet_forward.7} parent=87 // pred_region
        %s638 = smul.u32 2, %s32
        %p639 = scmp.lt.s32.totalorder %s638, 5
        %s640 = scalar_select %p639, %s638, 5
        %s641 = smul.addr %s640, 8
        %s642 = scalar_lea.vmem %s4, %s641
        %s643 = smul.u32 2, %s32
      $region104: #{schnet_forward.7} parent=87 // pred_fallthru
        _
    $region88: #{schnet_forward.7} parent=5 // pred_fallthru
      _
    %p644 = scmp.le.s32.totalorder 1, %s32
    %p645 = scmp.lt.s32.totalorder %s32, 4
    %p646 = pnand %p644, %p645
    %p647 = pneg %p646
    // Predicated region
    $region105: #{schnet_forward.7} parent=5 // pred_check
      _
    $region106: #{schnet_forward.7} parent=5 // pred_check_branch
      %649 = sbr.rel (%p646) target = $region108
    $region107: #{schnet_forward.7} parent=5 // pred_region
      %s650 = ssub.s32 %s32, 1
      %p651 = pneg %p53
      %p652 = pneg %p50
      %s653 = smul.u32 2, %s37
      %p654 = scmp.lt.s32.totalorder %s653, 5
      %s655 = scalar_select %p654, %s653, 5
      %s656 = smul.addr %s655, 8
      %s657 = scalar_lea.vmem %s1, %s656
      %p658 = pneg %p79
      %p659 = pneg %p76
      %s660 = smul.u32 2, %s37
      %p661 = scmp.lt.s32.totalorder %s660, 5
      %s662 = scalar_select %p661, %s660, 5
      %s663 = smul.addr %s662, 8
      %s664 = scalar_lea.vmem %s2, %s663
      %p665 = pneg %p105
      %p666 = pneg %p102
      %s667 = smul.u32 2, %s37
      %p668 = scmp.lt.s32.totalorder %s667, 5
      %s669 = scalar_select %p668, %s667, 5
      %s670 = smul.addr %s669, 8
      %s671 = scalar_lea.vmem %s3, %s670
      %p672 = pneg %p131
      %p673 = pneg %p128
      %s674 = smul.u32 2, %s37
      %p675 = scmp.lt.s32.totalorder %s674, 5
      %s676 = scalar_select %p675, %s674, 5
      %s677 = smul.addr %s676, 8
      %s678 = scalar_lea.vmem %s4, %s677
      %p679 = pneg %p157
      %p680 = pneg %p154
      %p681 = pneg %p178
      %p682 = pneg %p175
      %p683 = pneg %p199
      %p684 = pneg %p196
      %p685 = pneg %p220
      %p686 = pneg %p217
      %p687 = pneg %p241
      %p688 = pneg %p238
      %p689 = pneg %p262
      %p690 = pneg %p259
      %p691 = pneg %p283
      %p692 = pneg %p280
      %p693 = pneg %p304
      %p694 = pneg %p301
      %p695 = pneg %p325
      %p696 = pneg %p322
      %p697 = pneg %p346
      %p698 = pneg %p343
      %p699 = pneg %p367
      %p700 = pneg %p364
      %p701 = pneg %p388
      %p702 = pneg %p385
      %p703 = pneg %p409
      %p704 = pneg %p406
      %p705 = pneg %p430
      %p706 = pneg %p427
      %p707 = pneg %p451
      %p708 = pneg %p448
      %p709 = pneg %p472
      %p710 = pneg %p469
      %p711 = pneg %p493
      %p712 = pneg %p490
      %p713 = pneg %p514
      %p714 = pneg %p511
      %p715 = pneg %p535
      %p716 = pneg %p532
      %s717 = smul.u32 2, %s37
      %p718 = scmp.lt.s32.totalorder %s717, 5
      %s719 = scalar_select %p718, %s717, 5
      %s720 = smul.addr %s719, 8
      %s721 = scalar_lea.vmem %s1, %s720
      %s722 = smul.u32 2, %s37
      %s723 = smul.u32 2, %s37
      %p724 = scmp.lt.s32.totalorder %s723, 5
      %s725 = scalar_select %p724, %s723, 5
      %s726 = smul.addr %s725, 8
      %s727 = scalar_lea.vmem %s2, %s726
      %s728 = smul.u32 2, %s37
      %s729 = smul.u32 2, %s37
      %p730 = scmp.lt.s32.totalorder %s729, 5
      %s731 = scalar_select %p730, %s729, 5
      %s732 = smul.addr %s731, 8
      %s733 = scalar_lea.vmem %s3, %s732
      %s734 = smul.u32 2, %s37
      %s735 = smul.u32 2, %s37
      %p736 = scmp.lt.s32.totalorder %s735, 5
      %s737 = scalar_select %p736, %s735, 5
      %s738 = smul.addr %s737, 8
      %s739 = scalar_lea.vmem %s4, %s738
      %s740 = smul.u32 2, %s37
      %p741 = scmp.eq.s32.totalorder %s37, 0
      // Predicated region
      $region109: #{schnet_forward.7} parent=107 // pred_check
        %p742 = pneg %p741
      $region110: #{schnet_forward.7} parent=107 // pred_check_branch
        %744 = sbr.rel (%p742) target = $region112
      $region111: #{schnet_forward.7} parent=107 // pred_region
        %v745 = vld [vmem:[%s0] sm:$0xff]
        %v746 = vld [vmem:[%s0 + $0x8] sm:$0xff]
        %v747 = vld [vmem:[%s5] sm:$0xff]
        %v748 = vld [vmem:[%s5 + $0x8] sm:$0xff]
        %v749 = vld [vmem:[%s5 + $0x10] sm:$0xff]
        %v750 = vld [vmem:[%s5 + $0x18] sm:$0xff]
        %v751 = vld [vmem:[%s5 + $0x20] sm:$0xff]
        %v752 = vld [vmem:[%s5 + $0x28] sm:$0xff]
        %v753 = vld [vmem:[%s5 + $0x30] sm:$0xff]
        %v754 = vld [vmem:[%s5 + $0x38] sm:$0xff]
        %v755 = vld [vmem:[%s5 + $0x40] sm:$0xff]
        %v756 = vld [vmem:[%s5 + $0x48] sm:$0xff]
        %v757 = vld [vmem:[%s5 + $0x50] sm:$0xff]
        %v758 = vld [vmem:[%s5 + $0x58] sm:$0xff]
        %v759 = vld [vmem:[%s5 + $0x60] sm:$0xff]
        %v760 = vld [vmem:[%s5 + $0x68] sm:$0xff]
        %v761 = vld [vmem:[%s5 + $0x70] sm:$0xff]
        %v762 = vld [vmem:[%s5 + $0x78] sm:$0xff]
        %v763 = vld [vmem:[%s6] sm:$0x1]
        %v765 = vlaneseq
        %v766 = vshrl.u32 %v765, 7
        %v767 = vsub.s32 0, %v766
        %v768 = vrot.slane %v763, %v767
        %770 = vmatprep.subr.mxu0 0.0
        %771 = vmatpush1.msra.mxu0 %v747
        %772 = vmatprep.subr.mxu0 0.0
        %773 = vmatpush1.msra.mxu0 %v748
        %774 = vmatprep.subr.mxu0 0.0
        %775 = vmatpush1.msra.mxu0 %v749
        %776 = vmatprep.subr.mxu0 0.0
        %777 = vmatpush1.msra.mxu0 %v750
        %778 = vmatprep.subr.mxu0 0.0
        %779 = vmatpush1.msra.mxu0 %v751
        %780 = vmatprep.subr.mxu0 0.0
        %781 = vmatpush1.msra.mxu0 %v752
        %782 = vmatprep.subr.mxu0 0.0
        %783 = vmatpush1.msra.mxu0 %v753
        %784 = vmatprep.subr.mxu0 0.0
        %785 = vmatpush1.msra.mxu0 %v754
        %786 = vmatprep.subr.mxu0 0.0
        %787 = vmatpush1.msra.mxu0 %v755
        %788 = vmatprep.subr.mxu0 0.0
        %789 = vmatpush1.msra.mxu0 %v756
        %790 = vmatprep.subr.mxu0 0.0
        %791 = vmatpush1.msra.mxu0 %v757
        %792 = vmatprep.subr.mxu0 0.0
        %793 = vmatpush1.msra.mxu0 %v758
        %794 = vmatprep.subr.mxu0 0.0
        %795 = vmatpush1.msra.mxu0 %v759
        %796 = vmatprep.subr.mxu0 0.0
        %797 = vmatpush1.msra.mxu0 %v760
        %798 = vmatprep.subr.mxu0 0.0
        %799 = vmatpush1.msra.mxu0 %v761
        %800 = vmatprep.subr.mxu0 0.0
        %801 = vmatpush1.msra.mxu0 %v762
        %802 = vmatprep.subr.mxu0 0.0
        %803 = vmatpush1.msra.mxu0 0.0
        %804 = vmatprep.subr.mxu0 0.0
        %805 = vmatpush1.msra.mxu0 0.0
        %806 = vmatprep.subr.mxu0 0.0
        %807 = vmatpush1.msra.mxu0 0.0
        %808 = vmatprep.subr.mxu0 0.0
        %809 = vmatpush1.msra.mxu0 0.0
        %810 = vmatprep.subr.mxu0 0.0
        %811 = vmatpush1.msra.mxu0 0.0
        %812 = vmatprep.subr.mxu0 0.0
        %813 = vmatpush1.msra.mxu0 0.0
        %814 = vmatprep.subr.mxu0 0.0
        %815 = vmatpush1.msra.mxu0 0.0
        %816 = vmatprep.subr.mxu0 0.0
        %817 = vmatpush1.msra.mxu0 0.0
        %818 = vmatprep.subr.mxu0 0.0
        %819 = vmatpush1.msra.mxu0 0.0
        %820 = vmatprep.subr.mxu0 0.0
        %821 = vmatpush1.msra.mxu0 0.0
        %822 = vmatprep.subr.mxu0 0.0
        %823 = vmatpush1.msra.mxu0 0.0
        %824 = vmatprep.subr.mxu0 0.0
        %825 = vmatpush1.msra.mxu0 0.0
        %826 = vmatprep.subr.mxu0 0.0
        %827 = vmatpush1.msra.mxu0 0.0
        %828 = vmatprep.subr.mxu0 0.0
        %829 = vmatpush1.msra.mxu0 0.0
        %830 = vmatprep.subr.mxu0 0.0
        %831 = vmatpush1.msra.mxu0 0.0
        %832 = vmatprep.subr.mxu0 0.0
        %833 = vmatpush1.msra.mxu0 0.0
        %834 = vmatprep.mubr.f32.mxu0 0.0
        %835 = vmatmul.mubr.f32.gmra.mrb[0].mxu0 %v745
        %v836 = vpop.f32.mrb[0].mxu0
        %v837 = vadd.f32 %v768, %v836
        %v838 = vpop.f32.mrb[0].mxu0
        %839 = vmatprep.mubr.f32.mxu0 0.0
        %840 = vmatmul.mubr.f32.gmra.mrb[0].mxu0 %v746
        %v841 = vpop.f32.mrb[0].mxu0
        %v842 = vadd.f32 %v768, %v841
        %v843 = vpop.f32.mrb[0].mxu0
        %844 = vdwg.mxu0
        %v845 = vld [vmem:[%s7] sm:$0x1]
        %v846 = vld [vmem:[%s8] sm:$0x1]
        %vm847 = vcmask 523264
        %v848 = vsel %vm847, %v837, 0.0
        %v849 = vsel %vm847, %v842, 0.0
        %v850 = vadd.f32 %v848, %v849
        %v851 = vrot.slane %v850, 4
        %v852 = vadd.f32 %v850, %v851
        %v853 = vrot.slane %v852, 2
        %v854 = vadd.f32 %v852, %v853
        %v855 = vrot.slane %v854, 1
        %v856 = vadd.f32 %v854, %v855
        %v857 = vrcp.pop 16.0
        %v858 = vmul.f32 %v856, %v857
        %v859 = vsub.f32 %v837, %v858
        %v860 = vsub.f32 %v842, %v858
        %v861 = vmul.f32 %v859, %v859
        %v862 = vmul.f32 %v860, %v860
        %v863 = vsel %vm847, %v861, 0.0
        %v864 = vsel %vm847, %v862, 0.0
        %v865 = vadd.f32 %v863, %v864
        %v866 = vrot.slane %v865, 4
        %v867 = vadd.f32 %v865, %v866
        %v868 = vrot.slane %v867, 2
        %v869 = vadd.f32 %v867, %v868
        %v870 = vrot.slane %v869, 1
        %v871 = vadd.f32 %v869, %v870
        %v872 = vmul.f32 %v871, %v857
        %v873 = vadd.f32 %v872, 1e-05
        %v874 = vrsqrt.pop %v873
        %v875 = vmul.f32 %v859, %v874
        %v876 = vmul.f32 %v860, %v874
        %v878 = vlaneseq
        %v879 = vshrl.u32 %v878, 7
        %v880 = vsub.s32 0, %v879
        %v881 = vrot.slane %v845, %v880
        %v883 = vmul.f32 %v875, %v881
        %v884 = vmul.f32 %v876, %v881
        %v886 = vlaneseq
        %v887 = vshrl.u32 %v886, 7
        %v888 = vsub.s32 0, %v887
        %v889 = vrot.slane %v846, %v888
        %v891 = vadd.f32 %v883, %v889
        %v892 = vadd.f32 %v884, %v889
        %vm893 = vcmp.ge.f32.partialorder %v891, 0.0
        %vm894 = vcmp.ge.f32.partialorder %v892, 0.0
        %v895 = vmul.f32 %v891, 0.2
        %v896 = vmul.f32 %v892, 0.2
        %v897 = vsel %vm893, %v891, %v895
        %v898 = vsel %vm894, %v892, %v896
        %899 = vst.msk [vmem:[#allocation2] sm:$0xff] %vm847, %v897
        %900 = vst.msk [vmem:[#allocation2 + $0x8] sm:$0xff] %vm847, %v898
        %901 = vst.msk [vmem:[#allocation3] sm:$0xff] %vm847, 0.0
        %902 = vst.msk [vmem:[#allocation3 + $0x8] sm:$0xff] %vm847, 0.0
      $region112: #{schnet_forward.7} parent=107 // pred_fallthru
        _
      %v903 = vld [vmem:[%s721] sm:$0xff]
      %v904 = vld [vmem:[%s721 + $0x8] sm:$0xff]
      %v905 = vld [vmem:[%s14] sm:$0x1]
      %907 = vset.pattern.permute.xlu0 0
      %908 = vperm.xlu0 %907, %v903
      %v909 = vpop.permute.xlu0 %908
      %912 = vset.pattern.permute.xlu0 0
      %913 = vperm.xlu0 %912, %v904
      %v914 = vpop.permute.xlu0 %913
      %v917 = vlaneseq
      %v918 = vshrl.u32 %v917, 7
      %v919 = vsub.s32 0, %v918
      %v920 = vrot.slane %v905, %v919
      %v922 = vmul.f32 %v909, %v920
      %v923 = vmul.f32 %v914, %v920
      %v924 = vld [vmem:[%s15] sm:$0x1]
      %v926 = vlaneseq
      %v927 = vshrl.u32 %v926, 7
      %v928 = vsub.s32 0, %v927
      %v929 = vrot.slane %v924, %v928
      %v931 = vadd.f32 %v922, %v929
      %v932 = vadd.f32 %v923, %v929
      %v933 = vmax.f32 %v931, 0.0
      %v934 = vmax.f32 %v932, 0.0
      %v935 = vld [vmem:[%s16] sm:$0x1]
      %v937 = vlaneseq
      %v938 = vshrl.u32 %v937, 7
      %v939 = vsub.s32 0, %v938
      %v940 = vrot.slane %v935, %v939
      %v942 = vmul.f32 %v933, %v940
      %v943 = vmul.f32 %v934, %v940
      %vm944 = vcmask 261120
      %v945 = vsel %vm944, %v942, 0.0
      %946 = vadd.xlane.f32.xlu0 %v945
      %v947 = vpop.xlane.xlu0 %946
      %v948 = vsel %vm944, %v943, 0.0
      %949 = vadd.xlane.f32.xlu0 %v948
      %v950 = vpop.xlane.xlu0 %949
      %v951 = vld [vmem:[#allocation5] sm:$0x1]
      %v953 = vlaneseq
      %v954 = vshrl.u32 %v953, 7
      %v955 = vsub.s32 0, %v954
      %v956 = vrot.slane %v951, %v955
      %v958 = vadd.f32 %v947, %v956
      %v959 = vadd.f32 %v950, %v956
      %v960 = vsub.f32 0.0, %v958
      %v961 = vsub.f32 0.0, %v959
      %v962 = vmul.f32 %v960, 1.442695
      %v963 = vpow.pop %v962
      %v964 = vmul.f32 %v961, 1.442695
      %v965 = vpow.pop %v964
      %v966 = vadd.f32 %v963, 1.0
      %v967 = vadd.f32 %v965, 1.0
      %v968 = vrcp.pop %v966
      %v969 = vmul.f32 1.0, %v968
      %v970 = vrcp.pop %v967
      %v971 = vmul.f32 1.0, %v970
      %v972 = vsub.f32 %v903, 10.0
      %v973 = vsub.f32 %v904, 10.0
      %v974 = vmul.f32 %v972, %v972
      %v975 = vmul.f32 %v973, %v973
      %v976 = vsub.f32 0.0, %v974
      %v977 = vsub.f32 0.0, %v975
      %v978 = vrcp.pop 200.0
      %v979 = vmul.f32 %v976, %v978
      %v980 = vmul.f32 %v977, %v978
      %v981 = vmul.f32 %v979, 1.442695
      %v982 = vpow.pop %v981
      %v983 = vmul.f32 %v980, 1.442695
      %v984 = vpow.pop %v983
      %vm985 = vcmp.le.f32.partialorder %v903, 10.0
      %vm986 = vcmp.le.f32.partialorder %v904, 10.0
      %v987 = vsel %vm985, 1, 0
      %v988 = vsel %vm986, 1, 0
      %v989 = vcvt.s32.f32 %v987
      %v990 = vcvt.s32.f32 %v988
      %v991 = vmul.f32 %v982, %v989
      %v992 = vmul.f32 %v984, %v990
      %vm993 = vcmp.ge.f32.partialorder %v903, 0.0
      %vm994 = vcmp.ge.f32.partialorder %v904, 0.0
      %v995 = vsel %vm993, 1, 0
      %v996 = vsel %vm994, 1, 0
      %v997 = vcvt.s32.f32 %v995
      %v998 = vcvt.s32.f32 %v996
      %v999 = vmul.f32 %v991, %v997
      %v1000 = vmul.f32 %v992, %v998
      %v1001 = vmul.f32 %v969, %v999
      %v1002 = vmul.f32 %v971, %v1000
      %v1003 = vld [vmem:[%s727] sm:$0xff]
      %v1004 = vld [vmem:[%s727 + $0x8] sm:$0xff]
      %v1005 = vld [vmem:[%s9] sm:$0xff]
      %v1006 = vld [vmem:[%s9 + $0x8] sm:$0xff]
      %v1007 = vld [vmem:[%s9 + $0x10] sm:$0xff]
      %v1008 = vld [vmem:[%s9 + $0x18] sm:$0xff]
      %v1009 = vld [vmem:[%s9 + $0x20] sm:$0xff]
      %v1010 = vld [vmem:[%s9 + $0x28] sm:$0xff]
      %v1011 = vld [vmem:[%s9 + $0x30] sm:$0xff]
      %v1012 = vld [vmem:[%s9 + $0x38] sm:$0xff]
      %v1013 = vld [vmem:[%s9 + $0x40] sm:$0xff]
      %v1014 = vld [vmem:[%s9 + $0x48] sm:$0xff]
      %v1015 = vld [vmem:[%s9 + $0x50] sm:$0xff]
      %v1016 = vld [vmem:[%s9 + $0x58] sm:$0xff]
      %v1017 = vld [vmem:[%s9 + $0x60] sm:$0xff]
      %v1018 = vld [vmem:[%s9 + $0x68] sm:$0xff]
      %v1019 = vld [vmem:[%s9 + $0x70] sm:$0xff]
      %v1020 = vld [vmem:[%s9 + $0x78] sm:$0xff]
      %v1021 = vld [vmem:[%s10] sm:$0x1]
      %v1023 = vlaneseq
      %v1024 = vshrl.u32 %v1023, 7
      %v1025 = vsub.s32 0, %v1024
      %v1026 = vrot.slane %v1021, %v1025
      %1028 = vmatprep.subr.mxu0 0.0
      %1029 = vmatpush1.msra.mxu0 %v1005
      %1030 = vmatprep.subr.mxu0 0.0
      %1031 = vmatpush1.msra.mxu0 %v1006
      %1032 = vmatprep.subr.mxu0 0.0
      %1033 = vmatpush1.msra.mxu0 %v1007
      %1034 = vmatprep.subr.mxu0 0.0
      %1035 = vmatpush1.msra.mxu0 %v1008
      %1036 = vmatprep.subr.mxu0 0.0
      %1037 = vmatpush1.msra.mxu0 %v1009
      %1038 = vmatprep.subr.mxu0 0.0
      %1039 = vmatpush1.msra.mxu0 %v1010
      %1040 = vmatprep.subr.mxu0 0.0
      %1041 = vmatpush1.msra.mxu0 %v1011
      %1042 = vmatprep.subr.mxu0 0.0
      %1043 = vmatpush1.msra.mxu0 %v1012
      %1044 = vmatprep.subr.mxu0 0.0
      %1045 = vmatpush1.msra.mxu0 %v1013
      %1046 = vmatprep.subr.mxu0 0.0
      %1047 = vmatpush1.msra.mxu0 %v1014
      %1048 = vmatprep.subr.mxu0 0.0
      %1049 = vmatpush1.msra.mxu0 %v1015
      %1050 = vmatprep.subr.mxu0 0.0
      %1051 = vmatpush1.msra.mxu0 %v1016
      %1052 = vmatprep.subr.mxu0 0.0
      %1053 = vmatpush1.msra.mxu0 %v1017
      %1054 = vmatprep.subr.mxu0 0.0
      %1055 = vmatpush1.msra.mxu0 %v1018
      %1056 = vmatprep.subr.mxu0 0.0
      %1057 = vmatpush1.msra.mxu0 %v1019
      %1058 = vmatprep.subr.mxu0 0.0
      %1059 = vmatpush1.msra.mxu0 %v1020
      %1060 = vmatprep.subr.mxu0 0.0
      %1061 = vmatpush1.msra.mxu0 0.0
      %1062 = vmatprep.subr.mxu0 0.0
      %1063 = vmatpush1.msra.mxu0 0.0
      %1064 = vmatprep.subr.mxu0 0.0
      %1065 = vmatpush1.msra.mxu0 0.0
      %1066 = vmatprep.subr.mxu0 0.0
      %1067 = vmatpush1.msra.mxu0 0.0
      %1068 = vmatprep.subr.mxu0 0.0
      %1069 = vmatpush1.msra.mxu0 0.0
      %1070 = vmatprep.subr.mxu0 0.0
      %1071 = vmatpush1.msra.mxu0 0.0
      %1072 = vmatprep.subr.mxu0 0.0
      %1073 = vmatpush1.msra.mxu0 0.0
      %1074 = vmatprep.subr.mxu0 0.0
      %1075 = vmatpush1.msra.mxu0 0.0
      %1076 = vmatprep.subr.mxu0 0.0
      %1077 = vmatpush1.msra.mxu0 0.0
      %1078 = vmatprep.subr.mxu0 0.0
      %1079 = vmatpush1.msra.mxu0 0.0
      %1080 = vmatprep.subr.mxu0 0.0
      %1081 = vmatpush1.msra.mxu0 0.0
      %1082 = vmatprep.subr.mxu0 0.0
      %1083 = vmatpush1.msra.mxu0 0.0
      %1084 = vmatprep.subr.mxu0 0.0
      %1085 = vmatpush1.msra.mxu0 0.0
      %1086 = vmatprep.subr.mxu0 0.0
      %1087 = vmatpush1.msra.mxu0 0.0
      %1088 = vmatprep.subr.mxu0 0.0
      %1089 = vmatpush1.msra.mxu0 0.0
      %1090 = vmatprep.subr.mxu0 0.0
      %1091 = vmatpush1.msra.mxu0 0.0
      %1092 = vmatprep.mubr.f32.mxu0 0.0
      %1093 = vmatmul.mubr.f32.gmra.mrb[0].mxu0 %v1003
      %v1094 = vpop.f32.mrb[0].mxu0
      %v1095 = vadd.f32 %v1026, %v1094
      %v1096 = vpop.f32.mrb[0].mxu0
      %1097 = vmatprep.mubr.f32.mxu0 0.0
      %1098 = vmatmul.mubr.f32.gmra.mrb[0].mxu0 %v1004
      %v1099 = vpop.f32.mrb[0].mxu0
      %v1100 = vadd.f32 %v1026, %v1099
      %v1101 = vpop.f32.mrb[0].mxu0
      %1102 = vdwg.mxu0
      %v1103 = vld [vmem:[#allocation4] sm:$0x1]
      %v1105 = vlaneseq
      %v1106 = vshrl.u32 %v1105, 7
      %v1107 = vsub.s32 0, %v1106
      %v1108 = vrot.slane %v1103, %v1107
      %1109 = vset.pattern.permute.xlu0 0
      %1110 = vperm.xlu0 %1109, %v1108
      %v1111 = vpop.permute.xlu0 %1110
      %v1113 = vmul.f32 %v1111, %v1095
      %v1114 = vmul.f32 %v1111, %v1100
      %v1115 = vmax.f32 %v1113, 0.0
      %v1116 = vmax.f32 %v1114, 0.0
      %v1117 = vand.u32 2147483647, %v1113
      %v1118 = vand.u32 2147483647, %v1114
      %v1119 = vsub.f32 0.0, %v1117
      %v1120 = vsub.f32 0.0, %v1118
      %v1121 = vmul.f32 %v1119, 1.442695
      %v1122 = vpow.pop %v1121
      %v1123 = vmul.f32 %v1120, 1.442695
      %v1124 = vpow.pop %v1123
      %v1125 = vadd.f32 %v1122, 1.0
      %v1126 = vadd.f32 %v1124, 1.0
      %v1127 = vlog2.pop %v1125
      %v1128 = vmul.f32 %v1127, 0.6931472
      %v1129 = vlog2.pop %v1126
      %v1130 = vmul.f32 %v1129, 0.6931472
      %v1131 = vadd.f32 %v1115, %v1128
      %v1132 = vadd.f32 %v1116, %v1130
      %v1133 = vsub.f32 %v1131, 0.6931472
      %v1134 = vsub.f32 %v1132, 0.6931472
      %v1135 = vld [vmem:[%s12] sm:$0xff]
      %v1136 = vld [vmem:[%s12 + $0x8] sm:$0xff]
      %v1137 = vld [vmem:[%s12 + $0x10] sm:$0xff]
      %v1138 = vld [vmem:[%s12 + $0x18] sm:$0xff]
      %v1139 = vld [vmem:[%s12 + $0x20] sm:$0xff]
      %v1140 = vld [vmem:[%s12 + $0x28] sm:$0xff]
      %v1141 = vld [vmem:[%s12 + $0x30] sm:$0xff]
      %v1142 = vld [vmem:[%s12 + $0x38] sm:$0xff]
      %v1143 = vld [vmem:[%s13] sm:$0x1]
      %v1145 = vlaneseq
      %v1146 = vshrl.u32 %v1145, 7
      %v1147 = vsub.s32 0, %v1146
      %v1148 = vrot.slane %v1143, %v1147
      %vm1150 = vcmask 523264
      %v1152 = vsel %vm1150, %v1133, 0
      %v1155 = vsel %vm1150, %v1134, 0
      %1157 = vmatprep.subr.mxu0 0.0
      %1158 = vmatpush1.msra.mxu0 %v1135
      %1159 = vmatprep.subr.mxu0 0.0
      %1160 = vmatpush1.msra.mxu0 %v1136
      %1161 = vmatprep.subr.mxu0 0.0
      %1162 = vmatpush1.msra.mxu0 %v1137
      %1163 = vmatprep.subr.mxu0 0.0
      %1164 = vmatpush1.msra.mxu0 %v1138
      %1165 = vmatprep.subr.mxu0 0.0
      %1166 = vmatpush1.msra.mxu0 %v1139
      %1167 = vmatprep.subr.mxu0 0.0
      %1168 = vmatpush1.msra.mxu0 %v1140
      %1169 = vmatprep.subr.mxu0 0.0
      %1170 = vmatpush1.msra.mxu0 %v1141
      %1171 = vmatprep.subr.mxu0 0.0
      %1172 = vmatpush1.msra.mxu0 %v1142
      %1173 = vmatprep.subr.mxu0 0.0
      %1174 = vmatpush1.msra.mxu0 0.0
      %1175 = vmatprep.subr.mxu0 0.0
      %1176 = vmatpush1.msra.mxu0 0.0
      %1177 = vmatprep.subr.mxu0 0.0
      %1178 = vmatpush1.msra.mxu0 0.0
      %1179 = vmatprep.subr.mxu0 0.0
      %1180 = vmatpush1.msra.mxu0 0.0
      %1181 = vmatprep.subr.mxu0 0.0
      %1182 = vmatpush1.msra.mxu0 0.0
      %1183 = vmatprep.subr.mxu0 0.0
      %1184 = vmatpush1.msra.mxu0 0.0
      %1185 = vmatprep.subr.mxu0 0.0
      %1186 = vmatpush1.msra.mxu0 0.0
      %1187 = vmatprep.subr.mxu0 0.0
      %1188 = vmatpush1.msra.mxu0 0.0
      %1189 = vmatprep.subr.mxu0 0.0
      %1190 = vmatpush1.msra.mxu0 0.0
      %1191 = vmatprep.subr.mxu0 0.0
      %1192 = vmatpush1.msra.mxu0 0.0
      %1193 = vmatprep.subr.mxu0 0.0
      %1194 = vmatpush1.msra.mxu0 0.0
      %1195 = vmatprep.subr.mxu0 0.0
      %1196 = vmatpush1.msra.mxu0 0.0
      %1197 = vmatprep.subr.mxu0 0.0
      %1198 = vmatpush1.msra.mxu0 0.0
      %1199 = vmatprep.subr.mxu0 0.0
      %1200 = vmatpush1.msra.mxu0 0.0
      %1201 = vmatprep.subr.mxu0 0.0
      %1202 = vmatpush1.msra.mxu0 0.0
      %1203 = vmatprep.subr.mxu0 0.0
      %1204 = vmatpush1.msra.mxu0 0.0
      %1205 = vmatprep.subr.mxu0 0.0
      %1206 = vmatpush1.msra.mxu0 0.0
      %1207 = vmatprep.subr.mxu0 0.0
      %1208 = vmatpush1.msra.mxu0 0.0
      %1209 = vmatprep.subr.mxu0 0.0
      %1210 = vmatpush1.msra.mxu0 0.0
      %1211 = vmatprep.subr.mxu0 0.0
      %1212 = vmatpush1.msra.mxu0 0.0
      %1213 = vmatprep.subr.mxu0 0.0
      %1214 = vmatpush1.msra.mxu0 0.0
      %1215 = vmatprep.subr.mxu0 0.0
      %1216 = vmatpush1.msra.mxu0 0.0
      %1217 = vmatprep.subr.mxu0 0.0
      %1218 = vmatpush1.msra.mxu0 0.0
      %1219 = vmatprep.subr.mxu0 0.0
      %1220 = vmatpush1.msra.mxu0 0.0
      %1221 = vmatprep.mubr.f32.mxu0 0.0
      %1222 = vmatmul.mubr.f32.gmra.mrb[0].mxu0 %v1152
      %v1223 = vpop.f32.mrb[0].mxu0
      %v1224 = vadd.f32 %v1148, %v1223
      %v1225 = vpop.f32.mrb[0].mxu0
      %1226 = vmatprep.mubr.f32.mxu0 0.0
      %1227 = vmatmul.mubr.f32.gmra.mrb[0].mxu0 %v1155
      %v1228 = vpop.f32.mrb[0].mxu0
      %v1229 = vadd.f32 %v1148, %v1228
      %v1230 = vpop.f32.mrb[0].mxu0
      %1231 = vdwg.mxu0
      %1233 = vset.pattern.permute.xlu0 0
      %1234 = vperm.xlu0 %1233, %v1001
      %v1235 = vpop.permute.xlu0 %1234
      %1238 = vset.pattern.permute.xlu0 0
      %1239 = vperm.xlu0 %1238, %v1002
      %v1240 = vpop.permute.xlu0 %1239
      %v1242 = vmul.f32 %v1224, %v1235
      %v1243 = vmul.f32 %v1229, %v1240
      %s1244 = smul.u32 %s37, 16
      %v1245 = vlaneseq
      %v1246 = vshrl.u32 %v1245, 7
      %v1247 = vadd.s32 %v1246, 8
      %v1248 = vstv %s1244
      %v1249 = vadd.s32 %v1248, %v1246
      %v1250 = vadd.s32 %v1248, %v1247
      %vm1251 = vcmp.lt.s32.totalorder %v1249, 40
      %vm1252 = vcmp.lt.s32.totalorder %v1250, 40
      %v1253 = vsel %vm1251, 1, 0
      %v1254 = vsel %vm1252, 1, 0
      %vm1255 = vcmp.eq.s32.totalorder %v1253, 1
      %vm1256 = vcmp.eq.s32.totalorder %v1254, 1
      %v1257 = vsel %vm1255, %v1242, 0.0
      %v1258 = vsel %vm1256, %v1243, 0.0
      %v1259 = vlaneseq
      %v1260 = vand.u32 %v1259, 127
      %v1261 = vld [vmem:[%s733] sm:$0xff]
      %v1262 = vld [vmem:[%s733 + $0x8] sm:$0xff]
      %1263 = vset.pattern.permute.xlu0 0
      %1264 = vperm.xlu0 %1263, %v1261
      %v1265 = vpop.permute.xlu0 %1264
      %1266 = vset.pattern.permute.xlu0 0
      %1267 = vperm.xlu0 %1266, %v1262
      %v1268 = vpop.permute.xlu0 %1267
      %vm1269 = vcmp.eq.s32.totalorder %v1265, %v1260
      %vm1270 = vcmp.eq.s32.totalorder %v1268, %v1260
      %v1271 = vsel %vm1269, 1, 0
      %v1272 = vsel %vm1270, 1, 0
      %v1273 = vcvt.s32.f32 %v1271
      %v1274 = vcvt.s32.f32 %v1272
      %v1275 = vld [vmem:[%s739] sm:$0xff]
      %v1276 = vld [vmem:[%s739 + $0x8] sm:$0xff]
      %1277 = vset.pattern.permute.xlu0 0
      %1278 = vperm.xlu0 %1277, %v1275
      %v1279 = vpop.permute.xlu0 %1278
      %1280 = vset.pattern.permute.xlu0 0
      %1281 = vperm.xlu0 %1280, %v1276
      %v1282 = vpop.permute.xlu0 %1281
      %vm1283 = vcmp.eq.s32.totalorder %v1279, %v1260
      %vm1284 = vcmp.eq.s32.totalorder %v1282, %v1260
      %v1285 = vsel %vm1283, 1, 0
      %v1286 = vsel %vm1284, 1, 0
      %v1287 = vcvt.s32.f32 %v1285
      %v1288 = vcvt.s32.f32 %v1286
      %v1289 = vld [vmem:[#allocation2] sm:$0xff]
      %v1290 = vld [vmem:[#allocation2 + $0x8] sm:$0xff]
      %vm1291 = vcmask 130048
      %v1293 = vsel %vm1291, %v1273, 0
      %v1296 = vsel %vm1291, %v1274, 0
      %1298 = vmatprep.subr.mxu0 0.0
      %1299 = vmatpush1.msra.mxu0 %v1289
      %1300 = vmatprep.subr.mxu0 0.0
      %1301 = vmatpush1.msra.mxu0 %v1290
      %1302 = vmatprep.subr.mxu0 0.0
      %1303 = vmatpush1.msra.mxu0 0.0
      %1304 = vmatprep.subr.mxu0 0.0
      %1305 = vmatpush1.msra.mxu0 0.0
      %1306 = vmatprep.subr.mxu0 0.0
      %1307 = vmatpush1.msra.mxu0 0.0
      %1308 = vmatprep.subr.mxu0 0.0
      %1309 = vmatpush1.msra.mxu0 0.0
      %1310 = vmatprep.subr.mxu0 0.0
      %1311 = vmatpush1.msra.mxu0 0.0
      %1312 = vmatprep.subr.mxu0 0.0
      %1313 = vmatpush1.msra.mxu0 0.0
      %1314 = vmatprep.subr.mxu0 0.0
      %1315 = vmatpush1.msra.mxu0 0.0
      %1316 = vmatprep.subr.mxu0 0.0
      %1317 = vmatpush1.msra.mxu0 0.0
      %1318 = vmatprep.subr.mxu0 0.0
      %1319 = vmatpush1.msra.mxu0 0.0
      %1320 = vmatprep.subr.mxu0 0.0
      %1321 = vmatpush1.msra.mxu0 0.0
      %1322 = vmatprep.subr.mxu0 0.0
      %1323 = vmatpush1.msra.mxu0 0.0
      %1324 = vmatprep.subr.mxu0 0.0
      %1325 = vmatpush1.msra.mxu0 0.0
      %1326 = vmatprep.subr.mxu0 0.0
      %1327 = vmatpush1.msra.mxu0 0.0
      %1328 = vmatprep.subr.mxu0 0.0
      %1329 = vmatpush1.msra.mxu0 0.0
      %1330 = vmatprep.subr.mxu0 0.0
      %1331 = vmatpush1.msra.mxu0 0.0
      %1332 = vmatprep.subr.mxu0 0.0
      %1333 = vmatpush1.msra.mxu0 0.0
      %1334 = vmatprep.subr.mxu0 0.0
      %1335 = vmatpush1.msra.mxu0 0.0
      %1336 = vmatprep.subr.mxu0 0.0
      %1337 = vmatpush1.msra.mxu0 0.0
      %1338 = vmatprep.subr.mxu0 0.0
      %1339 = vmatpush1.msra.mxu0 0.0
      %1340 = vmatprep.subr.mxu0 0.0
      %1341 = vmatpush1.msra.mxu0 0.0
      %1342 = vmatprep.subr.mxu0 0.0
      %1343 = vmatpush1.msra.mxu0 0.0
      %1344 = vmatprep.subr.mxu0 0.0
      %1345 = vmatpush1.msra.mxu0 0.0
      %1346 = vmatprep.subr.mxu0 0.0
      %1347 = vmatpush1.msra.mxu0 0.0
      %1348 = vmatprep.subr.mxu0 0.0
      %1349 = vmatpush1.msra.mxu0 0.0
      %1350 = vmatprep.subr.mxu0 0.0
      %1351 = vmatpush1.msra.mxu0 0.0
      %1352 = vmatprep.subr.mxu0 0.0
      %1353 = vmatpush1.msra.mxu0 0.0
      %1354 = vmatprep.subr.mxu0 0.0
      %1355 = vmatpush1.msra.mxu0 0.0
      %1356 = vmatprep.subr.mxu0 0.0
      %1357 = vmatpush1.msra.mxu0 0.0
      %1358 = vmatprep.subr.mxu0 0.0
      %1359 = vmatpush1.msra.mxu0 0.0
      %1360 = vmatprep.subr.mxu0 0.0
      %1361 = vmatpush1.msra.mxu0 0.0
      %1362 = vmatprep.mubr.f32.mxu0 0.0
      %1363 = vmatmul.mubr.f32.gmra.mrb[0].mxu0 %v1293
      %v1364 = vpop.f32.mrb[0].mxu0
      %v1365 = vadd.f32 0.0, %v1364
      %v1366 = vpop.f32.mrb[0].mxu0
      %1367 = vmatprep.mubr.f32.mxu0 0.0
      %1368 = vmatmul.mubr.f32.gmra.mrb[0].mxu0 %v1296
      %v1369 = vpop.f32.mrb[0].mxu0
      %v1370 = vadd.f32 0.0, %v1369
      %v1371 = vpop.f32.mrb[0].mxu0
      %1372 = vdwg.mxu0
      %v1373 = vmul.f32 %v1365, %v1257
      %v1374 = vmul.f32 %v1370, %v1258
      %v1375 = vld [vmem:[#allocation3] sm:$0xff]
      %v1376 = vld [vmem:[#allocation3 + $0x8] sm:$0xff]
      %1377 = vxpose.xlu0.b32.start [1/16] %v1287, 128
      %1378 = vxpose.xlu0.b32.cont [2/16] %v1288, 128
      %1379 = vxpose.xlu0.b32.cont [3/16] 0.0, 128
      %1380 = vxpose.xlu0.b32.cont [4/16] 0.0, 128
      %1381 = vxpose.xlu0.b32.cont [5/16] 0.0, 128
      %1382 = vxpose.xlu0.b32.cont [6/16] 0.0, 128
      %1383 = vxpose.xlu0.b32.cont [7/16] 0.0, 128
      %1384 = vxpose.xlu0.b32.cont [8/16] 0.0, 128
      %1385 = vxpose.xlu0.b32.cont [9/16] 0.0, 128
      %1386 = vxpose.xlu0.b32.cont [10/16] 0.0, 128
      %1387 = vxpose.xlu0.b32.cont [11/16] 0.0, 128
      %1388 = vxpose.xlu0.b32.cont [12/16] 0.0, 128
      %1389 = vxpose.xlu0.b32.cont [13/16] 0.0, 128
      %1390 = vxpose.xlu0.b32.cont [14/16] 0.0, 128
      %1391 = vxpose.xlu0.b32.cont [15/16] 0.0, 128
      %1392 = vxpose.xlu0.b32.end [16/16] 0.0, 128
      %v1393 = vpop.trf.xlu0
      %v1394 = vpop.trf.xlu0
      %v1395 = vpop.trf.xlu0
      %v1396 = vpop.trf.xlu0
      %v1397 = vpop.trf.xlu0
      %v1398 = vpop.trf.xlu0
      %v1399 = vpop.trf.xlu0
      %v1400 = vpop.trf.xlu0
      %v1401 = vpop.trf.xlu0
      %v1402 = vpop.trf.xlu0
      %v1403 = vpop.trf.xlu0
      %v1404 = vpop.trf.xlu0
      %v1405 = vpop.trf.xlu0
      %v1406 = vpop.trf.xlu0
      %v1407 = vpop.trf.xlu0
      %v1408 = vpop.trf.xlu0
      %v1410 = vsel %vm1291, %v1393, 0
      %v1413 = vsel %vm1291, %v1394, 0
      %1415 = vmatprep.subr.mxu0 0.0
      %1416 = vmatpush1.msra.mxu0 %v1373
      %1417 = vmatprep.subr.mxu0 0.0
      %1418 = vmatpush1.msra.mxu0 %v1374
      %1419 = vmatprep.subr.mxu0 0.0
      %1420 = vmatpush1.msra.mxu0 0.0
      %1421 = vmatprep.subr.mxu0 0.0
      %1422 = vmatpush1.msra.mxu0 0.0
      %1423 = vmatprep.subr.mxu0 0.0
      %1424 = vmatpush1.msra.mxu0 0.0
      %1425 = vmatprep.subr.mxu0 0.0
      %1426 = vmatpush1.msra.mxu0 0.0
      %1427 = vmatprep.subr.mxu0 0.0
      %1428 = vmatpush1.msra.mxu0 0.0
      %1429 = vmatprep.subr.mxu0 0.0
      %1430 = vmatpush1.msra.mxu0 0.0
      %1431 = vmatprep.subr.mxu0 0.0
      %1432 = vmatpush1.msra.mxu0 0.0
      %1433 = vmatprep.subr.mxu0 0.0
      %1434 = vmatpush1.msra.mxu0 0.0
      %1435 = vmatprep.subr.mxu0 0.0
      %1436 = vmatpush1.msra.mxu0 0.0
      %1437 = vmatprep.subr.mxu0 0.0
      %1438 = vmatpush1.msra.mxu0 0.0
      %1439 = vmatprep.subr.mxu0 0.0
      %1440 = vmatpush1.msra.mxu0 0.0
      %1441 = vmatprep.subr.mxu0 0.0
      %1442 = vmatpush1.msra.mxu0 0.0
      %1443 = vmatprep.subr.mxu0 0.0
      %1444 = vmatpush1.msra.mxu0 0.0
      %1445 = vmatprep.subr.mxu0 0.0
      %1446 = vmatpush1.msra.mxu0 0.0
      %1447 = vmatprep.subr.mxu0 0.0
      %1448 = vmatpush1.msra.mxu0 0.0
      %1449 = vmatprep.subr.mxu0 0.0
      %1450 = vmatpush1.msra.mxu0 0.0
      %1451 = vmatprep.subr.mxu0 0.0
      %1452 = vmatpush1.msra.mxu0 0.0
      %1453 = vmatprep.subr.mxu0 0.0
      %1454 = vmatpush1.msra.mxu0 0.0
      %1455 = vmatprep.subr.mxu0 0.0
      %1456 = vmatpush1.msra.mxu0 0.0
      %1457 = vmatprep.subr.mxu0 0.0
      %1458 = vmatpush1.msra.mxu0 0.0
      %1459 = vmatprep.subr.mxu0 0.0
      %1460 = vmatpush1.msra.mxu0 0.0
      %1461 = vmatprep.subr.mxu0 0.0
      %1462 = vmatpush1.msra.mxu0 0.0
      %1463 = vmatprep.subr.mxu0 0.0
      %1464 = vmatpush1.msra.mxu0 0.0
      %1465 = vmatprep.subr.mxu0 0.0
      %1466 = vmatpush1.msra.mxu0 0.0
      %1467 = vmatprep.subr.mxu0 0.0
      %1468 = vmatpush1.msra.mxu0 0.0
      %1469 = vmatprep.subr.mxu0 0.0
      %1470 = vmatpush1.msra.mxu0 0.0
      %1471 = vmatprep.subr.mxu0 0.0
      %1472 = vmatpush1.msra.mxu0 0.0
      %1473 = vmatprep.subr.mxu0 0.0
      %1474 = vmatpush1.msra.mxu0 0.0
      %1475 = vmatprep.subr.mxu0 0.0
      %1476 = vmatpush1.msra.mxu0 0.0
      %1477 = vmatprep.subr.mxu0 0.0
      %1478 = vmatpush1.msra.mxu0 0.0
      %1479 = vmatprep.mubr.f32.mxu0 0.0
      %1480 = vmatmul.mubr.f32.gmra.mrb[0].mxu0 %v1410
      %v1481 = vpop.f32.mrb[0].mxu0
      %v1482 = vadd.f32 0.0, %v1481
      %v1483 = vpop.f32.mrb[0].mxu0
      %1484 = vmatprep.mubr.f32.mxu0 0.0
      %1485 = vmatmul.mubr.f32.gmra.mrb[0].mxu0 %v1413
      %v1486 = vpop.f32.mrb[0].mxu0
      %v1487 = vadd.f32 0.0, %v1486
      %v1488 = vpop.f32.mrb[0].mxu0
      %1489 = vdwg.mxu0
      %v1490 = vadd.f32 %v1375, %v1482
      %v1491 = vadd.f32 %v1376, %v1487
      %1492 = vst.msk [vmem:[#allocation3] sm:$0xff] %vm1150, %v1490
      %1493 = vst.msk [vmem:[#allocation3 + $0x8] sm:$0xff] %vm1150, %v1491
      %p1494 = scmp.eq.s32.totalorder %s37, 2
      // Predicated region
      $region113: #{schnet_forward.7} parent=107 // pred_check
        %p1495 = pneg %p1494
      $region114: #{schnet_forward.7} parent=107 // pred_check_branch
        %1497 = sbr.rel (%p1495) target = $region116
      $region115: #{schnet_forward.7} parent=107 // pred_region
        %v1498 = vld [vmem:[#allocation3] sm:$0xff]
        %v1499 = vld [vmem:[#allocation3 + $0x8] sm:$0xff]
        %v1500 = vld [vmem:[%s18] sm:$0xff]
        %v1501 = vld [vmem:[%s18 + $0x8] sm:$0xff]
        %v1502 = vld [vmem:[%s18 + $0x10] sm:$0xff]
        %v1503 = vld [vmem:[%s18 + $0x18] sm:$0xff]
        %v1504 = vld [vmem:[%s18 + $0x20] sm:$0xff]
        %v1505 = vld [vmem:[%s18 + $0x28] sm:$0xff]
        %v1506 = vld [vmem:[%s18 + $0x30] sm:$0xff]
        %v1507 = vld [vmem:[%s18 + $0x38] sm:$0xff]
        %v1508 = vld [vmem:[%s19] sm:$0x1]
        %v1510 = vlaneseq
        %v1511 = vshrl.u32 %v1510, 7
        %v1512 = vsub.s32 0, %v1511
        %v1513 = vrot.slane %v1508, %v1512
        %v1516 = vsel %vm1150, %v1498, 0
        %v1519 = vsel %vm1150, %v1499, 0
        %1521 = vmatprep.subr.mxu0 0.0
        %1522 = vmatpush1.msra.mxu0 %v1500
        %1523 = vmatprep.subr.mxu0 0.0
        %1524 = vmatpush1.msra.mxu0 %v1501
        %1525 = vmatprep.subr.mxu0 0.0
        %1526 = vmatpush1.msra.mxu0 %v1502
        %1527 = vmatprep.subr.mxu0 0.0
        %1528 = vmatpush1.msra.mxu0 %v1503
        %1529 = vmatprep.subr.mxu0 0.0
        %1530 = vmatpush1.msra.mxu0 %v1504
        %1531 = vmatprep.subr.mxu0 0.0
        %1532 = vmatpush1.msra.mxu0 %v1505
        %1533 = vmatprep.subr.mxu0 0.0
        %1534 = vmatpush1.msra.mxu0 %v1506
        %1535 = vmatprep.subr.mxu0 0.0
        %1536 = vmatpush1.msra.mxu0 %v1507
        %1537 = vmatprep.subr.mxu0 0.0
        %1538 = vmatpush1.msra.mxu0 0.0
        %1539 = vmatprep.subr.mxu0 0.0
        %1540 = vmatpush1.msra.mxu0 0.0
        %1541 = vmatprep.subr.mxu0 0.0
        %1542 = vmatpush1.msra.mxu0 0.0
        %1543 = vmatprep.subr.mxu0 0.0
        %1544 = vmatpush1.msra.mxu0 0.0
        %1545 = vmatprep.subr.mxu0 0.0
        %1546 = vmatpush1.msra.mxu0 0.0
        %1547 = vmatprep.subr.mxu0 0.0
        %1548 = vmatpush1.msra.mxu0 0.0
        %1549 = vmatprep.subr.mxu0 0.0
        %1550 = vmatpush1.msra.mxu0 0.0
        %1551 = vmatprep.subr.mxu0 0.0
        %1552 = vmatpush1.msra.mxu0 0.0
        %1553 = vmatprep.subr.mxu0 0.0
        %1554 = vmatpush1.msra.mxu0 0.0
        %1555 = vmatprep.subr.mxu0 0.0
        %1556 = vmatpush1.msra.mxu0 0.0
        %1557 = vmatprep.subr.mxu0 0.0
        %1558 = vmatpush1.msra.mxu0 0.0
        %1559 = vmatprep.subr.mxu0 0.0
        %1560 = vmatpush1.msra.mxu0 0.0
        %1561 = vmatprep.subr.mxu0 0.0
        %1562 = vmatpush1.msra.mxu0 0.0
        %1563 = vmatprep.subr.mxu0 0.0
        %1564 = vmatpush1.msra.mxu0 0.0
        %1565 = vmatprep.subr.mxu0 0.0
        %1566 = vmatpush1.msra.mxu0 0.0
        %1567 = vmatprep.subr.mxu0 0.0
        %1568 = vmatpush1.msra.mxu0 0.0
        %1569 = vmatprep.subr.mxu0 0.0
        %1570 = vmatpush1.msra.mxu0 0.0
        %1571 = vmatprep.subr.mxu0 0.0
        %1572 = vmatpush1.msra.mxu0 0.0
        %1573 = vmatprep.subr.mxu0 0.0
        %1574 = vmatpush1.msra.mxu0 0.0
        %1575 = vmatprep.subr.mxu0 0.0
        %1576 = vmatpush1.msra.mxu0 0.0
        %1577 = vmatprep.subr.mxu0 0.0
        %1578 = vmatpush1.msra.mxu0 0.0
        %1579 = vmatprep.subr.mxu0 0.0
        %1580 = vmatpush1.msra.mxu0 0.0
        %1581 = vmatprep.subr.mxu0 0.0
        %1582 = vmatpush1.msra.mxu0 0.0
        %1583 = vmatprep.subr.mxu0 0.0
        %1584 = vmatpush1.msra.mxu0 0.0
        %1585 = vmatprep.mubr.f32.mxu0 0.0
        %1586 = vmatmul.mubr.f32.gmra.mrb[0].mxu0 %v1516
        %v1587 = vpop.f32.mrb[0].mxu0
        %v1588 = vadd.f32 %v1513, %v1587
        %v1589 = vpop.f32.mrb[0].mxu0
        %1590 = vmatprep.mubr.f32.mxu0 0.0
        %1591 = vmatmul.mubr.f32.gmra.mrb[0].mxu0 %v1519
        %v1592 = vpop.f32.mrb[0].mxu0
        %v1593 = vadd.f32 %v1513, %v1592
        %v1594 = vpop.f32.mrb[0].mxu0
        %1595 = vdwg.mxu0
        %v1596 = vld [vmem:[%s20] sm:$0x1]
        %v1597 = vld [vmem:[%s21] sm:$0x1]
        %v1598 = vadd.f32 %v1588, %v1593
        %v1599 = vrot.slane %v1598, 4
        %v1600 = vadd.f32 %v1598, %v1599
        %v1601 = vrot.slane %v1600, 2
        %v1602 = vadd.f32 %v1600, %v1601
        %v1603 = vrot.slane %v1602, 1
        %v1604 = vadd.f32 %v1602, %v1603
        %v1605 = vrcp.pop 16.0
        %v1606 = vmul.f32 %v1604, %v1605
        %v1607 = vsub.f32 %v1588, %v1606
        %v1608 = vsub.f32 %v1593, %v1606
        %v1609 = vmul.f32 %v1607, %v1607
        %v1610 = vmul.f32 %v1608, %v1608
        %v1611 = vadd.f32 %v1609, %v1610
        %v1612 = vrot.slane %v1611, 4
        %v1613 = vadd.f32 %v1611, %v1612
        %v1614 = vrot.slane %v1613, 2
        %v1615 = vadd.f32 %v1613, %v1614
        %v1616 = vrot.slane %v1615, 1
        %v1617 = vadd.f32 %v1615, %v1616
        %v1618 = vmul.f32 %v1617, %v1605
        %v1619 = vadd.f32 %v1618, 1e-05
        %v1620 = vrsqrt.pop %v1619
        %v1621 = vmul.f32 %v1607, %v1620
        %v1622 = vmul.f32 %v1608, %v1620
        %v1624 = vlaneseq
        %v1625 = vshrl.u32 %v1624, 7
        %v1626 = vsub.s32 0, %v1625
        %v1627 = vrot.slane %v1596, %v1626
        %v1629 = vmul.f32 %v1621, %v1627
        %v1630 = vmul.f32 %v1622, %v1627
        %v1632 = vlaneseq
        %v1633 = vshrl.u32 %v1632, 7
        %v1634 = vsub.s32 0, %v1633
        %v1635 = vrot.slane %v1597, %v1634
        %v1637 = vadd.f32 %v1629, %v1635
        %v1638 = vadd.f32 %v1630, %v1635
        %1639 = vst [vmem:[%s22] sm:$0xff] %v1637
        %1640 = vst [vmem:[%s22 + $0x8] sm:$0xff] %v1638
      $region116: #{schnet_forward.7} parent=107 // pred_fallthru
        _
      // Predicated region
      $region117: #{schnet_forward.7} parent=107 // pred_check
        %p1641 = pneg %p532
      $region118: #{schnet_forward.7} parent=107 // pred_check_branch
        %1643 = sbr.rel (%p1641) target = $region120
      $region119: #{schnet_forward.7} parent=107 // pred_region
        _
      $region120: #{schnet_forward.7} parent=107 // pred_fallthru
        _
      // Predicated region
      $region121: #{schnet_forward.7} parent=107 // pred_check
        %p1644 = pneg %p532
      $region122: #{schnet_forward.7} parent=107 // pred_check_branch
        %1646 = sbr.rel (%p1644) target = $region124
      $region123: #{schnet_forward.7} parent=107 // pred_region
        _
      $region124: #{schnet_forward.7} parent=107 // pred_fallthru
        _
    $region108: #{schnet_forward.7} parent=5 // pred_fallthru
      _
    %p1647 = scmp.le.s32.totalorder 2, %s32
    // Predicated region
    $region125: #{schnet_forward.7} parent=5 // pred_check
      %p1648 = pneg %p1647
    $region126: #{schnet_forward.7} parent=5 // pred_check_branch
      %1650 = sbr.rel (%p1648) target = $region128
    $region127: #{schnet_forward.7} parent=5 // pred_region
      %s1651 = ssub.s32 %s32, 2
    $region128: #{schnet_forward.7} parent=5 // pred_fallthru
      _
  $region6: #{schnet_forward.7} parent=0 // loop_footer
    %s36 = sadd.s32 1, %s32
  $region7: #{schnet_forward.7} parent=0 // loop_footer_branch
    %31 = sbr.rel target = $region3
  $region8: #{schnet_forward.7} parent=0 // loop_exit
    _

// kernel: schnet_forward.6
$region0: #{schnet_forward.6}
  #allocation0 [shape = 'u32[]', space=smem, size = 0x4, offset = 0x4, fixed_abs, tag = 'smem constant byte address 0x4 - core index']
  #allocation1 [shape = 'u32[144,128]{1,0:T(1,128)}', space=vmem, size = 0x12000, scoped, tag = 'internal scratch']
  #allocation2 [shape = 'f32[16,128]{1,0:T(8,128)}', space=vmem, size = 0x2000, scoped, tag = 'scratch operand']
  #allocation3 [shape = 'f32[16,128]{1,0:T(8,128)}', space=vmem, size = 0x2000, scoped, tag = 'scratch operand']
  #allocation4 [shape = 'f32[1,1]{1,0:T(1,128)S(1)}', space=vmem, size = 0x200, scoped, tag = 'scoped memory for schnet_forward.6']
  #allocation5 [shape = 'f32[1,1]{1,0:T(1,128)S(1)}', space=vmem, size = 0x200, scoped, tag = 'scoped memory for schnet_forward.6']
  %s0 = inlined_call_operand.vmem [shape: f32[16,128], index: 0, kind: input, shape index: {}]
  %s1 = inlined_call_operand.vmem [shape: f32[48,1], index: 1, kind: input, shape index: {}]
  %s2 = inlined_call_operand.vmem [shape: f32[48,128], index: 2, kind: input, shape index: {}]
  %s3 = inlined_call_operand.vmem [shape: s32[48,1], index: 3, kind: input, shape index: {}]
  %s4 = inlined_call_operand.vmem [shape: s32[48,1], index: 4, kind: input, shape index: {}]
  %s5 = inlined_call_operand.vmem [shape: f32[128,128], index: 5, kind: input, shape index: {}]
  %s6 = inlined_call_operand.vmem [shape: f32[1,128], index: 6, kind: input, shape index: {}]
  %s7 = inlined_call_operand.vmem [shape: f32[1,128], index: 7, kind: input, shape index: {}]
  %s8 = inlined_call_operand.vmem [shape: f32[1,128], index: 8, kind: input, shape index: {}]
  %s9 = inlined_call_operand.vmem [shape: f32[128,128], index: 9, kind: input, shape index: {}]
  %s10 = inlined_call_operand.vmem [shape: f32[1,128], index: 10, kind: input, shape index: {}]
  %s11 = inlined_call_operand.<no memory space> [shape: f32[1,1], index: 11, kind: input, shape index: {}]
  %s12 = inlined_call_operand.vmem [shape: f32[128,128], index: 12, kind: input, shape index: {}]
  %s13 = inlined_call_operand.vmem [shape: f32[1,128], index: 13, kind: input, shape index: {}]
  %s14 = inlined_call_operand.vmem [shape: f32[1,32], index: 14, kind: input, shape index: {}]
  %s15 = inlined_call_operand.vmem [shape: f32[1,32], index: 15, kind: input, shape index: {}]
  %s16 = inlined_call_operand.vmem [shape: f32[1,32], index: 16, kind: input, shape index: {}]
  %s17 = inlined_call_operand.<no memory space> [shape: f32[1,1], index: 17, kind: input, shape index: {}]
  %s18 = inlined_call_operand.vmem [shape: f32[128,128], index: 18, kind: input, shape index: {}]
  %s19 = inlined_call_operand.vmem [shape: f32[1,128], index: 19, kind: input, shape index: {}]
  %s20 = inlined_call_operand.vmem [shape: f32[1,128], index: 20, kind: input, shape index: {}]
  %s21 = inlined_call_operand.vmem [shape: f32[1,128], index: 21, kind: input, shape index: {}]
  %s22 = inlined_call_operand.vmem [shape: f32[16,128], index: 22, kind: output, shape index: {}]
  %s23 = sld [smem:[#allocation0]]
  $region129: #{schnet_forward.6} parent=0
    _
  %s25 = ssub.s32 1, %s23
  %s26 = scalar_select 0, %s25, %s23
  %v27 = vstv %s11
  %28 = vst [vmem:[#allocation4] sm:$0x1] %v27
  %v29 = vstv %s17
  %30 = vst [vmem:[#allocation5] sm:$0x1] %v29
  loop: start=0, step=1, limit=5
  $region2: #{schnet_forward.6} parent=0 // loop_pre_header
    _
  $region3: #{schnet_forward.6} parent=0 // loop_header
    %s32 = sphi 0, %s36
    %p33 = scmp.ge.s32.totalorder %s32, 5
    %s40 = sphi 0, %s40
    %s42 = sphi 0, %s40
    %s43 = sphi 0, %s42
    %s57 = sphi 0, %s43
    %s63 = sphi 0, %s65
    %s66 = sphi 0, %s63
    %s67 = sphi 0, %s66
    %s83 = sphi 0, %s67
    %s89 = sphi 0, %s91
    %s92 = sphi 0, %s89
    %s93 = sphi 0, %s92
    %s109 = sphi 0, %s93
    %s115 = sphi 0, %s117
    %s118 = sphi 0, %s115
    %s119 = sphi 0, %s118
    %s135 = sphi 0, %s119
    %s141 = sphi 0, %s143
    %s144 = sphi 0, %s141
    %s145 = sphi 0, %s144
    %s161 = sphi 0, %s145
    %s165 = sphi 0, %s165
    %s167 = sphi 0, %s165
    %s168 = sphi 0, %s167
    %s182 = sphi 0, %s168
    %s186 = sphi 0, %s186
    %s188 = sphi 0, %s186
    %s189 = sphi 0, %s188
    %s203 = sphi 0, %s189
    %s207 = sphi 0, %s207
    %s209 = sphi 0, %s207
    %s210 = sphi 0, %s209
    %s224 = sphi 0, %s210
    %s228 = sphi 0, %s228
    %s230 = sphi 0, %s228
    %s231 = sphi 0, %s230
    %s245 = sphi 0, %s231
    %s249 = sphi 0, %s249
    %s251 = sphi 0, %s249
    %s252 = sphi 0, %s251
    %s266 = sphi 0, %s252
    %s270 = sphi 0, %s270
    %s272 = sphi 0, %s270
    %s273 = sphi 0, %s272
    %s287 = sphi 0, %s273
    %s291 = sphi 0, %s291
    %s293 = sphi 0, %s291
    %s294 = sphi 0, %s293
    %s308 = sphi 0, %s294
    %s312 = sphi 0, %s312
    %s314 = sphi 0, %s312
    %s315 = sphi 0, %s314
    %s329 = sphi 0, %s315
    %s333 = sphi 0, %s333
    %s335 = sphi 0, %s333
    %s336 = sphi 0, %s335
    %s350 = sphi 0, %s336
    %s354 = sphi 0, %s354
    %s356 = sphi 0, %s354
    %s357 = sphi 0, %s356
    %s371 = sphi 0, %s357
    %s375 = sphi 0, %s375
    %s377 = sphi 0, %s375
    %s378 = sphi 0, %s377
    %s392 = sphi 0, %s378
    %s396 = sphi 0, %s396
    %s398 = sphi 0, %s396
    %s399 = sphi 0, %s398
    %s413 = sphi 0, %s399
    %s417 = sphi 0, %s417
    %s419 = sphi 0, %s417
    %s420 = sphi 0, %s419
    %s434 = sphi 0, %s420
    %s438 = sphi 0, %s438
    %s440 = sphi 0, %s438
    %s441 = sphi 0, %s440
    %s455 = sphi 0, %s441
    %s459 = sphi 0, %s459
    %s461 = sphi 0, %s459
    %s462 = sphi 0, %s461
    %s476 = sphi 0, %s462
    %s480 = sphi 0, %s480
    %s482 = sphi 0, %s480
    %s483 = sphi 0, %s482
    %s497 = sphi 0, %s483
    %s501 = sphi 0, %s501
    %s503 = sphi 0, %s501
    %s504 = sphi 0, %s503
    %s518 = sphi 0, %s504
    %s522 = sphi 0, %s522
    %s524 = sphi 0, %s522
    %s525 = sphi 0, %s524
    %s539 = sphi 0, %s525
  $region4: #{schnet_forward.6} parent=0 // loop_header_branch
    %35 = sbr.rel (%p33) target = $region8
  $region5: #{schnet_forward.6} parent=0 // loop_body
    %s37 = ssub.s32 %s32, 1
    %s38 = ssub.s32 %s32, 2
    %s39 = sadd.s32 %s32, 1
    %s41 = sadd.s32 %s40, 1
    %p44 = scmp.eq.s32.totalorder %s32, 2
    %p45 = scmp.ne.s32.totalorder %s40, %s42
    %p46 = scmp.eq.s32.totalorder %s32, 0
    %p47 = por %p45, %p46
    %p48 = scmp.ne.s32.totalorder %s40, %s42
    %p49 = scmp.eq.s32.totalorder %s37, 2
    %p50 = por %p48, %p49
    %p51 = scmp.ne.s32.totalorder %s42, %s43
    %p52 = scmp.eq.s32.totalorder %s37, 0
    %p53 = por %p51, %p52
    %p54 = scmp.ne.s32.totalorder %s42, %s43
    %p55 = scmp.eq.s32.totalorder %s38, 2
    %p56 = por %p54, %p55
    %p58 = scmp.ne.s32.totalorder %s43, %s57
    %p59 = scmp.eq.s32.totalorder %s38, 0
    %p60 = por %p58, %p59
    %s61 = ssub.s32 %s32, %s39
    %p62 = scmp.eq.s32.totalorder %s61, 0
    %s64 = sadd.s32 %s63, 1
    %s65 = scalar_select %p62, %s63, %s64
    %p68 = pneg %p62
    %p69 = scmp.eq.s32.totalorder %s32, 2
    %p70 = por %p68, %p69
    %p71 = scmp.ne.s32.totalorder %s63, %s66
    %p72 = scmp.eq.s32.totalorder %s32, 0
    %p73 = por %p71, %p72
    %p74 = scmp.ne.s32.totalorder %s63, %s66
    %p75 = scmp.eq.s32.totalorder %s37, 2
    %p76 = por %p74, %p75
    %p77 = scmp.ne.s32.totalorder %s66, %s67
    %p78 = scmp.eq.s32.totalorder %s37, 0
    %p79 = por %p77, %p78
    %p80 = scmp.ne.s32.totalorder %s66, %s67
    %p81 = scmp.eq.s32.totalorder %s38, 2
    %p82 = por %p80, %p81
    %p84 = scmp.ne.s32.totalorder %s67, %s83
    %p85 = scmp.eq.s32.totalorder %s38, 0
    %p86 = por %p84, %p85
    %s87 = ssub.s32 %s32, %s39
    %p88 = scmp.eq.s32.totalorder %s87, 0
    %s90 = sadd.s32 %s89, 1
    %s91 = scalar_select %p88, %s89, %s90
    %p94 = pneg %p88
    %p95 = scmp.eq.s32.totalorder %s32, 2
    %p96 = por %p94, %p95
    %p97 = scmp.ne.s32.totalorder %s89, %s92
    %p98 = scmp.eq.s32.totalorder %s32, 0
    %p99 = por %p97, %p98
    %p100 = scmp.ne.s32.totalorder %s89, %s92
    %p101 = scmp.eq.s32.totalorder %s37, 2
    %p102 = por %p100, %p101
    %p103 = scmp.ne.s32.totalorder %s92, %s93
    %p104 = scmp.eq.s32.totalorder %s37, 0
    %p105 = por %p103, %p104
    %p106 = scmp.ne.s32.totalorder %s92, %s93
    %p107 = scmp.eq.s32.totalorder %s38, 2
    %p108 = por %p106, %p107
    %p110 = scmp.ne.s32.totalorder %s93, %s109
    %p111 = scmp.eq.s32.totalorder %s38, 0
    %p112 = por %p110, %p111
    %s113 = ssub.s32 %s32, %s39
    %p114 = scmp.eq.s32.totalorder %s113, 0
    %s116 = sadd.s32 %s115, 1
    %s117 = scalar_select %p114, %s115, %s116
    %p120 = pneg %p114
    %p121 = scmp.eq.s32.totalorder %s32, 2
    %p122 = por %p120, %p121
    %p123 = scmp.ne.s32.totalorder %s115, %s118
    %p124 = scmp.eq.s32.totalorder %s32, 0
    %p125 = por %p123, %p124
    %p126 = scmp.ne.s32.totalorder %s115, %s118
    %p127 = scmp.eq.s32.totalorder %s37, 2
    %p128 = por %p126, %p127
    %p129 = scmp.ne.s32.totalorder %s118, %s119
    %p130 = scmp.eq.s32.totalorder %s37, 0
    %p131 = por %p129, %p130
    %p132 = scmp.ne.s32.totalorder %s118, %s119
    %p133 = scmp.eq.s32.totalorder %s38, 2
    %p134 = por %p132, %p133
    %p136 = scmp.ne.s32.totalorder %s119, %s135
    %p137 = scmp.eq.s32.totalorder %s38, 0
    %p138 = por %p136, %p137
    %s139 = ssub.s32 %s32, %s39
    %p140 = scmp.eq.s32.totalorder %s139, 0
    %s142 = sadd.s32 %s141, 1
    %s143 = scalar_select %p140, %s141, %s142
    %p146 = pneg %p140
    %p147 = scmp.eq.s32.totalorder %s32, 2
    %p148 = por %p146, %p147
    %p149 = scmp.ne.s32.totalorder %s141, %s144
    %p150 = scmp.eq.s32.totalorder %s32, 0
    %p151 = por %p149, %p150
    %p152 = scmp.ne.s32.totalorder %s141, %s144
    %p153 = scmp.eq.s32.totalorder %s37, 2
    %p154 = por %p152, %p153
    %p155 = scmp.ne.s32.totalorder %s144, %s145
    %p156 = scmp.eq.s32.totalorder %s37, 0
    %p157 = por %p155, %p156
    %p158 = scmp.ne.s32.totalorder %s144, %s145
    %p159 = scmp.eq.s32.totalorder %s38, 2
    %p160 = por %p158, %p159
    %p162 = scmp.ne.s32.totalorder %s145, %s161
    %p163 = scmp.eq.s32.totalorder %s38, 0
    %p164 = por %p162, %p163
    %s166 = sadd.s32 %s165, 1
    %p169 = scmp.eq.s32.totalorder %s32, 2
    %p170 = scmp.ne.s32.totalorder %s165, %s167
    %p171 = scmp.eq.s32.totalorder %s32, 0
    %p172 = por %p170, %p171
    %p173 = scmp.ne.s32.totalorder %s165, %s167
    %p174 = scmp.eq.s32.totalorder %s37, 2
    %p175 = por %p173, %p174
    %p176 = scmp.ne.s32.totalorder %s167, %s168
    %p177 = scmp.eq.s32.totalorder %s37, 0
    %p178 = por %p176, %p177
    %p179 = scmp.ne.s32.totalorder %s167, %s168
    %p180 = scmp.eq.s32.totalorder %s38, 2
    %p181 = por %p179, %p180
    %p183 = scmp.ne.s32.totalorder %s168, %s182
    %p184 = scmp.eq.s32.totalorder %s38, 0
    %p185 = por %p183, %p184
    %s187 = sadd.s32 %s186, 1
    %p190 = scmp.eq.s32.totalorder %s32, 2
    %p191 = scmp.ne.s32.totalorder %s186, %s188
    %p192 = scmp.eq.s32.totalorder %s32, 0
    %p193 = por %p191, %p192
    %p194 = scmp.ne.s32.totalorder %s186, %s188
    %p195 = scmp.eq.s32.totalorder %s37, 2
    %p196 = por %p194, %p195
    %p197 = scmp.ne.s32.totalorder %s188, %s189
    %p198 = scmp.eq.s32.totalorder %s37, 0
    %p199 = por %p197, %p198
    %p200 = scmp.ne.s32.totalorder %s188, %s189
    %p201 = scmp.eq.s32.totalorder %s38, 2
    %p202 = por %p200, %p201
    %p204 = scmp.ne.s32.totalorder %s189, %s203
    %p205 = scmp.eq.s32.totalorder %s38, 0
    %p206 = por %p204, %p205
    %s208 = sadd.s32 %s207, 1
    %p211 = scmp.eq.s32.totalorder %s32, 2
    %p212 = scmp.ne.s32.totalorder %s207, %s209
    %p213 = scmp.eq.s32.totalorder %s32, 0
    %p214 = por %p212, %p213
    %p215 = scmp.ne.s32.totalorder %s207, %s209
    %p216 = scmp.eq.s32.totalorder %s37, 2
    %p217 = por %p215, %p216
    %p218 = scmp.ne.s32.totalorder %s209, %s210
    %p219 = scmp.eq.s32.totalorder %s37, 0
    %p220 = por %p218, %p219
    %p221 = scmp.ne.s32.totalorder %s209, %s210
    %p222 = scmp.eq.s32.totalorder %s38, 2
    %p223 = por %p221, %p222
    %p225 = scmp.ne.s32.totalorder %s210, %s224
    %p226 = scmp.eq.s32.totalorder %s38, 0
    %p227 = por %p225, %p226
    %s229 = sadd.s32 %s228, 1
    %p232 = scmp.eq.s32.totalorder %s32, 2
    %p233 = scmp.ne.s32.totalorder %s228, %s230
    %p234 = scmp.eq.s32.totalorder %s32, 0
    %p235 = por %p233, %p234
    %p236 = scmp.ne.s32.totalorder %s228, %s230
    %p237 = scmp.eq.s32.totalorder %s37, 2
    %p238 = por %p236, %p237
    %p239 = scmp.ne.s32.totalorder %s230, %s231
    %p240 = scmp.eq.s32.totalorder %s37, 0
    %p241 = por %p239, %p240
    %p242 = scmp.ne.s32.totalorder %s230, %s231
    %p243 = scmp.eq.s32.totalorder %s38, 2
    %p244 = por %p242, %p243
    %p246 = scmp.ne.s32.totalorder %s231, %s245
    %p247 = scmp.eq.s32.totalorder %s38, 0
    %p248 = por %p246, %p247
    %s250 = sadd.s32 %s249, 1
    %p253 = scmp.eq.s32.totalorder %s32, 2
    %p254 = scmp.ne.s32.totalorder %s249, %s251
    %p255 = scmp.eq.s32.totalorder %s32, 0
    %p256 = por %p254, %p255
    %p257 = scmp.ne.s32.totalorder %s249, %s251
    %p258 = scmp.eq.s32.totalorder %s37, 2
    %p259 = por %p257, %p258
    %p260 = scmp.ne.s32.totalorder %s251, %s252
    %p261 = scmp.eq.s32.totalorder %s37, 0
    %p262 = por %p260, %p261
    %p263 = scmp.ne.s32.totalorder %s251, %s252
    %p264 = scmp.eq.s32.totalorder %s38, 2
    %p265 = por %p263, %p264
    %p267 = scmp.ne.s32.totalorder %s252, %s266
    %p268 = scmp.eq.s32.totalorder %s38, 0
    %p269 = por %p267, %p268
    %s271 = sadd.s32 %s270, 1
    %p274 = scmp.eq.s32.totalorder %s32, 2
    %p275 = scmp.ne.s32.totalorder %s270, %s272
    %p276 = scmp.eq.s32.totalorder %s32, 0
    %p277 = por %p275, %p276
    %p278 = scmp.ne.s32.totalorder %s270, %s272
    %p279 = scmp.eq.s32.totalorder %s37, 2
    %p280 = por %p278, %p279
    %p281 = scmp.ne.s32.totalorder %s272, %s273
    %p282 = scmp.eq.s32.totalorder %s37, 0
    %p283 = por %p281, %p282
    %p284 = scmp.ne.s32.totalorder %s272, %s273
    %p285 = scmp.eq.s32.totalorder %s38, 2
    %p286 = por %p284, %p285
    %p288 = scmp.ne.s32.totalorder %s273, %s287
    %p289 = scmp.eq.s32.totalorder %s38, 0
    %p290 = por %p288, %p289
    %s292 = sadd.s32 %s291, 1
    %p295 = scmp.eq.s32.totalorder %s32, 2
    %p296 = scmp.ne.s32.totalorder %s291, %s293
    %p297 = scmp.eq.s32.totalorder %s32, 0
    %p298 = por %p296, %p297
    %p299 = scmp.ne.s32.totalorder %s291, %s293
    %p300 = scmp.eq.s32.totalorder %s37, 2
    %p301 = por %p299, %p300
    %p302 = scmp.ne.s32.totalorder %s293, %s294
    %p303 = scmp.eq.s32.totalorder %s37, 0
    %p304 = por %p302, %p303
    %p305 = scmp.ne.s32.totalorder %s293, %s294
    %p306 = scmp.eq.s32.totalorder %s38, 2
    %p307 = por %p305, %p306
    %p309 = scmp.ne.s32.totalorder %s294, %s308
    %p310 = scmp.eq.s32.totalorder %s38, 0
    %p311 = por %p309, %p310
    %s313 = sadd.s32 %s312, 1
    %p316 = scmp.eq.s32.totalorder %s32, 2
    %p317 = scmp.ne.s32.totalorder %s312, %s314
    %p318 = scmp.eq.s32.totalorder %s32, 0
    %p319 = por %p317, %p318
    %p320 = scmp.ne.s32.totalorder %s312, %s314
    %p321 = scmp.eq.s32.totalorder %s37, 2
    %p322 = por %p320, %p321
    %p323 = scmp.ne.s32.totalorder %s314, %s315
    %p324 = scmp.eq.s32.totalorder %s37, 0
    %p325 = por %p323, %p324
    %p326 = scmp.ne.s32.totalorder %s314, %s315
    %p327 = scmp.eq.s32.totalorder %s38, 2
    %p328 = por %p326, %p327
    %p330 = scmp.ne.s32.totalorder %s315, %s329
    %p331 = scmp.eq.s32.totalorder %s38, 0
    %p332 = por %p330, %p331
    %s334 = sadd.s32 %s333, 1
    %p337 = scmp.eq.s32.totalorder %s32, 2
    %p338 = scmp.ne.s32.totalorder %s333, %s335
    %p339 = scmp.eq.s32.totalorder %s32, 0
    %p340 = por %p338, %p339
    %p341 = scmp.ne.s32.totalorder %s333, %s335
    %p342 = scmp.eq.s32.totalorder %s37, 2
    %p343 = por %p341, %p342
    %p344 = scmp.ne.s32.totalorder %s335, %s336
    %p345 = scmp.eq.s32.totalorder %s37, 0
    %p346 = por %p344, %p345
    %p347 = scmp.ne.s32.totalorder %s335, %s336
    %p348 = scmp.eq.s32.totalorder %s38, 2
    %p349 = por %p347, %p348
    %p351 = scmp.ne.s32.totalorder %s336, %s350
    %p352 = scmp.eq.s32.totalorder %s38, 0
    %p353 = por %p351, %p352
    %s355 = sadd.s32 %s354, 1
    %p358 = scmp.eq.s32.totalorder %s32, 2
    %p359 = scmp.ne.s32.totalorder %s354, %s356
    %p360 = scmp.eq.s32.totalorder %s32, 0
    %p361 = por %p359, %p360
    %p362 = scmp.ne.s32.totalorder %s354, %s356
    %p363 = scmp.eq.s32.totalorder %s37, 2
    %p364 = por %p362, %p363
    %p365 = scmp.ne.s32.totalorder %s356, %s357
    %p366 = scmp.eq.s32.totalorder %s37, 0
    %p367 = por %p365, %p366
    %p368 = scmp.ne.s32.totalorder %s356, %s357
    %p369 = scmp.eq.s32.totalorder %s38, 2
    %p370 = por %p368, %p369
    %p372 = scmp.ne.s32.totalorder %s357, %s371
    %p373 = scmp.eq.s32.totalorder %s38, 0
    %p374 = por %p372, %p373
    %s376 = sadd.s32 %s375, 1
    %p379 = scmp.eq.s32.totalorder %s32, 2
    %p380 = scmp.ne.s32.totalorder %s375, %s377
    %p381 = scmp.eq.s32.totalorder %s32, 0
    %p382 = por %p380, %p381
    %p383 = scmp.ne.s32.totalorder %s375, %s377
    %p384 = scmp.eq.s32.totalorder %s37, 2
    %p385 = por %p383, %p384
    %p386 = scmp.ne.s32.totalorder %s377, %s378
    %p387 = scmp.eq.s32.totalorder %s37, 0
    %p388 = por %p386, %p387
    %p389 = scmp.ne.s32.totalorder %s377, %s378
    %p390 = scmp.eq.s32.totalorder %s38, 2
    %p391 = por %p389, %p390
    %p393 = scmp.ne.s32.totalorder %s378, %s392
    %p394 = scmp.eq.s32.totalorder %s38, 0
    %p395 = por %p393, %p394
    %s397 = sadd.s32 %s396, 1
    %p400 = scmp.eq.s32.totalorder %s32, 2
    %p401 = scmp.ne.s32.totalorder %s396, %s398
    %p402 = scmp.eq.s32.totalorder %s32, 0
    %p403 = por %p401, %p402
    %p404 = scmp.ne.s32.totalorder %s396, %s398
    %p405 = scmp.eq.s32.totalorder %s37, 2
    %p406 = por %p404, %p405
    %p407 = scmp.ne.s32.totalorder %s398, %s399
    %p408 = scmp.eq.s32.totalorder %s37, 0
    %p409 = por %p407, %p408
    %p410 = scmp.ne.s32.totalorder %s398, %s399
    %p411 = scmp.eq.s32.totalorder %s38, 2
    %p412 = por %p410, %p411
    %p414 = scmp.ne.s32.totalorder %s399, %s413
    %p415 = scmp.eq.s32.totalorder %s38, 0
    %p416 = por %p414, %p415
    %s418 = sadd.s32 %s417, 1
    %p421 = scmp.eq.s32.totalorder %s32, 2
    %p422 = scmp.ne.s32.totalorder %s417, %s419
    %p423 = scmp.eq.s32.totalorder %s32, 0
    %p424 = por %p422, %p423
    %p425 = scmp.ne.s32.totalorder %s417, %s419
    %p426 = scmp.eq.s32.totalorder %s37, 2
    %p427 = por %p425, %p426
    %p428 = scmp.ne.s32.totalorder %s419, %s420
    %p429 = scmp.eq.s32.totalorder %s37, 0
    %p430 = por %p428, %p429
    %p431 = scmp.ne.s32.totalorder %s419, %s420
    %p432 = scmp.eq.s32.totalorder %s38, 2
    %p433 = por %p431, %p432
    %p435 = scmp.ne.s32.totalorder %s420, %s434
    %p436 = scmp.eq.s32.totalorder %s38, 0
    %p437 = por %p435, %p436
    %s439 = sadd.s32 %s438, 1
    %p442 = scmp.eq.s32.totalorder %s32, 2
    %p443 = scmp.ne.s32.totalorder %s438, %s440
    %p444 = scmp.eq.s32.totalorder %s32, 0
    %p445 = por %p443, %p444
    %p446 = scmp.ne.s32.totalorder %s438, %s440
    %p447 = scmp.eq.s32.totalorder %s37, 2
    %p448 = por %p446, %p447
    %p449 = scmp.ne.s32.totalorder %s440, %s441
    %p450 = scmp.eq.s32.totalorder %s37, 0
    %p451 = por %p449, %p450
    %p452 = scmp.ne.s32.totalorder %s440, %s441
    %p453 = scmp.eq.s32.totalorder %s38, 2
    %p454 = por %p452, %p453
    %p456 = scmp.ne.s32.totalorder %s441, %s455
    %p457 = scmp.eq.s32.totalorder %s38, 0
    %p458 = por %p456, %p457
    %s460 = sadd.s32 %s459, 1
    %p463 = scmp.eq.s32.totalorder %s32, 2
    %p464 = scmp.ne.s32.totalorder %s459, %s461
    %p465 = scmp.eq.s32.totalorder %s32, 0
    %p466 = por %p464, %p465
    %p467 = scmp.ne.s32.totalorder %s459, %s461
    %p468 = scmp.eq.s32.totalorder %s37, 2
    %p469 = por %p467, %p468
    %p470 = scmp.ne.s32.totalorder %s461, %s462
    %p471 = scmp.eq.s32.totalorder %s37, 0
    %p472 = por %p470, %p471
    %p473 = scmp.ne.s32.totalorder %s461, %s462
    %p474 = scmp.eq.s32.totalorder %s38, 2
    %p475 = por %p473, %p474
    %p477 = scmp.ne.s32.totalorder %s462, %s476
    %p478 = scmp.eq.s32.totalorder %s38, 0
    %p479 = por %p477, %p478
    %s481 = sadd.s32 %s480, 1
    %p484 = scmp.eq.s32.totalorder %s32, 2
    %p485 = scmp.ne.s32.totalorder %s480, %s482
    %p486 = scmp.eq.s32.totalorder %s32, 0
    %p487 = por %p485, %p486
    %p488 = scmp.ne.s32.totalorder %s480, %s482
    %p489 = scmp.eq.s32.totalorder %s37, 2
    %p490 = por %p488, %p489
    %p491 = scmp.ne.s32.totalorder %s482, %s483
    %p492 = scmp.eq.s32.totalorder %s37, 0
    %p493 = por %p491, %p492
    %p494 = scmp.ne.s32.totalorder %s482, %s483
    %p495 = scmp.eq.s32.totalorder %s38, 2
    %p496 = por %p494, %p495
    %p498 = scmp.ne.s32.totalorder %s483, %s497
    %p499 = scmp.eq.s32.totalorder %s38, 0
    %p500 = por %p498, %p499
    %s502 = sadd.s32 %s501, 1
    %p505 = scmp.eq.s32.totalorder %s32, 2
    %p506 = scmp.ne.s32.totalorder %s501, %s503
    %p507 = scmp.eq.s32.totalorder %s32, 0
    %p508 = por %p506, %p507
    %p509 = scmp.ne.s32.totalorder %s501, %s503
    %p510 = scmp.eq.s32.totalorder %s37, 2
    %p511 = por %p509, %p510
    %p512 = scmp.ne.s32.totalorder %s503, %s504
    %p513 = scmp.eq.s32.totalorder %s37, 0
    %p514 = por %p512, %p513
    %p515 = scmp.ne.s32.totalorder %s503, %s504
    %p516 = scmp.eq.s32.totalorder %s38, 2
    %p517 = por %p515, %p516
    %p519 = scmp.ne.s32.totalorder %s504, %s518
    %p520 = scmp.eq.s32.totalorder %s38, 0
    %p521 = por %p519, %p520
    %s523 = sadd.s32 %s522, 1
    %p526 = scmp.eq.s32.totalorder %s32, 2
    %p527 = scmp.ne.s32.totalorder %s522, %s524
    %p528 = scmp.eq.s32.totalorder %s32, 0
    %p529 = por %p527, %p528
    %p530 = scmp.ne.s32.totalorder %s522, %s524
    %p531 = scmp.eq.s32.totalorder %s37, 2
    %p532 = por %p530, %p531
    %p533 = scmp.ne.s32.totalorder %s524, %s525
    %p534 = scmp.eq.s32.totalorder %s37, 0
    %p535 = por %p533, %p534
    %p536 = scmp.ne.s32.totalorder %s524, %s525
    %p537 = scmp.eq.s32.totalorder %s38, 2
    %p538 = por %p536, %p537
    %p540 = scmp.ne.s32.totalorder %s525, %s539
    %p541 = scmp.eq.s32.totalorder %s38, 0
    %p542 = por %p540, %p541
    %p543 = scmp.le.s32.totalorder 1, %s32
    %p544 = scmp.lt.s32.totalorder %s32, 4
    %p545 = pnand %p543, %p544
    %p546 = pneg %p545
    // Predicated region
    $region9: #{schnet_forward.6} parent=5 // pred_check
      _
    $region10: #{schnet_forward.6} parent=5 // pred_check_branch
      %548 = sbr.rel (%p545) target = $region12
    $region11: #{schnet_forward.6} parent=5 // pred_region
      %s549 = ssub.s32 %s32, 1
      // Predicated region
      $region13: #{schnet_forward.6} parent=11 // pred_check
        %p550 = pneg %p53
      $region14: #{schnet_forward.6} parent=11 // pred_check_branch
        %552 = sbr.rel (%p550) target = $region16
      $region15: #{schnet_forward.6} parent=11 // pred_region
        _
      $region16: #{schnet_forward.6} parent=11 // pred_fallthru
        _
      // Predicated region
      $region17: #{schnet_forward.6} parent=11 // pred_check
        %p553 = pneg %p178
      $region18: #{schnet_forward.6} parent=11 // pred_check_branch
        %555 = sbr.rel (%p553) target = $region20
      $region19: #{schnet_forward.6} parent=11 // pred_region
        _
      $region20: #{schnet_forward.6} parent=11 // pred_fallthru
        _
      // Predicated region
      $region21: #{schnet_forward.6} parent=11 // pred_check
        %p556 = pneg %p199
      $region22: #{schnet_forward.6} parent=11 // pred_check_branch
        %558 = sbr.rel (%p556) target = $region24
      $region23: #{schnet_forward.6} parent=11 // pred_region
        _
      $region24: #{schnet_forward.6} parent=11 // pred_fallthru
        _
      // Predicated region
      $region25: #{schnet_forward.6} parent=11 // pred_check
        %p559 = pneg %p220
      $region26: #{schnet_forward.6} parent=11 // pred_check_branch
        %561 = sbr.rel (%p559) target = $region28
      $region27: #{schnet_forward.6} parent=11 // pred_region
        _
      $region28: #{schnet_forward.6} parent=11 // pred_fallthru
        _
      // Predicated region
      $region29: #{schnet_forward.6} parent=11 // pred_check
        %p562 = pneg %p241
      $region30: #{schnet_forward.6} parent=11 // pred_check_branch
        %564 = sbr.rel (%p562) target = $region32
      $region31: #{schnet_forward.6} parent=11 // pred_region
        _
      $region32: #{schnet_forward.6} parent=11 // pred_fallthru
        _
      // Predicated region
      $region33: #{schnet_forward.6} parent=11 // pred_check
        %p565 = pneg %p262
      $region34: #{schnet_forward.6} parent=11 // pred_check_branch
        %567 = sbr.rel (%p565) target = $region36
      $region35: #{schnet_forward.6} parent=11 // pred_region
        _
      $region36: #{schnet_forward.6} parent=11 // pred_fallthru
        _
      // Predicated region
      $region37: #{schnet_forward.6} parent=11 // pred_check
        %p568 = pneg %p283
      $region38: #{schnet_forward.6} parent=11 // pred_check_branch
        %570 = sbr.rel (%p568) target = $region40
      $region39: #{schnet_forward.6} parent=11 // pred_region
        _
      $region40: #{schnet_forward.6} parent=11 // pred_fallthru
        _
      // Predicated region
      $region41: #{schnet_forward.6} parent=11 // pred_check
        %p571 = pneg %p304
      $region42: #{schnet_forward.6} parent=11 // pred_check_branch
        %573 = sbr.rel (%p571) target = $region44
      $region43: #{schnet_forward.6} parent=11 // pred_region
        _
      $region44: #{schnet_forward.6} parent=11 // pred_fallthru
        _
      // Predicated region
      $region45: #{schnet_forward.6} parent=11 // pred_check
        %p574 = pneg %p325
      $region46: #{schnet_forward.6} parent=11 // pred_check_branch
        %576 = sbr.rel (%p574) target = $region48
      $region47: #{schnet_forward.6} parent=11 // pred_region
        _
      $region48: #{schnet_forward.6} parent=11 // pred_fallthru
        _
      // Predicated region
      $region49: #{schnet_forward.6} parent=11 // pred_check
        %p577 = pneg %p346
      $region50: #{schnet_forward.6} parent=11 // pred_check_branch
        %579 = sbr.rel (%p577) target = $region52
      $region51: #{schnet_forward.6} parent=11 // pred_region
        _
      $region52: #{schnet_forward.6} parent=11 // pred_fallthru
        _
      // Predicated region
      $region53: #{schnet_forward.6} parent=11 // pred_check
        %p580 = pneg %p367
      $region54: #{schnet_forward.6} parent=11 // pred_check_branch
        %582 = sbr.rel (%p580) target = $region56
      $region55: #{schnet_forward.6} parent=11 // pred_region
        _
      $region56: #{schnet_forward.6} parent=11 // pred_fallthru
        _
      // Predicated region
      $region57: #{schnet_forward.6} parent=11 // pred_check
        %p583 = pneg %p388
      $region58: #{schnet_forward.6} parent=11 // pred_check_branch
        %585 = sbr.rel (%p583) target = $region60
      $region59: #{schnet_forward.6} parent=11 // pred_region
        _
      $region60: #{schnet_forward.6} parent=11 // pred_fallthru
        _
      // Predicated region
      $region61: #{schnet_forward.6} parent=11 // pred_check
        %p586 = pneg %p409
      $region62: #{schnet_forward.6} parent=11 // pred_check_branch
        %588 = sbr.rel (%p586) target = $region64
      $region63: #{schnet_forward.6} parent=11 // pred_region
        _
      $region64: #{schnet_forward.6} parent=11 // pred_fallthru
        _
      // Predicated region
      $region65: #{schnet_forward.6} parent=11 // pred_check
        %p589 = pneg %p430
      $region66: #{schnet_forward.6} parent=11 // pred_check_branch
        %591 = sbr.rel (%p589) target = $region68
      $region67: #{schnet_forward.6} parent=11 // pred_region
        _
      $region68: #{schnet_forward.6} parent=11 // pred_fallthru
        _
      // Predicated region
      $region69: #{schnet_forward.6} parent=11 // pred_check
        %p592 = pneg %p451
      $region70: #{schnet_forward.6} parent=11 // pred_check_branch
        %594 = sbr.rel (%p592) target = $region72
      $region71: #{schnet_forward.6} parent=11 // pred_region
        _
      $region72: #{schnet_forward.6} parent=11 // pred_fallthru
        _
      // Predicated region
      $region73: #{schnet_forward.6} parent=11 // pred_check
        %p595 = pneg %p472
      $region74: #{schnet_forward.6} parent=11 // pred_check_branch
        %597 = sbr.rel (%p595) target = $region76
      $region75: #{schnet_forward.6} parent=11 // pred_region
        _
      $region76: #{schnet_forward.6} parent=11 // pred_fallthru
        _
      // Predicated region
      $region77: #{schnet_forward.6} parent=11 // pred_check
        %p598 = pneg %p493
      $region78: #{schnet_forward.6} parent=11 // pred_check_branch
        %600 = sbr.rel (%p598) target = $region80
      $region79: #{schnet_forward.6} parent=11 // pred_region
        _
      $region80: #{schnet_forward.6} parent=11 // pred_fallthru
        _
      // Predicated region
      $region81: #{schnet_forward.6} parent=11 // pred_check
        %p601 = pneg %p514
      $region82: #{schnet_forward.6} parent=11 // pred_check_branch
        %603 = sbr.rel (%p601) target = $region84
      $region83: #{schnet_forward.6} parent=11 // pred_region
        _
      $region84: #{schnet_forward.6} parent=11 // pred_fallthru
        _
    $region12: #{schnet_forward.6} parent=5 // pred_fallthru
      _
    %p604 = scmp.lt.s32.totalorder %s32, 3
    // Predicated region
    $region85: #{schnet_forward.6} parent=5 // pred_check
      %p605 = pneg %p604
    $region86: #{schnet_forward.6} parent=5 // pred_check_branch
      %607 = sbr.rel (%p605) target = $region88
    $region87: #{schnet_forward.6} parent=5 // pred_region
      // Predicated region
      $region89: #{schnet_forward.6} parent=87 // pred_check
        %p608 = pneg %p73
      $region90: #{schnet_forward.6} parent=87 // pred_check_branch
        %610 = sbr.rel (%p608) target = $region92
      $region91: #{schnet_forward.6} parent=87 // pred_region
        %s611 = smul.u32 2, %s32
        %p612 = scmp.lt.s32.totalorder %s611, 5
        %s613 = scalar_select %p612, %s611, 5
        %s614 = smul.addr %s613, 8
        %s615 = scalar_lea.vmem %s1, %s614
        %s616 = smul.u32 2, %s32
      $region92: #{schnet_forward.6} parent=87 // pred_fallthru
        _
      // Predicated region
      $region93: #{schnet_forward.6} parent=87 // pred_check
        %p617 = pneg %p99
      $region94: #{schnet_forward.6} parent=87 // pred_check_branch
        %619 = sbr.rel (%p617) target = $region96
      $region95: #{schnet_forward.6} parent=87 // pred_region
        %s620 = smul.u32 2, %s32
        %p621 = scmp.lt.s32.totalorder %s620, 5
        %s622 = scalar_select %p621, %s620, 5
        %s623 = smul.addr %s622, 8
        %s624 = scalar_lea.vmem %s2, %s623
        %s625 = smul.u32 2, %s32
      $region96: #{schnet_forward.6} parent=87 // pred_fallthru
        _
      // Predicated region
      $region97: #{schnet_forward.6} parent=87 // pred_check
        %p626 = pneg %p125
      $region98: #{schnet_forward.6} parent=87 // pred_check_branch
        %628 = sbr.rel (%p626) target = $region100
      $region99: #{schnet_forward.6} parent=87 // pred_region
        %s629 = smul.u32 2, %s32
        %p630 = scmp.lt.s32.totalorder %s629, 5
        %s631 = scalar_select %p630, %s629, 5
        %s632 = smul.addr %s631, 8
        %s633 = scalar_lea.vmem %s3, %s632
        %s634 = smul.u32 2, %s32
      $region100: #{schnet_forward.6} parent=87 // pred_fallthru
        _
      // Predicated region
      $region101: #{schnet_forward.6} parent=87 // pred_check
        %p635 = pneg %p151
      $region102: #{schnet_forward.6} parent=87 // pred_check_branch
        %637 = sbr.rel (%p635) target = $region104
      $region103: #{schnet_forward.6} parent=87 // pred_region
        %s638 = smul.u32 2, %s32
        %p639 = scmp.lt.s32.totalorder %s638, 5
        %s640 = scalar_select %p639, %s638, 5
        %s641 = smul.addr %s640, 8
        %s642 = scalar_lea.vmem %s4, %s641
        %s643 = smul.u32 2, %s32
      $region104: #{schnet_forward.6} parent=87 // pred_fallthru
        _
    $region88: #{schnet_forward.6} parent=5 // pred_fallthru
      _
    %p644 = scmp.le.s32.totalorder 1, %s32
    %p645 = scmp.lt.s32.totalorder %s32, 4
    %p646 = pnand %p644, %p645
    %p647 = pneg %p646
    // Predicated region
    $region105: #{schnet_forward.6} parent=5 // pred_check
      _
    $region106: #{schnet_forward.6} parent=5 // pred_check_branch
      %649 = sbr.rel (%p646) target = $region108
    $region107: #{schnet_forward.6} parent=5 // pred_region
      %s650 = ssub.s32 %s32, 1
      %p651 = pneg %p53
      %p652 = pneg %p50
      %s653 = smul.u32 2, %s37
      %p654 = scmp.lt.s32.totalorder %s653, 5
      %s655 = scalar_select %p654, %s653, 5
      %s656 = smul.addr %s655, 8
      %s657 = scalar_lea.vmem %s1, %s656
      %p658 = pneg %p79
      %p659 = pneg %p76
      %s660 = smul.u32 2, %s37
      %p661 = scmp.lt.s32.totalorder %s660, 5
      %s662 = scalar_select %p661, %s660, 5
      %s663 = smul.addr %s662, 8
      %s664 = scalar_lea.vmem %s2, %s663
      %p665 = pneg %p105
      %p666 = pneg %p102
      %s667 = smul.u32 2, %s37
      %p668 = scmp.lt.s32.totalorder %s667, 5
      %s669 = scalar_select %p668, %s667, 5
      %s670 = smul.addr %s669, 8
      %s671 = scalar_lea.vmem %s3, %s670
      %p672 = pneg %p131
      %p673 = pneg %p128
      %s674 = smul.u32 2, %s37
      %p675 = scmp.lt.s32.totalorder %s674, 5
      %s676 = scalar_select %p675, %s674, 5
      %s677 = smul.addr %s676, 8
      %s678 = scalar_lea.vmem %s4, %s677
      %p679 = pneg %p157
      %p680 = pneg %p154
      %p681 = pneg %p178
      %p682 = pneg %p175
      %p683 = pneg %p199
      %p684 = pneg %p196
      %p685 = pneg %p220
      %p686 = pneg %p217
      %p687 = pneg %p241
      %p688 = pneg %p238
      %p689 = pneg %p262
      %p690 = pneg %p259
      %p691 = pneg %p283
      %p692 = pneg %p280
      %p693 = pneg %p304
      %p694 = pneg %p301
      %p695 = pneg %p325
      %p696 = pneg %p322
      %p697 = pneg %p346
      %p698 = pneg %p343
      %p699 = pneg %p367
      %p700 = pneg %p364
      %p701 = pneg %p388
      %p702 = pneg %p385
      %p703 = pneg %p409
      %p704 = pneg %p406
      %p705 = pneg %p430
      %p706 = pneg %p427
      %p707 = pneg %p451
      %p708 = pneg %p448
      %p709 = pneg %p472
      %p710 = pneg %p469
      %p711 = pneg %p493
      %p712 = pneg %p490
      %p713 = pneg %p514
      %p714 = pneg %p511
      %p715 = pneg %p535
      %p716 = pneg %p532
      %s717 = smul.u32 2, %s37
      %p718 = scmp.lt.s32.totalorder %s717, 5
      %s719 = scalar_select %p718, %s717, 5
      %s720 = smul.addr %s719, 8
      %s721 = scalar_lea.vmem %s1, %s720
      %s722 = smul.u32 2, %s37
      %s723 = smul.u32 2, %s37
      %p724 = scmp.lt.s32.totalorder %s723, 5
      %s725 = scalar_select %p724, %s723, 5
      %s726 = smul.addr %s725, 8
      %s727 = scalar_lea.vmem %s2, %s726
      %s728 = smul.u32 2, %s37
      %s729 = smul.u32 2, %s37
      %p730 = scmp.lt.s32.totalorder %s729, 5
      %s731 = scalar_select %p730, %s729, 5
      %s732 = smul.addr %s731, 8
      %s733 = scalar_lea.vmem %s3, %s732
      %s734 = smul.u32 2, %s37
      %s735 = smul.u32 2, %s37
      %p736 = scmp.lt.s32.totalorder %s735, 5
      %s737 = scalar_select %p736, %s735, 5
      %s738 = smul.addr %s737, 8
      %s739 = scalar_lea.vmem %s4, %s738
      %s740 = smul.u32 2, %s37
      %p741 = scmp.eq.s32.totalorder %s37, 0
      // Predicated region
      $region109: #{schnet_forward.6} parent=107 // pred_check
        %p742 = pneg %p741
      $region110: #{schnet_forward.6} parent=107 // pred_check_branch
        %744 = sbr.rel (%p742) target = $region112
      $region111: #{schnet_forward.6} parent=107 // pred_region
        %v745 = vld [vmem:[%s0] sm:$0xff]
        %v746 = vld [vmem:[%s0 + $0x8] sm:$0xff]
        %v747 = vld [vmem:[%s5] sm:$0xff]
        %v748 = vld [vmem:[%s5 + $0x8] sm:$0xff]
        %v749 = vld [vmem:[%s5 + $0x10] sm:$0xff]
        %v750 = vld [vmem:[%s5 + $0x18] sm:$0xff]
        %v751 = vld [vmem:[%s5 + $0x20] sm:$0xff]
        %v752 = vld [vmem:[%s5 + $0x28] sm:$0xff]
        %v753 = vld [vmem:[%s5 + $0x30] sm:$0xff]
        %v754 = vld [vmem:[%s5 + $0x38] sm:$0xff]
        %v755 = vld [vmem:[%s5 + $0x40] sm:$0xff]
        %v756 = vld [vmem:[%s5 + $0x48] sm:$0xff]
        %v757 = vld [vmem:[%s5 + $0x50] sm:$0xff]
        %v758 = vld [vmem:[%s5 + $0x58] sm:$0xff]
        %v759 = vld [vmem:[%s5 + $0x60] sm:$0xff]
        %v760 = vld [vmem:[%s5 + $0x68] sm:$0xff]
        %v761 = vld [vmem:[%s5 + $0x70] sm:$0xff]
        %v762 = vld [vmem:[%s5 + $0x78] sm:$0xff]
        %v763 = vld [vmem:[%s6] sm:$0x1]
        %v765 = vlaneseq
        %v766 = vshrl.u32 %v765, 7
        %v767 = vsub.s32 0, %v766
        %v768 = vrot.slane %v763, %v767
        %770 = vmatprep.subr.mxu0 0.0
        %771 = vmatpush1.msra.mxu0 %v747
        %772 = vmatprep.subr.mxu0 0.0
        %773 = vmatpush1.msra.mxu0 %v748
        %774 = vmatprep.subr.mxu0 0.0
        %775 = vmatpush1.msra.mxu0 %v749
        %776 = vmatprep.subr.mxu0 0.0
        %777 = vmatpush1.msra.mxu0 %v750
        %778 = vmatprep.subr.mxu0 0.0
        %779 = vmatpush1.msra.mxu0 %v751
        %780 = vmatprep.subr.mxu0 0.0
        %781 = vmatpush1.msra.mxu0 %v752
        %782 = vmatprep.subr.mxu0 0.0
        %783 = vmatpush1.msra.mxu0 %v753
        %784 = vmatprep.subr.mxu0 0.0
        %785 = vmatpush1.msra.mxu0 %v754
        %786 = vmatprep.subr.mxu0 0.0
        %787 = vmatpush1.msra.mxu0 %v755
        %788 = vmatprep.subr.mxu0 0.0
        %789 = vmatpush1.msra.mxu0 %v756
        %790 = vmatprep.subr.mxu0 0.0
        %791 = vmatpush1.msra.mxu0 %v757
        %792 = vmatprep.subr.mxu0 0.0
        %793 = vmatpush1.msra.mxu0 %v758
        %794 = vmatprep.subr.mxu0 0.0
        %795 = vmatpush1.msra.mxu0 %v759
        %796 = vmatprep.subr.mxu0 0.0
        %797 = vmatpush1.msra.mxu0 %v760
        %798 = vmatprep.subr.mxu0 0.0
        %799 = vmatpush1.msra.mxu0 %v761
        %800 = vmatprep.subr.mxu0 0.0
        %801 = vmatpush1.msra.mxu0 %v762
        %802 = vmatprep.subr.mxu0 0.0
        %803 = vmatpush1.msra.mxu0 0.0
        %804 = vmatprep.subr.mxu0 0.0
        %805 = vmatpush1.msra.mxu0 0.0
        %806 = vmatprep.subr.mxu0 0.0
        %807 = vmatpush1.msra.mxu0 0.0
        %808 = vmatprep.subr.mxu0 0.0
        %809 = vmatpush1.msra.mxu0 0.0
        %810 = vmatprep.subr.mxu0 0.0
        %811 = vmatpush1.msra.mxu0 0.0
        %812 = vmatprep.subr.mxu0 0.0
        %813 = vmatpush1.msra.mxu0 0.0
        %814 = vmatprep.subr.mxu0 0.0
        %815 = vmatpush1.msra.mxu0 0.0
        %816 = vmatprep.subr.mxu0 0.0
        %817 = vmatpush1.msra.mxu0 0.0
        %818 = vmatprep.subr.mxu0 0.0
        %819 = vmatpush1.msra.mxu0 0.0
        %820 = vmatprep.subr.mxu0 0.0
        %821 = vmatpush1.msra.mxu0 0.0
        %822 = vmatprep.subr.mxu0 0.0
        %823 = vmatpush1.msra.mxu0 0.0
        %824 = vmatprep.subr.mxu0 0.0
        %825 = vmatpush1.msra.mxu0 0.0
        %826 = vmatprep.subr.mxu0 0.0
        %827 = vmatpush1.msra.mxu0 0.0
        %828 = vmatprep.subr.mxu0 0.0
        %829 = vmatpush1.msra.mxu0 0.0
        %830 = vmatprep.subr.mxu0 0.0
        %831 = vmatpush1.msra.mxu0 0.0
        %832 = vmatprep.subr.mxu0 0.0
        %833 = vmatpush1.msra.mxu0 0.0
        %834 = vmatprep.mubr.f32.mxu0 0.0
        %835 = vmatmul.mubr.f32.gmra.mrb[0].mxu0 %v745
        %v836 = vpop.f32.mrb[0].mxu0
        %v837 = vadd.f32 %v768, %v836
        %v838 = vpop.f32.mrb[0].mxu0
        %839 = vmatprep.mubr.f32.mxu0 0.0
        %840 = vmatmul.mubr.f32.gmra.mrb[0].mxu0 %v746
        %v841 = vpop.f32.mrb[0].mxu0
        %v842 = vadd.f32 %v768, %v841
        %v843 = vpop.f32.mrb[0].mxu0
        %844 = vdwg.mxu0
        %v845 = vld [vmem:[%s7] sm:$0x1]
        %v846 = vld [vmem:[%s8] sm:$0x1]
        %v847 = vadd.f32 %v837, %v842
        %v848 = vrot.slane %v847, 4
        %v849 = vadd.f32 %v847, %v848
        %v850 = vrot.slane %v849, 2
        %v851 = vadd.f32 %v849, %v850
        %v852 = vrot.slane %v851, 1
        %v853 = vadd.f32 %v851, %v852
        %v854 = vrcp.pop 16.0
        %v855 = vmul.f32 %v853, %v854
        %v856 = vsub.f32 %v837, %v855
        %v857 = vsub.f32 %v842, %v855
        %v858 = vmul.f32 %v856, %v856
        %v859 = vmul.f32 %v857, %v857
        %v860 = vadd.f32 %v858, %v859
        %v861 = vrot.slane %v860, 4
        %v862 = vadd.f32 %v860, %v861
        %v863 = vrot.slane %v862, 2
        %v864 = vadd.f32 %v862, %v863
        %v865 = vrot.slane %v864, 1
        %v866 = vadd.f32 %v864, %v865
        %v867 = vmul.f32 %v866, %v854
        %v868 = vadd.f32 %v867, 1e-05
        %v869 = vrsqrt.pop %v868
        %v870 = vmul.f32 %v856, %v869
        %v871 = vmul.f32 %v857, %v869
        %v873 = vlaneseq
        %v874 = vshrl.u32 %v873, 7
        %v875 = vsub.s32 0, %v874
        %v876 = vrot.slane %v845, %v875
        %v878 = vmul.f32 %v870, %v876
        %v879 = vmul.f32 %v871, %v876
        %v881 = vlaneseq
        %v882 = vshrl.u32 %v881, 7
        %v883 = vsub.s32 0, %v882
        %v884 = vrot.slane %v846, %v883
        %v886 = vadd.f32 %v878, %v884
        %v887 = vadd.f32 %v879, %v884
        %vm888 = vcmp.ge.f32.partialorder %v886, 0.0
        %vm889 = vcmp.ge.f32.partialorder %v887, 0.0
        %v890 = vmul.f32 %v886, 0.2
        %v891 = vmul.f32 %v887, 0.2
        %v892 = vsel %vm888, %v886, %v890
        %v893 = vsel %vm889, %v887, %v891
        %894 = vst [vmem:[#allocation2] sm:$0xff] %v892
        %895 = vst [vmem:[#allocation2 + $0x8] sm:$0xff] %v893
        %896 = vst [vmem:[#allocation3] sm:$0xff] 0.0
        %897 = vst [vmem:[#allocation3 + $0x8] sm:$0xff] 0.0
      $region112: #{schnet_forward.6} parent=107 // pred_fallthru
        _
      %v898 = vld [vmem:[%s721] sm:$0xff]
      %v899 = vld [vmem:[%s721 + $0x8] sm:$0xff]
      %v900 = vld [vmem:[%s14] sm:$0x1]
      %902 = vset.pattern.permute.xlu0 0
      %903 = vperm.xlu0 %902, %v898
      %v904 = vpop.permute.xlu0 %903
      %907 = vset.pattern.permute.xlu0 0
      %908 = vperm.xlu0 %907, %v899
      %v909 = vpop.permute.xlu0 %908
      %v912 = vlaneseq
      %v913 = vshrl.u32 %v912, 7
      %v914 = vsub.s32 0, %v913
      %v915 = vrot.slane %v900, %v914
      %v917 = vmul.f32 %v904, %v915
      %v918 = vmul.f32 %v909, %v915
      %v919 = vld [vmem:[%s15] sm:$0x1]
      %v921 = vlaneseq
      %v922 = vshrl.u32 %v921, 7
      %v923 = vsub.s32 0, %v922
      %v924 = vrot.slane %v919, %v923
      %v926 = vadd.f32 %v917, %v924
      %v927 = vadd.f32 %v918, %v924
      %v928 = vmax.f32 %v926, 0.0
      %v929 = vmax.f32 %v927, 0.0
      %v930 = vld [vmem:[%s16] sm:$0x1]
      %v932 = vlaneseq
      %v933 = vshrl.u32 %v932, 7
      %v934 = vsub.s32 0, %v933
      %v935 = vrot.slane %v930, %v934
      %v937 = vmul.f32 %v928, %v935
      %v938 = vmul.f32 %v929, %v935
      %vm939 = vcmask 261120
      %v940 = vsel %vm939, %v937, 0.0
      %941 = vadd.xlane.f32.xlu0 %v940
      %v942 = vpop.xlane.xlu0 %941
      %v943 = vsel %vm939, %v938, 0.0
      %944 = vadd.xlane.f32.xlu0 %v943
      %v945 = vpop.xlane.xlu0 %944
      %v946 = vld [vmem:[#allocation5] sm:$0x1]
      %v948 = vlaneseq
      %v949 = vshrl.u32 %v948, 7
      %v950 = vsub.s32 0, %v949
      %v951 = vrot.slane %v946, %v950
      %v953 = vadd.f32 %v942, %v951
      %v954 = vadd.f32 %v945, %v951
      %v955 = vsub.f32 0.0, %v953
      %v956 = vsub.f32 0.0, %v954
      %v957 = vmul.f32 %v955, 1.442695
      %v958 = vpow.pop %v957
      %v959 = vmul.f32 %v956, 1.442695
      %v960 = vpow.pop %v959
      %v961 = vadd.f32 %v958, 1.0
      %v962 = vadd.f32 %v960, 1.0
      %v963 = vrcp.pop %v961
      %v964 = vmul.f32 1.0, %v963
      %v965 = vrcp.pop %v962
      %v966 = vmul.f32 1.0, %v965
      %v967 = vsub.f32 %v898, 10.0
      %v968 = vsub.f32 %v899, 10.0
      %v969 = vmul.f32 %v967, %v967
      %v970 = vmul.f32 %v968, %v968
      %v971 = vsub.f32 0.0, %v969
      %v972 = vsub.f32 0.0, %v970
      %v973 = vrcp.pop 200.0
      %v974 = vmul.f32 %v971, %v973
      %v975 = vmul.f32 %v972, %v973
      %v976 = vmul.f32 %v974, 1.442695
      %v977 = vpow.pop %v976
      %v978 = vmul.f32 %v975, 1.442695
      %v979 = vpow.pop %v978
      %vm980 = vcmp.le.f32.partialorder %v898, 10.0
      %vm981 = vcmp.le.f32.partialorder %v899, 10.0
      %v982 = vsel %vm980, 1, 0
      %v983 = vsel %vm981, 1, 0
      %v984 = vcvt.s32.f32 %v982
      %v985 = vcvt.s32.f32 %v983
      %v986 = vmul.f32 %v977, %v984
      %v987 = vmul.f32 %v979, %v985
      %vm988 = vcmp.ge.f32.partialorder %v898, 0.0
      %vm989 = vcmp.ge.f32.partialorder %v899, 0.0
      %v990 = vsel %vm988, 1, 0
      %v991 = vsel %vm989, 1, 0
      %v992 = vcvt.s32.f32 %v990
      %v993 = vcvt.s32.f32 %v991
      %v994 = vmul.f32 %v986, %v992
      %v995 = vmul.f32 %v987, %v993
      %v996 = vmul.f32 %v964, %v994
      %v997 = vmul.f32 %v966, %v995
      %v998 = vld [vmem:[%s727] sm:$0xff]
      %v999 = vld [vmem:[%s727 + $0x8] sm:$0xff]
      %v1000 = vld [vmem:[%s9] sm:$0xff]
      %v1001 = vld [vmem:[%s9 + $0x8] sm:$0xff]
      %v1002 = vld [vmem:[%s9 + $0x10] sm:$0xff]
      %v1003 = vld [vmem:[%s9 + $0x18] sm:$0xff]
      %v1004 = vld [vmem:[%s9 + $0x20] sm:$0xff]
      %v1005 = vld [vmem:[%s9 + $0x28] sm:$0xff]
      %v1006 = vld [vmem:[%s9 + $0x30] sm:$0xff]
      %v1007 = vld [vmem:[%s9 + $0x38] sm:$0xff]
      %v1008 = vld [vmem:[%s9 + $0x40] sm:$0xff]
      %v1009 = vld [vmem:[%s9 + $0x48] sm:$0xff]
      %v1010 = vld [vmem:[%s9 + $0x50] sm:$0xff]
      %v1011 = vld [vmem:[%s9 + $0x58] sm:$0xff]
      %v1012 = vld [vmem:[%s9 + $0x60] sm:$0xff]
      %v1013 = vld [vmem:[%s9 + $0x68] sm:$0xff]
      %v1014 = vld [vmem:[%s9 + $0x70] sm:$0xff]
      %v1015 = vld [vmem:[%s9 + $0x78] sm:$0xff]
      %v1016 = vld [vmem:[%s10] sm:$0x1]
      %v1018 = vlaneseq
      %v1019 = vshrl.u32 %v1018, 7
      %v1020 = vsub.s32 0, %v1019
      %v1021 = vrot.slane %v1016, %v1020
      %1023 = vmatprep.subr.mxu0 0.0
      %1024 = vmatpush1.msra.mxu0 %v1000
      %1025 = vmatprep.subr.mxu0 0.0
      %1026 = vmatpush1.msra.mxu0 %v1001
      %1027 = vmatprep.subr.mxu0 0.0
      %1028 = vmatpush1.msra.mxu0 %v1002
      %1029 = vmatprep.subr.mxu0 0.0
      %1030 = vmatpush1.msra.mxu0 %v1003
      %1031 = vmatprep.subr.mxu0 0.0
      %1032 = vmatpush1.msra.mxu0 %v1004
      %1033 = vmatprep.subr.mxu0 0.0
      %1034 = vmatpush1.msra.mxu0 %v1005
      %1035 = vmatprep.subr.mxu0 0.0
      %1036 = vmatpush1.msra.mxu0 %v1006
      %1037 = vmatprep.subr.mxu0 0.0
      %1038 = vmatpush1.msra.mxu0 %v1007
      %1039 = vmatprep.subr.mxu0 0.0
      %1040 = vmatpush1.msra.mxu0 %v1008
      %1041 = vmatprep.subr.mxu0 0.0
      %1042 = vmatpush1.msra.mxu0 %v1009
      %1043 = vmatprep.subr.mxu0 0.0
      %1044 = vmatpush1.msra.mxu0 %v1010
      %1045 = vmatprep.subr.mxu0 0.0
      %1046 = vmatpush1.msra.mxu0 %v1011
      %1047 = vmatprep.subr.mxu0 0.0
      %1048 = vmatpush1.msra.mxu0 %v1012
      %1049 = vmatprep.subr.mxu0 0.0
      %1050 = vmatpush1.msra.mxu0 %v1013
      %1051 = vmatprep.subr.mxu0 0.0
      %1052 = vmatpush1.msra.mxu0 %v1014
      %1053 = vmatprep.subr.mxu0 0.0
      %1054 = vmatpush1.msra.mxu0 %v1015
      %1055 = vmatprep.subr.mxu0 0.0
      %1056 = vmatpush1.msra.mxu0 0.0
      %1057 = vmatprep.subr.mxu0 0.0
      %1058 = vmatpush1.msra.mxu0 0.0
      %1059 = vmatprep.subr.mxu0 0.0
      %1060 = vmatpush1.msra.mxu0 0.0
      %1061 = vmatprep.subr.mxu0 0.0
      %1062 = vmatpush1.msra.mxu0 0.0
      %1063 = vmatprep.subr.mxu0 0.0
      %1064 = vmatpush1.msra.mxu0 0.0
      %1065 = vmatprep.subr.mxu0 0.0
      %1066 = vmatpush1.msra.mxu0 0.0
      %1067 = vmatprep.subr.mxu0 0.0
      %1068 = vmatpush1.msra.mxu0 0.0
      %1069 = vmatprep.subr.mxu0 0.0
      %1070 = vmatpush1.msra.mxu0 0.0
      %1071 = vmatprep.subr.mxu0 0.0
      %1072 = vmatpush1.msra.mxu0 0.0
      %1073 = vmatprep.subr.mxu0 0.0
      %1074 = vmatpush1.msra.mxu0 0.0
      %1075 = vmatprep.subr.mxu0 0.0
      %1076 = vmatpush1.msra.mxu0 0.0
      %1077 = vmatprep.subr.mxu0 0.0
      %1078 = vmatpush1.msra.mxu0 0.0
      %1079 = vmatprep.subr.mxu0 0.0
      %1080 = vmatpush1.msra.mxu0 0.0
      %1081 = vmatprep.subr.mxu0 0.0
      %1082 = vmatpush1.msra.mxu0 0.0
      %1083 = vmatprep.subr.mxu0 0.0
      %1084 = vmatpush1.msra.mxu0 0.0
      %1085 = vmatprep.subr.mxu0 0.0
      %1086 = vmatpush1.msra.mxu0 0.0
      %1087 = vmatprep.mubr.f32.mxu0 0.0
      %1088 = vmatmul.mubr.f32.gmra.mrb[0].mxu0 %v998
      %v1089 = vpop.f32.mrb[0].mxu0
      %v1090 = vadd.f32 %v1021, %v1089
      %v1091 = vpop.f32.mrb[0].mxu0
      %1092 = vmatprep.mubr.f32.mxu0 0.0
      %1093 = vmatmul.mubr.f32.gmra.mrb[0].mxu0 %v999
      %v1094 = vpop.f32.mrb[0].mxu0
      %v1095 = vadd.f32 %v1021, %v1094
      %v1096 = vpop.f32.mrb[0].mxu0
      %1097 = vdwg.mxu0
      %v1098 = vld [vmem:[#allocation4] sm:$0x1]
      %v1100 = vlaneseq
      %v1101 = vshrl.u32 %v1100, 7
      %v1102 = vsub.s32 0, %v1101
      %v1103 = vrot.slane %v1098, %v1102
      %1104 = vset.pattern.permute.xlu0 0
      %1105 = vperm.xlu0 %1104, %v1103
      %v1106 = vpop.permute.xlu0 %1105
      %v1108 = vmul.f32 %v1106, %v1090
      %v1109 = vmul.f32 %v1106, %v1095
      %v1110 = vmax.f32 %v1108, 0.0
      %v1111 = vmax.f32 %v1109, 0.0
      %v1112 = vand.u32 2147483647, %v1108
      %v1113 = vand.u32 2147483647, %v1109
      %v1114 = vsub.f32 0.0, %v1112
      %v1115 = vsub.f32 0.0, %v1113
      %v1116 = vmul.f32 %v1114, 1.442695
      %v1117 = vpow.pop %v1116
      %v1118 = vmul.f32 %v1115, 1.442695
      %v1119 = vpow.pop %v1118
      %v1120 = vadd.f32 %v1117, 1.0
      %v1121 = vadd.f32 %v1119, 1.0
      %v1122 = vlog2.pop %v1120
      %v1123 = vmul.f32 %v1122, 0.6931472
      %v1124 = vlog2.pop %v1121
      %v1125 = vmul.f32 %v1124, 0.6931472
      %v1126 = vadd.f32 %v1110, %v1123
      %v1127 = vadd.f32 %v1111, %v1125
      %v1128 = vsub.f32 %v1126, 0.6931472
      %v1129 = vsub.f32 %v1127, 0.6931472
      %v1130 = vld [vmem:[%s12] sm:$0xff]
      %v1131 = vld [vmem:[%s12 + $0x8] sm:$0xff]
      %v1132 = vld [vmem:[%s12 + $0x10] sm:$0xff]
      %v1133 = vld [vmem:[%s12 + $0x18] sm:$0xff]
      %v1134 = vld [vmem:[%s12 + $0x20] sm:$0xff]
      %v1135 = vld [vmem:[%s12 + $0x28] sm:$0xff]
      %v1136 = vld [vmem:[%s12 + $0x30] sm:$0xff]
      %v1137 = vld [vmem:[%s12 + $0x38] sm:$0xff]
      %v1138 = vld [vmem:[%s12 + $0x40] sm:$0xff]
      %v1139 = vld [vmem:[%s12 + $0x48] sm:$0xff]
      %v1140 = vld [vmem:[%s12 + $0x50] sm:$0xff]
      %v1141 = vld [vmem:[%s12 + $0x58] sm:$0xff]
      %v1142 = vld [vmem:[%s12 + $0x60] sm:$0xff]
      %v1143 = vld [vmem:[%s12 + $0x68] sm:$0xff]
      %v1144 = vld [vmem:[%s12 + $0x70] sm:$0xff]
      %v1145 = vld [vmem:[%s12 + $0x78] sm:$0xff]
      %v1146 = vld [vmem:[%s13] sm:$0x1]
      %v1148 = vlaneseq
      %v1149 = vshrl.u32 %v1148, 7
      %v1150 = vsub.s32 0, %v1149
      %v1151 = vrot.slane %v1146, %v1150
      %1153 = vmatprep.subr.mxu0 0.0
      %1154 = vmatpush1.msra.mxu0 %v1130
      %1155 = vmatprep.subr.mxu0 0.0
      %1156 = vmatpush1.msra.mxu0 %v1131
      %1157 = vmatprep.subr.mxu0 0.0
      %1158 = vmatpush1.msra.mxu0 %v1132
      %1159 = vmatprep.subr.mxu0 0.0
      %1160 = vmatpush1.msra.mxu0 %v1133
      %1161 = vmatprep.subr.mxu0 0.0
      %1162 = vmatpush1.msra.mxu0 %v1134
      %1163 = vmatprep.subr.mxu0 0.0
      %1164 = vmatpush1.msra.mxu0 %v1135
      %1165 = vmatprep.subr.mxu0 0.0
      %1166 = vmatpush1.msra.mxu0 %v1136
      %1167 = vmatprep.subr.mxu0 0.0
      %1168 = vmatpush1.msra.mxu0 %v1137
      %1169 = vmatprep.subr.mxu0 0.0
      %1170 = vmatpush1.msra.mxu0 %v1138
      %1171 = vmatprep.subr.mxu0 0.0
      %1172 = vmatpush1.msra.mxu0 %v1139
      %1173 = vmatprep.subr.mxu0 0.0
      %1174 = vmatpush1.msra.mxu0 %v1140
      %1175 = vmatprep.subr.mxu0 0.0
      %1176 = vmatpush1.msra.mxu0 %v1141
      %1177 = vmatprep.subr.mxu0 0.0
      %1178 = vmatpush1.msra.mxu0 %v1142
      %1179 = vmatprep.subr.mxu0 0.0
      %1180 = vmatpush1.msra.mxu0 %v1143
      %1181 = vmatprep.subr.mxu0 0.0
      %1182 = vmatpush1.msra.mxu0 %v1144
      %1183 = vmatprep.subr.mxu0 0.0
      %1184 = vmatpush1.msra.mxu0 %v1145
      %1185 = vmatprep.subr.mxu0 0.0
      %1186 = vmatpush1.msra.mxu0 0.0
      %1187 = vmatprep.subr.mxu0 0.0
      %1188 = vmatpush1.msra.mxu0 0.0
      %1189 = vmatprep.subr.mxu0 0.0
      %1190 = vmatpush1.msra.mxu0 0.0
      %1191 = vmatprep.subr.mxu0 0.0
      %1192 = vmatpush1.msra.mxu0 0.0
      %1193 = vmatprep.subr.mxu0 0.0
      %1194 = vmatpush1.msra.mxu0 0.0
      %1195 = vmatprep.subr.mxu0 0.0
      %1196 = vmatpush1.msra.mxu0 0.0
      %1197 = vmatprep.subr.mxu0 0.0
      %1198 = vmatpush1.msra.mxu0 0.0
      %1199 = vmatprep.subr.mxu0 0.0
      %1200 = vmatpush1.msra.mxu0 0.0
      %1201 = vmatprep.subr.mxu0 0.0
      %1202 = vmatpush1.msra.mxu0 0.0
      %1203 = vmatprep.subr.mxu0 0.0
      %1204 = vmatpush1.msra.mxu0 0.0
      %1205 = vmatprep.subr.mxu0 0.0
      %1206 = vmatpush1.msra.mxu0 0.0
      %1207 = vmatprep.subr.mxu0 0.0
      %1208 = vmatpush1.msra.mxu0 0.0
      %1209 = vmatprep.subr.mxu0 0.0
      %1210 = vmatpush1.msra.mxu0 0.0
      %1211 = vmatprep.subr.mxu0 0.0
      %1212 = vmatpush1.msra.mxu0 0.0
      %1213 = vmatprep.subr.mxu0 0.0
      %1214 = vmatpush1.msra.mxu0 0.0
      %1215 = vmatprep.subr.mxu0 0.0
      %1216 = vmatpush1.msra.mxu0 0.0
      %1217 = vmatprep.mubr.f32.mxu0 0.0
      %1218 = vmatmul.mubr.f32.gmra.mrb[0].mxu0 %v1128
      %v1219 = vpop.f32.mrb[0].mxu0
      %v1220 = vadd.f32 %v1151, %v1219
      %v1221 = vpop.f32.mrb[0].mxu0
      %1222 = vmatprep.mubr.f32.mxu0 0.0
      %1223 = vmatmul.mubr.f32.gmra.mrb[0].mxu0 %v1129
      %v1224 = vpop.f32.mrb[0].mxu0
      %v1225 = vadd.f32 %v1151, %v1224
      %v1226 = vpop.f32.mrb[0].mxu0
      %1227 = vdwg.mxu0
      %1229 = vset.pattern.permute.xlu0 0
      %1230 = vperm.xlu0 %1229, %v996
      %v1231 = vpop.permute.xlu0 %1230
      %1234 = vset.pattern.permute.xlu0 0
      %1235 = vperm.xlu0 %1234, %v997
      %v1236 = vpop.permute.xlu0 %1235
      %v1238 = vmul.f32 %v1220, %v1231
      %v1239 = vmul.f32 %v1225, %v1236
      %s1240 = smul.u32 %s37, 16
      %v1241 = vlaneseq
      %v1242 = vshrl.u32 %v1241, 7
      %v1243 = vadd.s32 %v1242, 8
      %v1244 = vstv %s1240
      %v1245 = vadd.s32 %v1244, %v1242
      %v1246 = vadd.s32 %v1244, %v1243
      %vm1247 = vcmp.lt.s32.totalorder %v1245, 40
      %vm1248 = vcmp.lt.s32.totalorder %v1246, 40
      %v1249 = vsel %vm1247, 1, 0
      %v1250 = vsel %vm1248, 1, 0
      %vm1251 = vcmp.eq.s32.totalorder %v1249, 1
      %vm1252 = vcmp.eq.s32.totalorder %v1250, 1
      %v1253 = vsel %vm1251, %v1238, 0.0
      %v1254 = vsel %vm1252, %v1239, 0.0
      %v1255 = vlaneseq
      %v1256 = vand.u32 %v1255, 127
      %v1257 = vld [vmem:[%s733] sm:$0xff]
      %v1258 = vld [vmem:[%s733 + $0x8] sm:$0xff]
      %1259 = vset.pattern.permute.xlu0 0
      %1260 = vperm.xlu0 %1259, %v1257
      %v1261 = vpop.permute.xlu0 %1260
      %1262 = vset.pattern.permute.xlu0 0
      %1263 = vperm.xlu0 %1262, %v1258
      %v1264 = vpop.permute.xlu0 %1263
      %vm1265 = vcmp.eq.s32.totalorder %v1261, %v1256
      %vm1266 = vcmp.eq.s32.totalorder %v1264, %v1256
      %v1267 = vsel %vm1265, 1, 0
      %v1268 = vsel %vm1266, 1, 0
      %v1269 = vcvt.s32.f32 %v1267
      %v1270 = vcvt.s32.f32 %v1268
      %v1271 = vld [vmem:[%s739] sm:$0xff]
      %v1272 = vld [vmem:[%s739 + $0x8] sm:$0xff]
      %1273 = vset.pattern.permute.xlu0 0
      %1274 = vperm.xlu0 %1273, %v1271
      %v1275 = vpop.permute.xlu0 %1274
      %1276 = vset.pattern.permute.xlu0 0
      %1277 = vperm.xlu0 %1276, %v1272
      %v1278 = vpop.permute.xlu0 %1277
      %vm1279 = vcmp.eq.s32.totalorder %v1275, %v1256
      %vm1280 = vcmp.eq.s32.totalorder %v1278, %v1256
      %v1281 = vsel %vm1279, 1, 0
      %v1282 = vsel %vm1280, 1, 0
      %v1283 = vcvt.s32.f32 %v1281
      %v1284 = vcvt.s32.f32 %v1282
      %v1285 = vld [vmem:[#allocation2] sm:$0xff]
      %v1286 = vld [vmem:[#allocation2 + $0x8] sm:$0xff]
      %vm1287 = vcmask 130048
      %v1289 = vsel %vm1287, %v1269, 0
      %v1292 = vsel %vm1287, %v1270, 0
      %1294 = vmatprep.subr.mxu0 0.0
      %1295 = vmatpush1.msra.mxu0 %v1285
      %1296 = vmatprep.subr.mxu0 0.0
      %1297 = vmatpush1.msra.mxu0 %v1286
      %1298 = vmatprep.subr.mxu0 0.0
      %1299 = vmatpush1.msra.mxu0 0.0
      %1300 = vmatprep.subr.mxu0 0.0
      %1301 = vmatpush1.msra.mxu0 0.0
      %1302 = vmatprep.subr.mxu0 0.0
      %1303 = vmatpush1.msra.mxu0 0.0
      %1304 = vmatprep.subr.mxu0 0.0
      %1305 = vmatpush1.msra.mxu0 0.0
      %1306 = vmatprep.subr.mxu0 0.0
      %1307 = vmatpush1.msra.mxu0 0.0
      %1308 = vmatprep.subr.mxu0 0.0
      %1309 = vmatpush1.msra.mxu0 0.0
      %1310 = vmatprep.subr.mxu0 0.0
      %1311 = vmatpush1.msra.mxu0 0.0
      %1312 = vmatprep.subr.mxu0 0.0
      %1313 = vmatpush1.msra.mxu0 0.0
      %1314 = vmatprep.subr.mxu0 0.0
      %1315 = vmatpush1.msra.mxu0 0.0
      %1316 = vmatprep.subr.mxu0 0.0
      %1317 = vmatpush1.msra.mxu0 0.0
      %1318 = vmatprep.subr.mxu0 0.0
      %1319 = vmatpush1.msra.mxu0 0.0
      %1320 = vmatprep.subr.mxu0 0.0
      %1321 = vmatpush1.msra.mxu0 0.0
      %1322 = vmatprep.subr.mxu0 0.0
      %1323 = vmatpush1.msra.mxu0 0.0
      %1324 = vmatprep.subr.mxu0 0.0
      %1325 = vmatpush1.msra.mxu0 0.0
      %1326 = vmatprep.subr.mxu0 0.0
      %1327 = vmatpush1.msra.mxu0 0.0
      %1328 = vmatprep.subr.mxu0 0.0
      %1329 = vmatpush1.msra.mxu0 0.0
      %1330 = vmatprep.subr.mxu0 0.0
      %1331 = vmatpush1.msra.mxu0 0.0
      %1332 = vmatprep.subr.mxu0 0.0
      %1333 = vmatpush1.msra.mxu0 0.0
      %1334 = vmatprep.subr.mxu0 0.0
      %1335 = vmatpush1.msra.mxu0 0.0
      %1336 = vmatprep.subr.mxu0 0.0
      %1337 = vmatpush1.msra.mxu0 0.0
      %1338 = vmatprep.subr.mxu0 0.0
      %1339 = vmatpush1.msra.mxu0 0.0
      %1340 = vmatprep.subr.mxu0 0.0
      %1341 = vmatpush1.msra.mxu0 0.0
      %1342 = vmatprep.subr.mxu0 0.0
      %1343 = vmatpush1.msra.mxu0 0.0
      %1344 = vmatprep.subr.mxu0 0.0
      %1345 = vmatpush1.msra.mxu0 0.0
      %1346 = vmatprep.subr.mxu0 0.0
      %1347 = vmatpush1.msra.mxu0 0.0
      %1348 = vmatprep.subr.mxu0 0.0
      %1349 = vmatpush1.msra.mxu0 0.0
      %1350 = vmatprep.subr.mxu0 0.0
      %1351 = vmatpush1.msra.mxu0 0.0
      %1352 = vmatprep.subr.mxu0 0.0
      %1353 = vmatpush1.msra.mxu0 0.0
      %1354 = vmatprep.subr.mxu0 0.0
      %1355 = vmatpush1.msra.mxu0 0.0
      %1356 = vmatprep.subr.mxu0 0.0
      %1357 = vmatpush1.msra.mxu0 0.0
      %1358 = vmatprep.mubr.f32.mxu0 0.0
      %1359 = vmatmul.mubr.f32.gmra.mrb[0].mxu0 %v1289
      %v1360 = vpop.f32.mrb[0].mxu0
      %v1361 = vadd.f32 0.0, %v1360
      %v1362 = vpop.f32.mrb[0].mxu0
      %1363 = vmatprep.mubr.f32.mxu0 0.0
      %1364 = vmatmul.mubr.f32.gmra.mrb[0].mxu0 %v1292
      %v1365 = vpop.f32.mrb[0].mxu0
      %v1366 = vadd.f32 0.0, %v1365
      %v1367 = vpop.f32.mrb[0].mxu0
      %1368 = vdwg.mxu0
      %v1369 = vmul.f32 %v1361, %v1253
      %v1370 = vmul.f32 %v1366, %v1254
      %v1371 = vld [vmem:[#allocation3] sm:$0xff]
      %v1372 = vld [vmem:[#allocation3 + $0x8] sm:$0xff]
      %1373 = vxpose.xlu0.b32.start [1/16] %v1283, 128
      %1374 = vxpose.xlu0.b32.cont [2/16] %v1284, 128
      %1375 = vxpose.xlu0.b32.cont [3/16] 0.0, 128
      %1376 = vxpose.xlu0.b32.cont [4/16] 0.0, 128
      %1377 = vxpose.xlu0.b32.cont [5/16] 0.0, 128
      %1378 = vxpose.xlu0.b32.cont [6/16] 0.0, 128
      %1379 = vxpose.xlu0.b32.cont [7/16] 0.0, 128
      %1380 = vxpose.xlu0.b32.cont [8/16] 0.0, 128
      %1381 = vxpose.xlu0.b32.cont [9/16] 0.0, 128
      %1382 = vxpose.xlu0.b32.cont [10/16] 0.0, 128
      %1383 = vxpose.xlu0.b32.cont [11/16] 0.0, 128
      %1384 = vxpose.xlu0.b32.cont [12/16] 0.0, 128
      %1385 = vxpose.xlu0.b32.cont [13/16] 0.0, 128
      %1386 = vxpose.xlu0.b32.cont [14/16] 0.0, 128
      %1387 = vxpose.xlu0.b32.cont [15/16] 0.0, 128
      %1388 = vxpose.xlu0.b32.end [16/16] 0.0, 128
      %v1389 = vpop.trf.xlu0
      %v1390 = vpop.trf.xlu0
      %v1391 = vpop.trf.xlu0
      %v1392 = vpop.trf.xlu0
      %v1393 = vpop.trf.xlu0
      %v1394 = vpop.trf.xlu0
      %v1395 = vpop.trf.xlu0
      %v1396 = vpop.trf.xlu0
      %v1397 = vpop.trf.xlu0
      %v1398 = vpop.trf.xlu0
      %v1399 = vpop.trf.xlu0
      %v1400 = vpop.trf.xlu0
      %v1401 = vpop.trf.xlu0
      %v1402 = vpop.trf.xlu0
      %v1403 = vpop.trf.xlu0
      %v1404 = vpop.trf.xlu0
      %v1406 = vsel %vm1287, %v1389, 0
      %v1409 = vsel %vm1287, %v1390, 0
      %1411 = vmatprep.subr.mxu0 0.0
      %1412 = vmatpush1.msra.mxu0 %v1369
      %1413 = vmatprep.subr.mxu0 0.0
      %1414 = vmatpush1.msra.mxu0 %v1370
      %1415 = vmatprep.subr.mxu0 0.0
      %1416 = vmatpush1.msra.mxu0 0.0
      %1417 = vmatprep.subr.mxu0 0.0
      %1418 = vmatpush1.msra.mxu0 0.0
      %1419 = vmatprep.subr.mxu0 0.0
      %1420 = vmatpush1.msra.mxu0 0.0
      %1421 = vmatprep.subr.mxu0 0.0
      %1422 = vmatpush1.msra.mxu0 0.0
      %1423 = vmatprep.subr.mxu0 0.0
      %1424 = vmatpush1.msra.mxu0 0.0
      %1425 = vmatprep.subr.mxu0 0.0
      %1426 = vmatpush1.msra.mxu0 0.0
      %1427 = vmatprep.subr.mxu0 0.0
      %1428 = vmatpush1.msra.mxu0 0.0
      %1429 = vmatprep.subr.mxu0 0.0
      %1430 = vmatpush1.msra.mxu0 0.0
      %1431 = vmatprep.subr.mxu0 0.0
      %1432 = vmatpush1.msra.mxu0 0.0
      %1433 = vmatprep.subr.mxu0 0.0
      %1434 = vmatpush1.msra.mxu0 0.0
      %1435 = vmatprep.subr.mxu0 0.0
      %1436 = vmatpush1.msra.mxu0 0.0
      %1437 = vmatprep.subr.mxu0 0.0
      %1438 = vmatpush1.msra.mxu0 0.0
      %1439 = vmatprep.subr.mxu0 0.0
      %1440 = vmatpush1.msra.mxu0 0.0
      %1441 = vmatprep.subr.mxu0 0.0
      %1442 = vmatpush1.msra.mxu0 0.0
      %1443 = vmatprep.subr.mxu0 0.0
      %1444 = vmatpush1.msra.mxu0 0.0
      %1445 = vmatprep.subr.mxu0 0.0
      %1446 = vmatpush1.msra.mxu0 0.0
      %1447 = vmatprep.subr.mxu0 0.0
      %1448 = vmatpush1.msra.mxu0 0.0
      %1449 = vmatprep.subr.mxu0 0.0
      %1450 = vmatpush1.msra.mxu0 0.0
      %1451 = vmatprep.subr.mxu0 0.0
      %1452 = vmatpush1.msra.mxu0 0.0
      %1453 = vmatprep.subr.mxu0 0.0
      %1454 = vmatpush1.msra.mxu0 0.0
      %1455 = vmatprep.subr.mxu0 0.0
      %1456 = vmatpush1.msra.mxu0 0.0
      %1457 = vmatprep.subr.mxu0 0.0
      %1458 = vmatpush1.msra.mxu0 0.0
      %1459 = vmatprep.subr.mxu0 0.0
      %1460 = vmatpush1.msra.mxu0 0.0
      %1461 = vmatprep.subr.mxu0 0.0
      %1462 = vmatpush1.msra.mxu0 0.0
      %1463 = vmatprep.subr.mxu0 0.0
      %1464 = vmatpush1.msra.mxu0 0.0
      %1465 = vmatprep.subr.mxu0 0.0
      %1466 = vmatpush1.msra.mxu0 0.0
      %1467 = vmatprep.subr.mxu0 0.0
      %1468 = vmatpush1.msra.mxu0 0.0
      %1469 = vmatprep.subr.mxu0 0.0
      %1470 = vmatpush1.msra.mxu0 0.0
      %1471 = vmatprep.subr.mxu0 0.0
      %1472 = vmatpush1.msra.mxu0 0.0
      %1473 = vmatprep.subr.mxu0 0.0
      %1474 = vmatpush1.msra.mxu0 0.0
      %1475 = vmatprep.mubr.f32.mxu0 0.0
      %1476 = vmatmul.mubr.f32.gmra.mrb[0].mxu0 %v1406
      %v1477 = vpop.f32.mrb[0].mxu0
      %v1478 = vadd.f32 0.0, %v1477
      %v1479 = vpop.f32.mrb[0].mxu0
      %1480 = vmatprep.mubr.f32.mxu0 0.0
      %1481 = vmatmul.mubr.f32.gmra.mrb[0].mxu0 %v1409
      %v1482 = vpop.f32.mrb[0].mxu0
      %v1483 = vadd.f32 0.0, %v1482
      %v1484 = vpop.f32.mrb[0].mxu0
      %1485 = vdwg.mxu0
      %v1486 = vadd.f32 %v1371, %v1478
      %v1487 = vadd.f32 %v1372, %v1483
      %1488 = vst [vmem:[#allocation3] sm:$0xff] %v1486
      %1489 = vst [vmem:[#allocation3 + $0x8] sm:$0xff] %v1487
      %p1490 = scmp.eq.s32.totalorder %s37, 2
      // Predicated region
      $region113: #{schnet_forward.6} parent=107 // pred_check
        %p1491 = pneg %p1490
      $region114: #{schnet_forward.6} parent=107 // pred_check_branch
        %1493 = sbr.rel (%p1491) target = $region116
      $region115: #{schnet_forward.6} parent=107 // pred_region
        %v1494 = vld [vmem:[#allocation3] sm:$0xff]
        %v1495 = vld [vmem:[#allocation3 + $0x8] sm:$0xff]
        %v1496 = vld [vmem:[%s18] sm:$0xff]
        %v1497 = vld [vmem:[%s18 + $0x8] sm:$0xff]
        %v1498 = vld [vmem:[%s18 + $0x10] sm:$0xff]
        %v1499 = vld [vmem:[%s18 + $0x18] sm:$0xff]
        %v1500 = vld [vmem:[%s18 + $0x20] sm:$0xff]
        %v1501 = vld [vmem:[%s18 + $0x28] sm:$0xff]
        %v1502 = vld [vmem:[%s18 + $0x30] sm:$0xff]
        %v1503 = vld [vmem:[%s18 + $0x38] sm:$0xff]
        %v1504 = vld [vmem:[%s18 + $0x40] sm:$0xff]
        %v1505 = vld [vmem:[%s18 + $0x48] sm:$0xff]
        %v1506 = vld [vmem:[%s18 + $0x50] sm:$0xff]
        %v1507 = vld [vmem:[%s18 + $0x58] sm:$0xff]
        %v1508 = vld [vmem:[%s18 + $0x60] sm:$0xff]
        %v1509 = vld [vmem:[%s18 + $0x68] sm:$0xff]
        %v1510 = vld [vmem:[%s18 + $0x70] sm:$0xff]
        %v1511 = vld [vmem:[%s18 + $0x78] sm:$0xff]
        %v1512 = vld [vmem:[%s19] sm:$0x1]
        %v1514 = vlaneseq
        %v1515 = vshrl.u32 %v1514, 7
        %v1516 = vsub.s32 0, %v1515
        %v1517 = vrot.slane %v1512, %v1516
        %1519 = vmatprep.subr.mxu0 0.0
        %1520 = vmatpush1.msra.mxu0 %v1496
        %1521 = vmatprep.subr.mxu0 0.0
        %1522 = vmatpush1.msra.mxu0 %v1497
        %1523 = vmatprep.subr.mxu0 0.0
        %1524 = vmatpush1.msra.mxu0 %v1498
        %1525 = vmatprep.subr.mxu0 0.0
        %1526 = vmatpush1.msra.mxu0 %v1499
        %1527 = vmatprep.subr.mxu0 0.0
        %1528 = vmatpush1.msra.mxu0 %v1500
        %1529 = vmatprep.subr.mxu0 0.0
        %1530 = vmatpush1.msra.mxu0 %v1501
        %1531 = vmatprep.subr.mxu0 0.0
        %1532 = vmatpush1.msra.mxu0 %v1502
        %1533 = vmatprep.subr.mxu0 0.0
        %1534 = vmatpush1.msra.mxu0 %v1503
        %1535 = vmatprep.subr.mxu0 0.0
        %1536 = vmatpush1.msra.mxu0 %v1504
        %1537 = vmatprep.subr.mxu0 0.0
        %1538 = vmatpush1.msra.mxu0 %v1505
        %1539 = vmatprep.subr.mxu0 0.0
        %1540 = vmatpush1.msra.mxu0 %v1506
        %1541 = vmatprep.subr.mxu0 0.0
        %1542 = vmatpush1.msra.mxu0 %v1507
        %1543 = vmatprep.subr.mxu0 0.0
        %1544 = vmatpush1.msra.mxu0 %v1508
        %1545 = vmatprep.subr.mxu0 0.0
        %1546 = vmatpush1.msra.mxu0 %v1509
        %1547 = vmatprep.subr.mxu0 0.0
        %1548 = vmatpush1.msra.mxu0 %v1510
        %1549 = vmatprep.subr.mxu0 0.0
        %1550 = vmatpush1.msra.mxu0 %v1511
        %1551 = vmatprep.subr.mxu0 0.0
        %1552 = vmatpush1.msra.mxu0 0.0
        %1553 = vmatprep.subr.mxu0 0.0
        %1554 = vmatpush1.msra.mxu0 0.0
        %1555 = vmatprep.subr.mxu0 0.0
        %1556 = vmatpush1.msra.mxu0 0.0
        %1557 = vmatprep.subr.mxu0 0.0
        %1558 = vmatpush1.msra.mxu0 0.0
        %1559 = vmatprep.subr.mxu0 0.0
        %1560 = vmatpush1.msra.mxu0 0.0
        %1561 = vmatprep.subr.mxu0 0.0
        %1562 = vmatpush1.msra.mxu0 0.0
        %1563 = vmatprep.subr.mxu0 0.0
        %1564 = vmatpush1.msra.mxu0 0.0
        %1565 = vmatprep.subr.mxu0 0.0
        %1566 = vmatpush1.msra.mxu0 0.0
        %1567 = vmatprep.subr.mxu0 0.0
        %1568 = vmatpush1.msra.mxu0 0.0
        %1569 = vmatprep.subr.mxu0 0.0
        %1570 = vmatpush1.msra.mxu0 0.0
        %1571 = vmatprep.subr.mxu0 0.0
        %1572 = vmatpush1.msra.mxu0 0.0
        %1573 = vmatprep.subr.mxu0 0.0
        %1574 = vmatpush1.msra.mxu0 0.0
        %1575 = vmatprep.subr.mxu0 0.0
        %1576 = vmatpush1.msra.mxu0 0.0
        %1577 = vmatprep.subr.mxu0 0.0
        %1578 = vmatpush1.msra.mxu0 0.0
        %1579 = vmatprep.subr.mxu0 0.0
        %1580 = vmatpush1.msra.mxu0 0.0
        %1581 = vmatprep.subr.mxu0 0.0
        %1582 = vmatpush1.msra.mxu0 0.0
        %1583 = vmatprep.mubr.f32.mxu0 0.0
        %1584 = vmatmul.mubr.f32.gmra.mrb[0].mxu0 %v1494
        %v1585 = vpop.f32.mrb[0].mxu0
        %v1586 = vadd.f32 %v1517, %v1585
        %v1587 = vpop.f32.mrb[0].mxu0
        %1588 = vmatprep.mubr.f32.mxu0 0.0
        %1589 = vmatmul.mubr.f32.gmra.mrb[0].mxu0 %v1495
        %v1590 = vpop.f32.mrb[0].mxu0
        %v1591 = vadd.f32 %v1517, %v1590
        %v1592 = vpop.f32.mrb[0].mxu0
        %1593 = vdwg.mxu0
        %v1594 = vld [vmem:[%s20] sm:$0x1]
        %v1595 = vld [vmem:[%s21] sm:$0x1]
        %v1596 = vadd.f32 %v1586, %v1591
        %v1597 = vrot.slane %v1596, 4
        %v1598 = vadd.f32 %v1596, %v1597
        %v1599 = vrot.slane %v1598, 2
        %v1600 = vadd.f32 %v1598, %v1599
        %v1601 = vrot.slane %v1600, 1
        %v1602 = vadd.f32 %v1600, %v1601
        %v1603 = vrcp.pop 16.0
        %v1604 = vmul.f32 %v1602, %v1603
        %v1605 = vsub.f32 %v1586, %v1604
        %v1606 = vsub.f32 %v1591, %v1604
        %v1607 = vmul.f32 %v1605, %v1605
        %v1608 = vmul.f32 %v1606, %v1606
        %v1609 = vadd.f32 %v1607, %v1608
        %v1610 = vrot.slane %v1609, 4
        %v1611 = vadd.f32 %v1609, %v1610
        %v1612 = vrot.slane %v1611, 2
        %v1613 = vadd.f32 %v1611, %v1612
        %v1614 = vrot.slane %v1613, 1
        %v1615 = vadd.f32 %v1613, %v1614
        %v1616 = vmul.f32 %v1615, %v1603
        %v1617 = vadd.f32 %v1616, 1e-05
        %v1618 = vrsqrt.pop %v1617
        %v1619 = vmul.f32 %v1605, %v1618
        %v1620 = vmul.f32 %v1606, %v1618
        %v1622 = vlaneseq
        %v1623 = vshrl.u32 %v1622, 7
        %v1624 = vsub.s32 0, %v1623
        %v1625 = vrot.slane %v1594, %v1624
        %v1627 = vmul.f32 %v1619, %v1625
        %v1628 = vmul.f32 %v1620, %v1625
        %v1630 = vlaneseq
        %v1631 = vshrl.u32 %v1630, 7
        %v1632 = vsub.s32 0, %v1631
        %v1633 = vrot.slane %v1595, %v1632
        %v1635 = vadd.f32 %v1627, %v1633
        %v1636 = vadd.f32 %v1628, %v1633
        %1637 = vst [vmem:[%s22] sm:$0xff] %v1635
        %1638 = vst [vmem:[%s22 + $0x8] sm:$0xff] %v1636
      $region116: #{schnet_forward.6} parent=107 // pred_fallthru
        _
      // Predicated region
      $region117: #{schnet_forward.6} parent=107 // pred_check
        %p1639 = pneg %p532
      $region118: #{schnet_forward.6} parent=107 // pred_check_branch
        %1641 = sbr.rel (%p1639) target = $region120
      $region119: #{schnet_forward.6} parent=107 // pred_region
        _
      $region120: #{schnet_forward.6} parent=107 // pred_fallthru
        _
      // Predicated region
      $region121: #{schnet_forward.6} parent=107 // pred_check
        %p1642 = pneg %p532
      $region122: #{schnet_forward.6} parent=107 // pred_check_branch
        %1644 = sbr.rel (%p1642) target = $region124
      $region123: #{schnet_forward.6} parent=107 // pred_region
        _
      $region124: #{schnet_forward.6} parent=107 // pred_fallthru
        _
    $region108: #{schnet_forward.6} parent=5 // pred_fallthru
      _
    %p1645 = scmp.le.s32.totalorder 2, %s32
    // Predicated region
    $region125: #{schnet_forward.6} parent=5 // pred_check
      %p1646 = pneg %p1645
    $region126: #{schnet_forward.6} parent=5 // pred_check_branch
      %1648 = sbr.rel (%p1646) target = $region128
    $region127: #{schnet_forward.6} parent=5 // pred_region
      %s1649 = ssub.s32 %s32, 2
    $region128: #{schnet_forward.6} parent=5 // pred_fallthru
      _
  $region6: #{schnet_forward.6} parent=0 // loop_footer
    %s36 = sadd.s32 1, %s32
  $region7: #{schnet_forward.6} parent=0 // loop_footer_branch
    %31 = sbr.rel target = $region3
  $region8: #{schnet_forward.6} parent=0 // loop_exit
    _

</llo_original>
